<compile_context>
chip_gen: v6e
topology: v6e:2x2x1
jax: 0.10.0
libtpu: 0.0.40
codegen_flags: <defaults>
</compile_context>

<pallas_src>
import functools

import jax
import jax.numpy as jnp
from jax.experimental import pallas as pl
from jax.experimental.pallas import tpu as pltpu

EPS = 1e-20  # matches NConv2d.eps


# ----------------------------------------------------------------------------
# Pallas kernel: one NConv2d forward tile (im2col matmul + fused epilogue).
# ----------------------------------------------------------------------------
def _nconv_kernel(dc_ref, c_ref, w_ref, b_ref, inv_ref, nconv_ref, cout_ref):
    # dc_ref : (K, TN)   im2col patches of data*conf        (VMEM)
    # c_ref  : (K, TN)   im2col patches of conf             (VMEM)
    # w_ref  : (Cout, K) flattened conv weights             (VMEM, resident)
    # b_ref  : (Cout, 1) bias                               (VMEM)
    # inv_ref: (Cout, 1) 1 / sum(weight) per output channel (VMEM)
    # nconv_ref, cout_ref : (Cout, TN) lane-dense outputs   (VMEM)
    w = w_ref[...]
    # Two MXU matmuls sharing the resident weight tile yield nomin and denom.
    nomin = jnp.dot(w, dc_ref[...], preferred_element_type=jnp.float32)
    denom = jnp.dot(w, c_ref[...], preferred_element_type=jnp.float32)
    # Fused epilogue; one full (unmasked, lane-dense) store per output.
    # Exact divide kept for the nconv path to match the PyTorch reference;
    # the cout renormalization uses the precomputed reciprocal of sum(weight).
    nconv_ref[...] = nomin / (denom + EPS) + b_ref[...]
    cout_ref[...] = denom * inv_ref[...]


def _im2col(x_pad, kh, kw, ho, wo):
    """(B, Cin, Hp, Wp) zero-padded -> (Cin*kh*kw, B*ho*wo) patch matrix."""
    B, Cin, _, _ = x_pad.shape
    cols = []
    for i in range(kh):
        for j in range(kw):
            cols.append(x_pad[:, :, i:i + ho, j:j + wo])  # (B, Cin, ho, wo)
    p = jnp.stack(cols, axis=0)          # (kh*kw, B, Cin, ho, wo)
    p = p.transpose(2, 0, 1, 3, 4)       # (Cin, kh*kw, B, ho, wo)
    return p.reshape(Cin * kh * kw, B * ho * wo)


def nconv2d(data, conf, weight, bias, padding):
    """NConv2d.forward: returns (nconv, cout). NCHW in/out, stride=1."""
    B, Cin, H, W = data.shape
    Cout, _, KH, KW = weight.shape
    ph, pw = padding
    Ho = H + 2 * ph - KH + 1
    Wo = W + 2 * pw - KW + 1
    K = Cin * KH * KW
    N = B * Ho * Wo

    data = data.astype(jnp.float32)
    conf = conf.astype(jnp.float32)
    pad_cfg = ((0, 0), (0, 0), (ph, ph), (pw, pw))
    dc_pad = jnp.pad(data * conf, pad_cfg)
    c_pad = jnp.pad(conf, pad_cfg)
    dc_patches = _im2col(dc_pad, KH, KW, Ho, Wo)   # (K, N)
    c_patches = _im2col(c_pad, KH, KW, Ho, Wo)     # (K, N)

    w_flat = weight.reshape(Cout, K).astype(jnp.float32)
    b2 = bias.reshape(Cout, 1).astype(jnp.float32)
    inv_ws = 1.0 / jnp.sum(w_flat, axis=1, keepdims=True)   # (Cout, 1)

    # Lane-dense tiling of the flattened pixel axis.  All N in this network are
    # powers of two (512, 128, 32, 8), so TN always divides N exactly.
    TN = min(256, N)
    grid = (N // TN,)

    col_spec = pl.BlockSpec((K, TN), lambda n: (0, n))
    out_spec = pl.BlockSpec((Cout, TN), lambda n: (0, n))
    def _full(shape):
        return pl.BlockSpec(shape, lambda n: (0, 0))

    cost = pl.CostEstimate(
        flops=4 * Cout * K * N,  # two matmuls of 2*Cout*K*N each
        transcendentals=0,
        bytes_accessed=4 * (2 * K * N + Cout * K + 2 * Cout + 2 * Cout * N),
    )

    nconv_f, cout_f = pl.pallas_call(
        _nconv_kernel,
        out_shape=(
            jax.ShapeDtypeStruct((Cout, N), jnp.float32),
            jax.ShapeDtypeStruct((Cout, N), jnp.float32),
        ),
        grid=grid,
        in_specs=[
            col_spec,            # data*conf patches
            col_spec,            # conf patches
            _full((Cout, K)),    # flattened weights
            _full((Cout, 1)),    # bias
            _full((Cout, 1)),    # 1 / sum(weight)
        ],
        out_specs=(out_spec, out_spec),
        compiler_params=pltpu.CompilerParams(
            dimension_semantics=("parallel",)),
        cost_estimate=cost,
    )(dc_patches, c_patches, w_flat, b2, inv_ws)

    nconv = nconv_f.reshape(Cout, B, Ho, Wo).transpose(1, 0, 2, 3)
    cout = cout_f.reshape(Cout, B, Ho, Wo).transpose(1, 0, 2, 3)
    return nconv, cout


# ----------------------------------------------------------------------------
# JAX glue: max_pool2d(return_indices=True) + retrieve_elements_from_indices,
# nearest-neighbor upsampling, concat.
# ----------------------------------------------------------------------------
def maxpool_retrieve(x, c, ds=2):
    """Max-pool conf with indices, gather data at the same indices (2x2, s=2)."""
    B, C, H, W = x.shape

    def _win(t):
        return (t.reshape(B, C, H // ds, ds, W // ds, ds)
                 .transpose(0, 1, 2, 4, 3, 5)
                 .reshape(B, C, H // ds, W // ds, ds * ds))

    cw, xw = _win(c), _win(x)
    idx = jnp.argmax(cw, axis=-1)[..., None]
    c_ds = jnp.take_along_axis(cw, idx, axis=-1)[..., 0]
    x_ds = jnp.take_along_axis(xw, idx, axis=-1)[..., 0]
    return x_ds, c_ds


def upsample_nearest(x, size):
    """F.interpolate(mode='nearest') for exact integer upscale factors."""
    _, _, h, w = x.shape
    fh, fw = size[0] // h, size[1] // w
    return jnp.repeat(jnp.repeat(x, fh, axis=2), fw, axis=3)


# ----------------------------------------------------------------------------
# NormCNN parameters (deterministic synthetic init) and forward.
# ----------------------------------------------------------------------------
def init_params(key, num_channels=2):
    nc = num_channels
    shapes = {
        "n1": (nc, 1, 5, 5),
        "n2": (nc, nc, 5, 5),
        "n3": (nc, nc, 5, 5),
        "n4": (nc, 2 * nc, 3, 3),
        "n5": (nc, 2 * nc, 3, 3),
        "n6": (nc, 2 * nc, 3, 3),
        "n7": (1, nc, 1, 1),
    }
    params = {}
    keys = jax.random.split(key, len(shapes))
    for k, (name, shp) in zip(keys, shapes.items()):
        # 'p'/'k' inits replaced by deterministic positive uniform weights
        # (the original 'p' init is also strictly positive); bias = 0.01.
        params[name + "_w"] = jax.random.uniform(k, shp, jnp.float32, 0.05, 1.0)
        params[name + "_b"] = jnp.full((shp[0],), 0.01, jnp.float32)
    return params


def normcnn_forward(params, x0, c0):
    def nc(name, d, c, pad):
        return nconv2d(d, c, params[name + "_w"], params[name + "_b"], pad)

    x1, c1 = nc("n1", x0, c0, (2, 2))
    x1, c1 = nc("n2", x1, c1, (2, 2))
    x1, c1 = nc("n3", x1, c1, (2, 2))

    x1_ds, c1_ds = maxpool_retrieve(x1, c1)
    c1_ds = c1_ds / 4
    x2_ds, c2_ds = nc("n2", x1_ds, c1_ds, (2, 2))
    x2_ds, c2_ds = nc("n3", x2_ds, c2_ds, (2, 2))

    x2_dss, c2_dss = maxpool_retrieve(x2_ds, c2_ds)
    c2_dss = c2_dss / 4
    x3_ds, c3_ds = nc("n2", x2_dss, c2_dss, (2, 2))

    x3_dss, c3_dss = maxpool_retrieve(x3_ds, c3_ds)
    c3_dss = c3_dss / 4
    x4_ds, c4_ds = nc("n2", x3_dss, c3_dss, (2, 2))

    x4 = upsample_nearest(x4_ds, c3_ds.shape[2:])
    c4 = upsample_nearest(c4_ds, c3_ds.shape[2:])
    x34_ds, c34_ds = nc("n4", jnp.concatenate((x3_ds, x4), 1),
                        jnp.concatenate((c3_ds, c4), 1), (1, 1))

    x34 = upsample_nearest(x34_ds, c2_ds.shape[2:])
    c34 = upsample_nearest(c34_ds, c2_ds.shape[2:])
    x23_ds, c23_ds = nc("n5", jnp.concatenate((x2_ds, x34), 1),
                        jnp.concatenate((c2_ds, c34), 1), (1, 1))

    x23 = upsample_nearest(x23_ds, x0.shape[2:])
    c23 = upsample_nearest(c23_ds, c0.shape[2:])
    xout, cout = nc("n6", jnp.concatenate((x23, x1), 1),
                    jnp.concatenate((c23, c1), 1), (1, 1))

    xout, cout = nc("n7", xout, cout, (0, 0))
    return xout, cout


if __name__ == "__main__":
    key = jax.random.PRNGKey(0)
    kx, kc, kp = jax.random.split(key, 3)

    B, H, W = 2, 16, 16
    x0 = jax.random.normal(kx, (B, 1, H, W), jnp.float32)
    c0 = jax.random.uniform(kc, (B, 1, H, W), jnp.float32)  # confidences (0,1)

    params = init_params(kp, num_channels=2)

    fwd = jax.jit(normcnn_forward)
    xout, cout = fwd(params, x0, c0)
    jax.block_until_ready((xout, cout))

    assert xout.shape == (B, 1, H, W) and cout.shape == (B, 1, H, W)
    assert bool(jnp.all(jnp.isfinite(xout))) and bool(jnp.all(jnp.isfinite(cout)))
    print("KERNEL_OK")
</pallas_src>

<mosaic_0001>
module attributes {stable_mosaic.version = 11 : i64} {
  func.func @_nconv_kernel(%arg0: i32, %arg1: memref<25x256xf32, #tpu.memory_space<vmem>>, %arg2: memref<25x256xf32, #tpu.memory_space<vmem>>, %arg3: memref<2x25xf32, #tpu.memory_space<vmem>>, %arg4: memref<2x1xf32, #tpu.memory_space<vmem>>, %arg5: memref<2x1xf32, #tpu.memory_space<vmem>>, %arg6: memref<2x256xf32, #tpu.memory_space<vmem>>, %arg7: memref<2x256xf32, #tpu.memory_space<vmem>>) attributes {dimension_semantics = [#tpu.dimension_semantics<parallel>], iteration_bounds = array<i64: 2>, scalar_prefetch = 0 : i64, scratch_operands = 0 : i64, tpu.core_type = #tpu.core_type<tc>, window_params = [{transform_indices = @transform_0, window_bounds = array<i64: 25, 256>}, {transform_indices = @transform_1, window_bounds = array<i64: 25, 256>}, {pipeline_mode = #tpu.pipeline_mode<synchronous>, transform_indices = @transform_2, window_bounds = array<i64: 2, 25>}, {pipeline_mode = #tpu.pipeline_mode<synchronous>, transform_indices = @transform_3, window_bounds = array<i64: 2, 1>}, {pipeline_mode = #tpu.pipeline_mode<synchronous>, transform_indices = @transform_4, window_bounds = array<i64: 2, 1>}, {transform_indices = @transform_5, window_bounds = array<i64: 2, 256>}, {transform_indices = @transform_6, window_bounds = array<i64: 2, 256>}]} {
    %c0 = arith.constant 0 : index
    %c0_0 = arith.constant 0 : index
    %0 = vector.load %arg3[%c0, %c0_0] : memref<2x25xf32, #tpu.memory_space<vmem>>, vector<2x25xf32>
    %c0_1 = arith.constant 0 : index
    %c0_2 = arith.constant 0 : index
    %1 = vector.load %arg1[%c0_1, %c0_2] : memref<25x256xf32, #tpu.memory_space<vmem>>, vector<25x256xf32>
    %cst = arith.constant dense<0.000000e+00> : vector<2x256xf32>
    %2 = tpu.matmul %0, %1, %cst {dimension_numbers = #tpu.dot_dimension_numbers<[1], [0], [0], [1], [0, 0, 1, 1], [], []>} : vector<2x25xf32>, vector<25x256xf32>, vector<2x256xf32> -> vector<2x256xf32>
    %c0_3 = arith.constant 0 : index
    %c0_4 = arith.constant 0 : index
    %3 = vector.load %arg2[%c0_3, %c0_4] : memref<25x256xf32, #tpu.memory_space<vmem>>, vector<25x256xf32>
    %cst_5 = arith.constant dense<0.000000e+00> : vector<2x256xf32>
    %4 = tpu.matmul %0, %3, %cst_5 {dimension_numbers = #tpu.dot_dimension_numbers<[1], [0], [0], [1], [0, 0, 1, 1], [], []>} : vector<2x25xf32>, vector<25x256xf32>, vector<2x256xf32> -> vector<2x256xf32>
    %cst_6 = arith.constant 9.99999968E-21 : f32
    %5 = vector.broadcast %cst_6 : f32 to vector<2x256xf32>
    %6 = arith.addf %4, %5 : vector<2x256xf32>
    %7 = arith.divf %2, %6 : vector<2x256xf32>
    %c0_7 = arith.constant 0 : index
    %c0_8 = arith.constant 0 : index
    %8 = vector.load %arg4[%c0_7, %c0_8] : memref<2x1xf32, #tpu.memory_space<vmem>>, vector<2x1xf32>
    %9 = vector.broadcast %8 : vector<2x1xf32> to vector<2x256xf32>
    %10 = arith.addf %7, %9 : vector<2x256xf32>
    %c0_9 = arith.constant 0 : index
    %c0_10 = arith.constant 0 : index
    %11 = vector.load %arg6[%c0_9, %c0_10] : memref<2x256xf32, #tpu.memory_space<vmem>>, vector<2x256xf32>
    tpu.vector_store %arg6[%c0_9, %c0_10], %10 {strides = array<i32>} : memref<2x256xf32, #tpu.memory_space<vmem>>, vector<2x256xf32>,
    %c0_11 = arith.constant 0 : index
    %c0_12 = arith.constant 0 : index
    %12 = vector.load %arg5[%c0_11, %c0_12] : memref<2x1xf32, #tpu.memory_space<vmem>>, vector<2x1xf32>
    %13 = vector.broadcast %12 : vector<2x1xf32> to vector<2x256xf32>
    %14 = arith.mulf %4, %13 : vector<2x256xf32>
    %c0_13 = arith.constant 0 : index
    %c0_14 = arith.constant 0 : index
    %15 = vector.load %arg7[%c0_13, %c0_14] : memref<2x256xf32, #tpu.memory_space<vmem>>, vector<2x256xf32>
    tpu.vector_store %arg7[%c0_13, %c0_14], %14 {strides = array<i32>} : memref<2x256xf32, #tpu.memory_space<vmem>>, vector<2x256xf32>,
    return
  }
  func.func @transform_0(%arg0: i32) -> (i32, i32) {
    %c0_i32 = arith.constant 0 : i32
    %c0_i32_0 = arith.constant 0 : i32
    return %c0_i32, %arg0 : i32, i32
  }
  func.func @transform_1(%arg0: i32) -> (i32, i32) {
    %c0_i32 = arith.constant 0 : i32
    %c0_i32_0 = arith.constant 0 : i32
    return %c0_i32, %arg0 : i32, i32
  }
  func.func @transform_2(%arg0: i32) -> (i32, i32) {
    %c0_i32 = arith.constant 0 : i32
    %c0_i32_0 = arith.constant 0 : i32
    %c0_i32_1 = arith.constant 0 : i32
    return %c0_i32, %c0_i32_0 : i32, i32
  }
  func.func @transform_3(%arg0: i32) -> (i32, i32) {
    %c0_i32 = arith.constant 0 : i32
    %c0_i32_0 = arith.constant 0 : i32
    %c0_i32_1 = arith.constant 0 : i32
    return %c0_i32, %c0_i32_0 : i32, i32
  }
  func.func @transform_4(%arg0: i32) -> (i32, i32) {
    %c0_i32 = arith.constant 0 : i32
    %c0_i32_0 = arith.constant 0 : i32
    %c0_i32_1 = arith.constant 0 : i32
    return %c0_i32, %c0_i32_0 : i32, i32
  }
  func.func @transform_5(%arg0: i32) -> (i32, i32) {
    %c0_i32 = arith.constant 0 : i32
    %c0_i32_0 = arith.constant 0 : i32
    return %c0_i32, %arg0 : i32, i32
  }
  func.func @transform_6(%arg0: i32) -> (i32, i32) {
    %c0_i32 = arith.constant 0 : i32
    %c0_i32_0 = arith.constant 0 : i32
    return %c0_i32, %arg0 : i32, i32
  }
}

module attributes {stable_mosaic.version = 11 : i64} {
  func.func @_nconv_kernel(%arg0: i32, %arg1: memref<50x256xf32, #tpu.memory_space<vmem>>, %arg2: memref<50x256xf32, #tpu.memory_space<vmem>>, %arg3: memref<2x50xf32, #tpu.memory_space<vmem>>, %arg4: memref<2x1xf32, #tpu.memory_space<vmem>>, %arg5: memref<2x1xf32, #tpu.memory_space<vmem>>, %arg6: memref<2x256xf32, #tpu.memory_space<vmem>>, %arg7: memref<2x256xf32, #tpu.memory_space<vmem>>) attributes {dimension_semantics = [#tpu.dimension_semantics<parallel>], iteration_bounds = array<i64: 2>, scalar_prefetch = 0 : i64, scratch_operands = 0 : i64, tpu.core_type = #tpu.core_type<tc>, window_params = [{transform_indices = @transform_0, window_bounds = array<i64: 50, 256>}, {transform_indices = @transform_1, window_bounds = array<i64: 50, 256>}, {pipeline_mode = #tpu.pipeline_mode<synchronous>, transform_indices = @transform_2, window_bounds = array<i64: 2, 50>}, {pipeline_mode = #tpu.pipeline_mode<synchronous>, transform_indices = @transform_3, window_bounds = array<i64: 2, 1>}, {pipeline_mode = #tpu.pipeline_mode<synchronous>, transform_indices = @transform_4, window_bounds = array<i64: 2, 1>}, {transform_indices = @transform_5, window_bounds = array<i64: 2, 256>}, {transform_indices = @transform_6, window_bounds = array<i64: 2, 256>}]} {
    %c0 = arith.constant 0 : index
    %c0_0 = arith.constant 0 : index
    %0 = vector.load %arg3[%c0, %c0_0] : memref<2x50xf32, #tpu.memory_space<vmem>>, vector<2x50xf32>
    %c0_1 = arith.constant 0 : index
    %c0_2 = arith.constant 0 : index
    %1 = vector.load %arg1[%c0_1, %c0_2] : memref<50x256xf32, #tpu.memory_space<vmem>>, vector<50x256xf32>
    %cst = arith.constant dense<0.000000e+00> : vector<2x256xf32>
    %2 = tpu.matmul %0, %1, %cst {dimension_numbers = #tpu.dot_dimension_numbers<[1], [0], [0], [1], [0, 0, 1, 1], [], []>} : vector<2x50xf32>, vector<50x256xf32>, vector<2x256xf32> -> vector<2x256xf32>
    %c0_3 = arith.constant 0 : index
    %c0_4 = arith.constant 0 : index
    %3 = vector.load %arg2[%c0_3, %c0_4] : memref<50x256xf32, #tpu.memory_space<vmem>>, vector<50x256xf32>
    %cst_5 = arith.constant dense<0.000000e+00> : vector<2x256xf32>
    %4 = tpu.matmul %0, %3, %cst_5 {dimension_numbers = #tpu.dot_dimension_numbers<[1], [0], [0], [1], [0, 0, 1, 1], [], []>} : vector<2x50xf32>, vector<50x256xf32>, vector<2x256xf32> -> vector<2x256xf32>
    %cst_6 = arith.constant 9.99999968E-21 : f32
    %5 = vector.broadcast %cst_6 : f32 to vector<2x256xf32>
    %6 = arith.addf %4, %5 : vector<2x256xf32>
    %7 = arith.divf %2, %6 : vector<2x256xf32>
    %c0_7 = arith.constant 0 : index
    %c0_8 = arith.constant 0 : index
    %8 = vector.load %arg4[%c0_7, %c0_8] : memref<2x1xf32, #tpu.memory_space<vmem>>, vector<2x1xf32>
    %9 = vector.broadcast %8 : vector<2x1xf32> to vector<2x256xf32>
    %10 = arith.addf %7, %9 : vector<2x256xf32>
    %c0_9 = arith.constant 0 : index
    %c0_10 = arith.constant 0 : index
    %11 = vector.load %arg6[%c0_9, %c0_10] : memref<2x256xf32, #tpu.memory_space<vmem>>, vector<2x256xf32>
    tpu.vector_store %arg6[%c0_9, %c0_10], %10 {strides = array<i32>} : memref<2x256xf32, #tpu.memory_space<vmem>>, vector<2x256xf32>,
    %c0_11 = arith.constant 0 : index
    %c0_12 = arith.constant 0 : index
    %12 = vector.load %arg5[%c0_11, %c0_12] : memref<2x1xf32, #tpu.memory_space<vmem>>, vector<2x1xf32>
    %13 = vector.broadcast %12 : vector<2x1xf32> to vector<2x256xf32>
    %14 = arith.mulf %4, %13 : vector<2x256xf32>
    %c0_13 = arith.constant 0 : index
    %c0_14 = arith.constant 0 : index
    %15 = vector.load %arg7[%c0_13, %c0_14] : memref<2x256xf32, #tpu.memory_space<vmem>>, vector<2x256xf32>
    tpu.vector_store %arg7[%c0_13, %c0_14], %14 {strides = array<i32>} : memref<2x256xf32, #tpu.memory_space<vmem>>, vector<2x256xf32>,
    return
  }
  func.func @transform_0(%arg0: i32) -> (i32, i32) {
    %c0_i32 = arith.constant 0 : i32
    %c0_i32_0 = arith.constant 0 : i32
    return %c0_i32, %arg0 : i32, i32
  }
  func.func @transform_1(%arg0: i32) -> (i32, i32) {
    %c0_i32 = arith.constant 0 : i32
    %c0_i32_0 = arith.constant 0 : i32
    return %c0_i32, %arg0 : i32, i32
  }
  func.func @transform_2(%arg0: i32) -> (i32, i32) {
    %c0_i32 = arith.constant 0 : i32
    %c0_i32_0 = arith.constant 0 : i32
    %c0_i32_1 = arith.constant 0 : i32
    return %c0_i32, %c0_i32_0 : i32, i32
  }
  func.func @transform_3(%arg0: i32) -> (i32, i32) {
    %c0_i32 = arith.constant 0 : i32
    %c0_i32_0 = arith.constant 0 : i32
    %c0_i32_1 = arith.constant 0 : i32
    return %c0_i32, %c0_i32_0 : i32, i32
  }
  func.func @transform_4(%arg0: i32) -> (i32, i32) {
    %c0_i32 = arith.constant 0 : i32
    %c0_i32_0 = arith.constant 0 : i32
    %c0_i32_1 = arith.constant 0 : i32
    return %c0_i32, %c0_i32_0 : i32, i32
  }
  func.func @transform_5(%arg0: i32) -> (i32, i32) {
    %c0_i32 = arith.constant 0 : i32
    %c0_i32_0 = arith.constant 0 : i32
    return %c0_i32, %arg0 : i32, i32
  }
  func.func @transform_6(%arg0: i32) -> (i32, i32) {
    %c0_i32 = arith.constant 0 : i32
    %c0_i32_0 = arith.constant 0 : i32
    return %c0_i32, %arg0 : i32, i32
  }
}

module attributes {stable_mosaic.version = 11 : i64} {
  func.func @_nconv_kernel(%arg0: i32, %arg1: memref<50x128xf32, #tpu.memory_space<vmem>>, %arg2: memref<50x128xf32, #tpu.memory_space<vmem>>, %arg3: memref<2x50xf32, #tpu.memory_space<vmem>>, %arg4: memref<2x1xf32, #tpu.memory_space<vmem>>, %arg5: memref<2x1xf32, #tpu.memory_space<vmem>>, %arg6: memref<2x128xf32, #tpu.memory_space<vmem>>, %arg7: memref<2x128xf32, #tpu.memory_space<vmem>>) attributes {dimension_semantics = [#tpu.dimension_semantics<parallel>], iteration_bounds = array<i64: 1>, scalar_prefetch = 0 : i64, scratch_operands = 0 : i64, tpu.core_type = #tpu.core_type<tc>, window_params = [{transform_indices = @transform_0, window_bounds = array<i64: 50, 128>}, {transform_indices = @transform_1, window_bounds = array<i64: 50, 128>}, {pipeline_mode = #tpu.pipeline_mode<synchronous>, transform_indices = @transform_2, window_bounds = array<i64: 2, 50>}, {pipeline_mode = #tpu.pipeline_mode<synchronous>, transform_indices = @transform_3, window_bounds = array<i64: 2, 1>}, {pipeline_mode = #tpu.pipeline_mode<synchronous>, transform_indices = @transform_4, window_bounds = array<i64: 2, 1>}, {transform_indices = @transform_5, window_bounds = array<i64: 2, 128>}, {transform_indices = @transform_6, window_bounds = array<i64: 2, 128>}]} {
    %c0 = arith.constant 0 : index
    %c0_0 = arith.constant 0 : index
    %0 = vector.load %arg3[%c0, %c0_0] : memref<2x50xf32, #tpu.memory_space<vmem>>, vector<2x50xf32>
    %c0_1 = arith.constant 0 : index
    %c0_2 = arith.constant 0 : index
    %1 = vector.load %arg1[%c0_1, %c0_2] : memref<50x128xf32, #tpu.memory_space<vmem>>, vector<50x128xf32>
    %cst = arith.constant dense<0.000000e+00> : vector<2x128xf32>
    %2 = tpu.matmul %0, %1, %cst {dimension_numbers = #tpu.dot_dimension_numbers<[1], [0], [0], [1], [0, 0, 1, 1], [], []>} : vector<2x50xf32>, vector<50x128xf32>, vector<2x128xf32> -> vector<2x128xf32>
    %c0_3 = arith.constant 0 : index
    %c0_4 = arith.constant 0 : index
    %3 = vector.load %arg2[%c0_3, %c0_4] : memref<50x128xf32, #tpu.memory_space<vmem>>, vector<50x128xf32>
    %cst_5 = arith.constant dense<0.000000e+00> : vector<2x128xf32>
    %4 = tpu.matmul %0, %3, %cst_5 {dimension_numbers = #tpu.dot_dimension_numbers<[1], [0], [0], [1], [0, 0, 1, 1], [], []>} : vector<2x50xf32>, vector<50x128xf32>, vector<2x128xf32> -> vector<2x128xf32>
    %cst_6 = arith.constant 9.99999968E-21 : f32
    %5 = vector.broadcast %cst_6 : f32 to vector<2x128xf32>
    %6 = arith.addf %4, %5 : vector<2x128xf32>
    %7 = arith.divf %2, %6 : vector<2x128xf32>
    %c0_7 = arith.constant 0 : index
    %c0_8 = arith.constant 0 : index
    %8 = vector.load %arg4[%c0_7, %c0_8] : memref<2x1xf32, #tpu.memory_space<vmem>>, vector<2x1xf32>
    %9 = vector.broadcast %8 : vector<2x1xf32> to vector<2x128xf32>
    %10 = arith.addf %7, %9 : vector<2x128xf32>
    %c0_9 = arith.constant 0 : index
    %c0_10 = arith.constant 0 : index
    %11 = vector.load %arg6[%c0_9, %c0_10] : memref<2x128xf32, #tpu.memory_space<vmem>>, vector<2x128xf32>
    tpu.vector_store %arg6[%c0_9, %c0_10], %10 {strides = array<i32>} : memref<2x128xf32, #tpu.memory_space<vmem>>, vector<2x128xf32>,
    %c0_11 = arith.constant 0 : index
    %c0_12 = arith.constant 0 : index
    %12 = vector.load %arg5[%c0_11, %c0_12] : memref<2x1xf32, #tpu.memory_space<vmem>>, vector<2x1xf32>
    %13 = vector.broadcast %12 : vector<2x1xf32> to vector<2x128xf32>
    %14 = arith.mulf %4, %13 : vector<2x128xf32>
    %c0_13 = arith.constant 0 : index
    %c0_14 = arith.constant 0 : index
    %15 = vector.load %arg7[%c0_13, %c0_14] : memref<2x128xf32, #tpu.memory_space<vmem>>, vector<2x128xf32>
    tpu.vector_store %arg7[%c0_13, %c0_14], %14 {strides = array<i32>} : memref<2x128xf32, #tpu.memory_space<vmem>>, vector<2x128xf32>,
    return
  }
  func.func @transform_0(%arg0: i32) -> (i32, i32) {
    %c0_i32 = arith.constant 0 : i32
    %c0_i32_0 = arith.constant 0 : i32
    return %c0_i32, %arg0 : i32, i32
  }
  func.func @transform_1(%arg0: i32) -> (i32, i32) {
    %c0_i32 = arith.constant 0 : i32
    %c0_i32_0 = arith.constant 0 : i32
    return %c0_i32, %arg0 : i32, i32
  }
  func.func @transform_2(%arg0: i32) -> (i32, i32) {
    %c0_i32 = arith.constant 0 : i32
    %c0_i32_0 = arith.constant 0 : i32
    %c0_i32_1 = arith.constant 0 : i32
    return %c0_i32, %c0_i32_0 : i32, i32
  }
  func.func @transform_3(%arg0: i32) -> (i32, i32) {
    %c0_i32 = arith.constant 0 : i32
    %c0_i32_0 = arith.constant 0 : i32
    %c0_i32_1 = arith.constant 0 : i32
    return %c0_i32, %c0_i32_0 : i32, i32
  }
  func.func @transform_4(%arg0: i32) -> (i32, i32) {
    %c0_i32 = arith.constant 0 : i32
    %c0_i32_0 = arith.constant 0 : i32
    %c0_i32_1 = arith.constant 0 : i32
    return %c0_i32, %c0_i32_0 : i32, i32
  }
  func.func @transform_5(%arg0: i32) -> (i32, i32) {
    %c0_i32 = arith.constant 0 : i32
    %c0_i32_0 = arith.constant 0 : i32
    return %c0_i32, %arg0 : i32, i32
  }
  func.func @transform_6(%arg0: i32) -> (i32, i32) {
    %c0_i32 = arith.constant 0 : i32
    %c0_i32_0 = arith.constant 0 : i32
    return %c0_i32, %arg0 : i32, i32
  }
}

module attributes {stable_mosaic.version = 11 : i64} {
  func.func @_nconv_kernel(%arg0: i32, %arg1: memref<50x32xf32, #tpu.memory_space<vmem>>, %arg2: memref<50x32xf32, #tpu.memory_space<vmem>>, %arg3: memref<2x50xf32, #tpu.memory_space<vmem>>, %arg4: memref<2x1xf32, #tpu.memory_space<vmem>>, %arg5: memref<2x1xf32, #tpu.memory_space<vmem>>, %arg6: memref<2x32xf32, #tpu.memory_space<vmem>>, %arg7: memref<2x32xf32, #tpu.memory_space<vmem>>) attributes {dimension_semantics = [#tpu.dimension_semantics<parallel>], iteration_bounds = array<i64: 1>, scalar_prefetch = 0 : i64, scratch_operands = 0 : i64, tpu.core_type = #tpu.core_type<tc>, window_params = [{transform_indices = @transform_0, window_bounds = array<i64: 50, 32>}, {transform_indices = @transform_1, window_bounds = array<i64: 50, 32>}, {pipeline_mode = #tpu.pipeline_mode<synchronous>, transform_indices = @transform_2, window_bounds = array<i64: 2, 50>}, {pipeline_mode = #tpu.pipeline_mode<synchronous>, transform_indices = @transform_3, window_bounds = array<i64: 2, 1>}, {pipeline_mode = #tpu.pipeline_mode<synchronous>, transform_indices = @transform_4, window_bounds = array<i64: 2, 1>}, {transform_indices = @transform_5, window_bounds = array<i64: 2, 32>}, {transform_indices = @transform_6, window_bounds = array<i64: 2, 32>}]} {
    %c0 = arith.constant 0 : index
    %c0_0 = arith.constant 0 : index
    %0 = vector.load %arg3[%c0, %c0_0] : memref<2x50xf32, #tpu.memory_space<vmem>>, vector<2x50xf32>
    %c0_1 = arith.constant 0 : index
    %c0_2 = arith.constant 0 : index
    %1 = vector.load %arg1[%c0_1, %c0_2] : memref<50x32xf32, #tpu.memory_space<vmem>>, vector<50x32xf32>
    %cst = arith.constant dense<0.000000e+00> : vector<2x32xf32>
    %2 = tpu.matmul %0, %1, %cst {dimension_numbers = #tpu.dot_dimension_numbers<[1], [0], [0], [1], [0, 0, 1, 1], [], []>} : vector<2x50xf32>, vector<50x32xf32>, vector<2x32xf32> -> vector<2x32xf32>
    %c0_3 = arith.constant 0 : index
    %c0_4 = arith.constant 0 : index
    %3 = vector.load %arg2[%c0_3, %c0_4] : memref<50x32xf32, #tpu.memory_space<vmem>>, vector<50x32xf32>
    %cst_5 = arith.constant dense<0.000000e+00> : vector<2x32xf32>
    %4 = tpu.matmul %0, %3, %cst_5 {dimension_numbers = #tpu.dot_dimension_numbers<[1], [0], [0], [1], [0, 0, 1, 1], [], []>} : vector<2x50xf32>, vector<50x32xf32>, vector<2x32xf32> -> vector<2x32xf32>
    %cst_6 = arith.constant 9.99999968E-21 : f32
    %5 = vector.broadcast %cst_6 : f32 to vector<2x32xf32>
    %6 = arith.addf %4, %5 : vector<2x32xf32>
    %7 = arith.divf %2, %6 : vector<2x32xf32>
    %c0_7 = arith.constant 0 : index
    %c0_8 = arith.constant 0 : index
    %8 = vector.load %arg4[%c0_7, %c0_8] : memref<2x1xf32, #tpu.memory_space<vmem>>, vector<2x1xf32>
    %9 = vector.broadcast %8 : vector<2x1xf32> to vector<2x32xf32>
    %10 = arith.addf %7, %9 : vector<2x32xf32>
    %c0_9 = arith.constant 0 : index
    %c0_10 = arith.constant 0 : index
    %11 = vector.load %arg6[%c0_9, %c0_10] : memref<2x32xf32, #tpu.memory_space<vmem>>, vector<2x32xf32>
    tpu.vector_store %arg6[%c0_9, %c0_10], %10 {strides = array<i32>} : memref<2x32xf32, #tpu.memory_space<vmem>>, vector<2x32xf32>,
    %c0_11 = arith.constant 0 : index
    %c0_12 = arith.constant 0 : index
    %12 = vector.load %arg5[%c0_11, %c0_12] : memref<2x1xf32, #tpu.memory_space<vmem>>, vector<2x1xf32>
    %13 = vector.broadcast %12 : vector<2x1xf32> to vector<2x32xf32>
    %14 = arith.mulf %4, %13 : vector<2x32xf32>
    %c0_13 = arith.constant 0 : index
    %c0_14 = arith.constant 0 : index
    %15 = vector.load %arg7[%c0_13, %c0_14] : memref<2x32xf32, #tpu.memory_space<vmem>>, vector<2x32xf32>
    tpu.vector_store %arg7[%c0_13, %c0_14], %14 {strides = array<i32>} : memref<2x32xf32, #tpu.memory_space<vmem>>, vector<2x32xf32>,
    return
  }
  func.func @transform_0(%arg0: i32) -> (i32, i32) {
    %c0_i32 = arith.constant 0 : i32
    %c0_i32_0 = arith.constant 0 : i32
    return %c0_i32, %arg0 : i32, i32
  }
  func.func @transform_1(%arg0: i32) -> (i32, i32) {
    %c0_i32 = arith.constant 0 : i32
    %c0_i32_0 = arith.constant 0 : i32
    return %c0_i32, %arg0 : i32, i32
  }
  func.func @transform_2(%arg0: i32) -> (i32, i32) {
    %c0_i32 = arith.constant 0 : i32
    %c0_i32_0 = arith.constant 0 : i32
    %c0_i32_1 = arith.constant 0 : i32
    return %c0_i32, %c0_i32_0 : i32, i32
  }
  func.func @transform_3(%arg0: i32) -> (i32, i32) {
    %c0_i32 = arith.constant 0 : i32
    %c0_i32_0 = arith.constant 0 : i32
    %c0_i32_1 = arith.constant 0 : i32
    return %c0_i32, %c0_i32_0 : i32, i32
  }
  func.func @transform_4(%arg0: i32) -> (i32, i32) {
    %c0_i32 = arith.constant 0 : i32
    %c0_i32_0 = arith.constant 0 : i32
    %c0_i32_1 = arith.constant 0 : i32
    return %c0_i32, %c0_i32_0 : i32, i32
  }
  func.func @transform_5(%arg0: i32) -> (i32, i32) {
    %c0_i32 = arith.constant 0 : i32
    %c0_i32_0 = arith.constant 0 : i32
    return %c0_i32, %arg0 : i32, i32
  }
  func.func @transform_6(%arg0: i32) -> (i32, i32) {
    %c0_i32 = arith.constant 0 : i32
    %c0_i32_0 = arith.constant 0 : i32
    return %c0_i32, %arg0 : i32, i32
  }
}

module attributes {stable_mosaic.version = 11 : i64} {
  func.func @_nconv_kernel(%arg0: i32, %arg1: memref<50x8xf32, #tpu.memory_space<vmem>>, %arg2: memref<50x8xf32, #tpu.memory_space<vmem>>, %arg3: memref<2x50xf32, #tpu.memory_space<vmem>>, %arg4: memref<2x1xf32, #tpu.memory_space<vmem>>, %arg5: memref<2x1xf32, #tpu.memory_space<vmem>>, %arg6: memref<2x8xf32, #tpu.memory_space<vmem>>, %arg7: memref<2x8xf32, #tpu.memory_space<vmem>>) attributes {dimension_semantics = [#tpu.dimension_semantics<parallel>], iteration_bounds = array<i64: 1>, scalar_prefetch = 0 : i64, scratch_operands = 0 : i64, tpu.core_type = #tpu.core_type<tc>, window_params = [{transform_indices = @transform_0, window_bounds = array<i64: 50, 8>}, {transform_indices = @transform_1, window_bounds = array<i64: 50, 8>}, {pipeline_mode = #tpu.pipeline_mode<synchronous>, transform_indices = @transform_2, window_bounds = array<i64: 2, 50>}, {pipeline_mode = #tpu.pipeline_mode<synchronous>, transform_indices = @transform_3, window_bounds = array<i64: 2, 1>}, {pipeline_mode = #tpu.pipeline_mode<synchronous>, transform_indices = @transform_4, window_bounds = array<i64: 2, 1>}, {transform_indices = @transform_5, window_bounds = array<i64: 2, 8>}, {transform_indices = @transform_6, window_bounds = array<i64: 2, 8>}]} {
    %c0 = arith.constant 0 : index
    %c0_0 = arith.constant 0 : index
    %0 = vector.load %arg3[%c0, %c0_0] : memref<2x50xf32, #tpu.memory_space<vmem>>, vector<2x50xf32>
    %c0_1 = arith.constant 0 : index
    %c0_2 = arith.constant 0 : index
    %1 = vector.load %arg1[%c0_1, %c0_2] : memref<50x8xf32, #tpu.memory_space<vmem>>, vector<50x8xf32>
    %cst = arith.constant dense<0.000000e+00> : vector<2x8xf32>
    %2 = tpu.matmul %0, %1, %cst {dimension_numbers = #tpu.dot_dimension_numbers<[1], [0], [0], [1], [0, 0, 1, 1], [], []>} : vector<2x50xf32>, vector<50x8xf32>, vector<2x8xf32> -> vector<2x8xf32>
    %c0_3 = arith.constant 0 : index
    %c0_4 = arith.constant 0 : index
    %3 = vector.load %arg2[%c0_3, %c0_4] : memref<50x8xf32, #tpu.memory_space<vmem>>, vector<50x8xf32>
    %cst_5 = arith.constant dense<0.000000e+00> : vector<2x8xf32>
    %4 = tpu.matmul %0, %3, %cst_5 {dimension_numbers = #tpu.dot_dimension_numbers<[1], [0], [0], [1], [0, 0, 1, 1], [], []>} : vector<2x50xf32>, vector<50x8xf32>, vector<2x8xf32> -> vector<2x8xf32>
    %cst_6 = arith.constant 9.99999968E-21 : f32
    %5 = vector.broadcast %cst_6 : f32 to vector<2x8xf32>
    %6 = arith.addf %4, %5 : vector<2x8xf32>
    %7 = arith.divf %2, %6 : vector<2x8xf32>
    %c0_7 = arith.constant 0 : index
    %c0_8 = arith.constant 0 : index
    %8 = vector.load %arg4[%c0_7, %c0_8] : memref<2x1xf32, #tpu.memory_space<vmem>>, vector<2x1xf32>
    %9 = vector.broadcast %8 : vector<2x1xf32> to vector<2x8xf32>
    %10 = arith.addf %7, %9 : vector<2x8xf32>
    %c0_9 = arith.constant 0 : index
    %c0_10 = arith.constant 0 : index
    %11 = vector.load %arg6[%c0_9, %c0_10] : memref<2x8xf32, #tpu.memory_space<vmem>>, vector<2x8xf32>
    tpu.vector_store %arg6[%c0_9, %c0_10], %10 {strides = array<i32>} : memref<2x8xf32, #tpu.memory_space<vmem>>, vector<2x8xf32>,
    %c0_11 = arith.constant 0 : index
    %c0_12 = arith.constant 0 : index
    %12 = vector.load %arg5[%c0_11, %c0_12] : memref<2x1xf32, #tpu.memory_space<vmem>>, vector<2x1xf32>
    %13 = vector.broadcast %12 : vector<2x1xf32> to vector<2x8xf32>
    %14 = arith.mulf %4, %13 : vector<2x8xf32>
    %c0_13 = arith.constant 0 : index
    %c0_14 = arith.constant 0 : index
    %15 = vector.load %arg7[%c0_13, %c0_14] : memref<2x8xf32, #tpu.memory_space<vmem>>, vector<2x8xf32>
    tpu.vector_store %arg7[%c0_13, %c0_14], %14 {strides = array<i32>} : memref<2x8xf32, #tpu.memory_space<vmem>>, vector<2x8xf32>,
    return
  }
  func.func @transform_0(%arg0: i32) -> (i32, i32) {
    %c0_i32 = arith.constant 0 : i32
    %c0_i32_0 = arith.constant 0 : i32
    return %c0_i32, %arg0 : i32, i32
  }
  func.func @transform_1(%arg0: i32) -> (i32, i32) {
    %c0_i32 = arith.constant 0 : i32
    %c0_i32_0 = arith.constant 0 : i32
    return %c0_i32, %arg0 : i32, i32
  }
  func.func @transform_2(%arg0: i32) -> (i32, i32) {
    %c0_i32 = arith.constant 0 : i32
    %c0_i32_0 = arith.constant 0 : i32
    %c0_i32_1 = arith.constant 0 : i32
    return %c0_i32, %c0_i32_0 : i32, i32
  }
  func.func @transform_3(%arg0: i32) -> (i32, i32) {
    %c0_i32 = arith.constant 0 : i32
    %c0_i32_0 = arith.constant 0 : i32
    %c0_i32_1 = arith.constant 0 : i32
    return %c0_i32, %c0_i32_0 : i32, i32
  }
  func.func @transform_4(%arg0: i32) -> (i32, i32) {
    %c0_i32 = arith.constant 0 : i32
    %c0_i32_0 = arith.constant 0 : i32
    %c0_i32_1 = arith.constant 0 : i32
    return %c0_i32, %c0_i32_0 : i32, i32
  }
  func.func @transform_5(%arg0: i32) -> (i32, i32) {
    %c0_i32 = arith.constant 0 : i32
    %c0_i32_0 = arith.constant 0 : i32
    return %c0_i32, %arg0 : i32, i32
  }
  func.func @transform_6(%arg0: i32) -> (i32, i32) {
    %c0_i32 = arith.constant 0 : i32
    %c0_i32_0 = arith.constant 0 : i32
    return %c0_i32, %arg0 : i32, i32
  }
}

module attributes {stable_mosaic.version = 11 : i64} {
  func.func @_nconv_kernel(%arg0: i32, %arg1: memref<36x32xf32, #tpu.memory_space<vmem>>, %arg2: memref<36x32xf32, #tpu.memory_space<vmem>>, %arg3: memref<2x36xf32, #tpu.memory_space<vmem>>, %arg4: memref<2x1xf32, #tpu.memory_space<vmem>>, %arg5: memref<2x1xf32, #tpu.memory_space<vmem>>, %arg6: memref<2x32xf32, #tpu.memory_space<vmem>>, %arg7: memref<2x32xf32, #tpu.memory_space<vmem>>) attributes {dimension_semantics = [#tpu.dimension_semantics<parallel>], iteration_bounds = array<i64: 1>, scalar_prefetch = 0 : i64, scratch_operands = 0 : i64, tpu.core_type = #tpu.core_type<tc>, window_params = [{transform_indices = @transform_0, window_bounds = array<i64: 36, 32>}, {transform_indices = @transform_1, window_bounds = array<i64: 36, 32>}, {pipeline_mode = #tpu.pipeline_mode<synchronous>, transform_indices = @transform_2, window_bounds = array<i64: 2, 36>}, {pipeline_mode = #tpu.pipeline_mode<synchronous>, transform_indices = @transform_3, window_bounds = array<i64: 2, 1>}, {pipeline_mode = #tpu.pipeline_mode<synchronous>, transform_indices = @transform_4, window_bounds = array<i64: 2, 1>}, {transform_indices = @transform_5, window_bounds = array<i64: 2, 32>}, {transform_indices = @transform_6, window_bounds = array<i64: 2, 32>}]} {
    %c0 = arith.constant 0 : index
    %c0_0 = arith.constant 0 : index
    %0 = vector.load %arg3[%c0, %c0_0] : memref<2x36xf32, #tpu.memory_space<vmem>>, vector<2x36xf32>
    %c0_1 = arith.constant 0 : index
    %c0_2 = arith.constant 0 : index
    %1 = vector.load %arg1[%c0_1, %c0_2] : memref<36x32xf32, #tpu.memory_space<vmem>>, vector<36x32xf32>
    %cst = arith.constant dense<0.000000e+00> : vector<2x32xf32>
    %2 = tpu.matmul %0, %1, %cst {dimension_numbers = #tpu.dot_dimension_numbers<[1], [0], [0], [1], [0, 0, 1, 1], [], []>} : vector<2x36xf32>, vector<36x32xf32>, vector<2x32xf32> -> vector<2x32xf32>
    %c0_3 = arith.constant 0 : index
    %c0_4 = arith.constant 0 : index
    %3 = vector.load %arg2[%c0_3, %c0_4] : memref<36x32xf32, #tpu.memory_space<vmem>>, vector<36x32xf32>
    %cst_5 = arith.constant dense<0.000000e+00> : vector<2x32xf32>
    %4 = tpu.matmul %0, %3, %cst_5 {dimension_numbers = #tpu.dot_dimension_numbers<[1], [0], [0], [1], [0, 0, 1, 1], [], []>} : vector<2x36xf32>, vector<36x32xf32>, vector<2x32xf32> -> vector<2x32xf32>
    %cst_6 = arith.constant 9.99999968E-21 : f32
    %5 = vector.broadcast %cst_6 : f32 to vector<2x32xf32>
    %6 = arith.addf %4, %5 : vector<2x32xf32>
    %7 = arith.divf %2, %6 : vector<2x32xf32>
    %c0_7 = arith.constant 0 : index
    %c0_8 = arith.constant 0 : index
    %8 = vector.load %arg4[%c0_7, %c0_8] : memref<2x1xf32, #tpu.memory_space<vmem>>, vector<2x1xf32>
    %9 = vector.broadcast %8 : vector<2x1xf32> to vector<2x32xf32>
    %10 = arith.addf %7, %9 : vector<2x32xf32>
    %c0_9 = arith.constant 0 : index
    %c0_10 = arith.constant 0 : index
    %11 = vector.load %arg6[%c0_9, %c0_10] : memref<2x32xf32, #tpu.memory_space<vmem>>, vector<2x32xf32>
    tpu.vector_store %arg6[%c0_9, %c0_10], %10 {strides = array<i32>} : memref<2x32xf32, #tpu.memory_space<vmem>>, vector<2x32xf32>,
    %c0_11 = arith.constant 0 : index
    %c0_12 = arith.constant 0 : index
    %12 = vector.load %arg5[%c0_11, %c0_12] : memref<2x1xf32, #tpu.memory_space<vmem>>, vector<2x1xf32>
    %13 = vector.broadcast %12 : vector<2x1xf32> to vector<2x32xf32>
    %14 = arith.mulf %4, %13 : vector<2x32xf32>
    %c0_13 = arith.constant 0 : index
    %c0_14 = arith.constant 0 : index
    %15 = vector.load %arg7[%c0_13, %c0_14] : memref<2x32xf32, #tpu.memory_space<vmem>>, vector<2x32xf32>
    tpu.vector_store %arg7[%c0_13, %c0_14], %14 {strides = array<i32>} : memref<2x32xf32, #tpu.memory_space<vmem>>, vector<2x32xf32>,
    return
  }
  func.func @transform_0(%arg0: i32) -> (i32, i32) {
    %c0_i32 = arith.constant 0 : i32
    %c0_i32_0 = arith.constant 0 : i32
    return %c0_i32, %arg0 : i32, i32
  }
  func.func @transform_1(%arg0: i32) -> (i32, i32) {
    %c0_i32 = arith.constant 0 : i32
    %c0_i32_0 = arith.constant 0 : i32
    return %c0_i32, %arg0 : i32, i32
  }
  func.func @transform_2(%arg0: i32) -> (i32, i32) {
    %c0_i32 = arith.constant 0 : i32
    %c0_i32_0 = arith.constant 0 : i32
    %c0_i32_1 = arith.constant 0 : i32
    return %c0_i32, %c0_i32_0 : i32, i32
  }
  func.func @transform_3(%arg0: i32) -> (i32, i32) {
    %c0_i32 = arith.constant 0 : i32
    %c0_i32_0 = arith.constant 0 : i32
    %c0_i32_1 = arith.constant 0 : i32
    return %c0_i32, %c0_i32_0 : i32, i32
  }
  func.func @transform_4(%arg0: i32) -> (i32, i32) {
    %c0_i32 = arith.constant 0 : i32
    %c0_i32_0 = arith.constant 0 : i32
    %c0_i32_1 = arith.constant 0 : i32
    return %c0_i32, %c0_i32_0 : i32, i32
  }
  func.func @transform_5(%arg0: i32) -> (i32, i32) {
    %c0_i32 = arith.constant 0 : i32
    %c0_i32_0 = arith.constant 0 : i32
    return %c0_i32, %arg0 : i32, i32
  }
  func.func @transform_6(%arg0: i32) -> (i32, i32) {
    %c0_i32 = arith.constant 0 : i32
    %c0_i32_0 = arith.constant 0 : i32
    return %c0_i32, %arg0 : i32, i32
  }
}

module attributes {stable_mosaic.version = 11 : i64} {
  func.func @_nconv_kernel(%arg0: i32, %arg1: memref<36x128xf32, #tpu.memory_space<vmem>>, %arg2: memref<36x128xf32, #tpu.memory_space<vmem>>, %arg3: memref<2x36xf32, #tpu.memory_space<vmem>>, %arg4: memref<2x1xf32, #tpu.memory_space<vmem>>, %arg5: memref<2x1xf32, #tpu.memory_space<vmem>>, %arg6: memref<2x128xf32, #tpu.memory_space<vmem>>, %arg7: memref<2x128xf32, #tpu.memory_space<vmem>>) attributes {dimension_semantics = [#tpu.dimension_semantics<parallel>], iteration_bounds = array<i64: 1>, scalar_prefetch = 0 : i64, scratch_operands = 0 : i64, tpu.core_type = #tpu.core_type<tc>, window_params = [{transform_indices = @transform_0, window_bounds = array<i64: 36, 128>}, {transform_indices = @transform_1, window_bounds = array<i64: 36, 128>}, {pipeline_mode = #tpu.pipeline_mode<synchronous>, transform_indices = @transform_2, window_bounds = array<i64: 2, 36>}, {pipeline_mode = #tpu.pipeline_mode<synchronous>, transform_indices = @transform_3, window_bounds = array<i64: 2, 1>}, {pipeline_mode = #tpu.pipeline_mode<synchronous>, transform_indices = @transform_4, window_bounds = array<i64: 2, 1>}, {transform_indices = @transform_5, window_bounds = array<i64: 2, 128>}, {transform_indices = @transform_6, window_bounds = array<i64: 2, 128>}]} {
    %c0 = arith.constant 0 : index
    %c0_0 = arith.constant 0 : index
    %0 = vector.load %arg3[%c0, %c0_0] : memref<2x36xf32, #tpu.memory_space<vmem>>, vector<2x36xf32>
    %c0_1 = arith.constant 0 : index
    %c0_2 = arith.constant 0 : index
    %1 = vector.load %arg1[%c0_1, %c0_2] : memref<36x128xf32, #tpu.memory_space<vmem>>, vector<36x128xf32>
    %cst = arith.constant dense<0.000000e+00> : vector<2x128xf32>
    %2 = tpu.matmul %0, %1, %cst {dimension_numbers = #tpu.dot_dimension_numbers<[1], [0], [0], [1], [0, 0, 1, 1], [], []>} : vector<2x36xf32>, vector<36x128xf32>, vector<2x128xf32> -> vector<2x128xf32>
    %c0_3 = arith.constant 0 : index
    %c0_4 = arith.constant 0 : index
    %3 = vector.load %arg2[%c0_3, %c0_4] : memref<36x128xf32, #tpu.memory_space<vmem>>, vector<36x128xf32>
    %cst_5 = arith.constant dense<0.000000e+00> : vector<2x128xf32>
    %4 = tpu.matmul %0, %3, %cst_5 {dimension_numbers = #tpu.dot_dimension_numbers<[1], [0], [0], [1], [0, 0, 1, 1], [], []>} : vector<2x36xf32>, vector<36x128xf32>, vector<2x128xf32> -> vector<2x128xf32>
    %cst_6 = arith.constant 9.99999968E-21 : f32
    %5 = vector.broadcast %cst_6 : f32 to vector<2x128xf32>
    %6 = arith.addf %4, %5 : vector<2x128xf32>
    %7 = arith.divf %2, %6 : vector<2x128xf32>
    %c0_7 = arith.constant 0 : index
    %c0_8 = arith.constant 0 : index
    %8 = vector.load %arg4[%c0_7, %c0_8] : memref<2x1xf32, #tpu.memory_space<vmem>>, vector<2x1xf32>
    %9 = vector.broadcast %8 : vector<2x1xf32> to vector<2x128xf32>
    %10 = arith.addf %7, %9 : vector<2x128xf32>
    %c0_9 = arith.constant 0 : index
    %c0_10 = arith.constant 0 : index
    %11 = vector.load %arg6[%c0_9, %c0_10] : memref<2x128xf32, #tpu.memory_space<vmem>>, vector<2x128xf32>
    tpu.vector_store %arg6[%c0_9, %c0_10], %10 {strides = array<i32>} : memref<2x128xf32, #tpu.memory_space<vmem>>, vector<2x128xf32>,
    %c0_11 = arith.constant 0 : index
    %c0_12 = arith.constant 0 : index
    %12 = vector.load %arg5[%c0_11, %c0_12] : memref<2x1xf32, #tpu.memory_space<vmem>>, vector<2x1xf32>
    %13 = vector.broadcast %12 : vector<2x1xf32> to vector<2x128xf32>
    %14 = arith.mulf %4, %13 : vector<2x128xf32>
    %c0_13 = arith.constant 0 : index
    %c0_14 = arith.constant 0 : index
    %15 = vector.load %arg7[%c0_13, %c0_14] : memref<2x128xf32, #tpu.memory_space<vmem>>, vector<2x128xf32>
    tpu.vector_store %arg7[%c0_13, %c0_14], %14 {strides = array<i32>} : memref<2x128xf32, #tpu.memory_space<vmem>>, vector<2x128xf32>,
    return
  }
  func.func @transform_0(%arg0: i32) -> (i32, i32) {
    %c0_i32 = arith.constant 0 : i32
    %c0_i32_0 = arith.constant 0 : i32
    return %c0_i32, %arg0 : i32, i32
  }
  func.func @transform_1(%arg0: i32) -> (i32, i32) {
    %c0_i32 = arith.constant 0 : i32
    %c0_i32_0 = arith.constant 0 : i32
    return %c0_i32, %arg0 : i32, i32
  }
  func.func @transform_2(%arg0: i32) -> (i32, i32) {
    %c0_i32 = arith.constant 0 : i32
    %c0_i32_0 = arith.constant 0 : i32
    %c0_i32_1 = arith.constant 0 : i32
    return %c0_i32, %c0_i32_0 : i32, i32
  }
  func.func @transform_3(%arg0: i32) -> (i32, i32) {
    %c0_i32 = arith.constant 0 : i32
    %c0_i32_0 = arith.constant 0 : i32
    %c0_i32_1 = arith.constant 0 : i32
    return %c0_i32, %c0_i32_0 : i32, i32
  }
  func.func @transform_4(%arg0: i32) -> (i32, i32) {
    %c0_i32 = arith.constant 0 : i32
    %c0_i32_0 = arith.constant 0 : i32
    %c0_i32_1 = arith.constant 0 : i32
    return %c0_i32, %c0_i32_0 : i32, i32
  }
  func.func @transform_5(%arg0: i32) -> (i32, i32) {
    %c0_i32 = arith.constant 0 : i32
    %c0_i32_0 = arith.constant 0 : i32
    return %c0_i32, %arg0 : i32, i32
  }
  func.func @transform_6(%arg0: i32) -> (i32, i32) {
    %c0_i32 = arith.constant 0 : i32
    %c0_i32_0 = arith.constant 0 : i32
    return %c0_i32, %arg0 : i32, i32
  }
}

module attributes {stable_mosaic.version = 11 : i64} {
  func.func @_nconv_kernel(%arg0: i32, %arg1: memref<36x256xf32, #tpu.memory_space<vmem>>, %arg2: memref<36x256xf32, #tpu.memory_space<vmem>>, %arg3: memref<2x36xf32, #tpu.memory_space<vmem>>, %arg4: memref<2x1xf32, #tpu.memory_space<vmem>>, %arg5: memref<2x1xf32, #tpu.memory_space<vmem>>, %arg6: memref<2x256xf32, #tpu.memory_space<vmem>>, %arg7: memref<2x256xf32, #tpu.memory_space<vmem>>) attributes {dimension_semantics = [#tpu.dimension_semantics<parallel>], iteration_bounds = array<i64: 2>, scalar_prefetch = 0 : i64, scratch_operands = 0 : i64, tpu.core_type = #tpu.core_type<tc>, window_params = [{transform_indices = @transform_0, window_bounds = array<i64: 36, 256>}, {transform_indices = @transform_1, window_bounds = array<i64: 36, 256>}, {pipeline_mode = #tpu.pipeline_mode<synchronous>, transform_indices = @transform_2, window_bounds = array<i64: 2, 36>}, {pipeline_mode = #tpu.pipeline_mode<synchronous>, transform_indices = @transform_3, window_bounds = array<i64: 2, 1>}, {pipeline_mode = #tpu.pipeline_mode<synchronous>, transform_indices = @transform_4, window_bounds = array<i64: 2, 1>}, {transform_indices = @transform_5, window_bounds = array<i64: 2, 256>}, {transform_indices = @transform_6, window_bounds = array<i64: 2, 256>}]} {
    %c0 = arith.constant 0 : index
    %c0_0 = arith.constant 0 : index
    %0 = vector.load %arg3[%c0, %c0_0] : memref<2x36xf32, #tpu.memory_space<vmem>>, vector<2x36xf32>
    %c0_1 = arith.constant 0 : index
    %c0_2 = arith.constant 0 : index
    %1 = vector.load %arg1[%c0_1, %c0_2] : memref<36x256xf32, #tpu.memory_space<vmem>>, vector<36x256xf32>
    %cst = arith.constant dense<0.000000e+00> : vector<2x256xf32>
    %2 = tpu.matmul %0, %1, %cst {dimension_numbers = #tpu.dot_dimension_numbers<[1], [0], [0], [1], [0, 0, 1, 1], [], []>} : vector<2x36xf32>, vector<36x256xf32>, vector<2x256xf32> -> vector<2x256xf32>
    %c0_3 = arith.constant 0 : index
    %c0_4 = arith.constant 0 : index
    %3 = vector.load %arg2[%c0_3, %c0_4] : memref<36x256xf32, #tpu.memory_space<vmem>>, vector<36x256xf32>
    %cst_5 = arith.constant dense<0.000000e+00> : vector<2x256xf32>
    %4 = tpu.matmul %0, %3, %cst_5 {dimension_numbers = #tpu.dot_dimension_numbers<[1], [0], [0], [1], [0, 0, 1, 1], [], []>} : vector<2x36xf32>, vector<36x256xf32>, vector<2x256xf32> -> vector<2x256xf32>
    %cst_6 = arith.constant 9.99999968E-21 : f32
    %5 = vector.broadcast %cst_6 : f32 to vector<2x256xf32>
    %6 = arith.addf %4, %5 : vector<2x256xf32>
    %7 = arith.divf %2, %6 : vector<2x256xf32>
    %c0_7 = arith.constant 0 : index
    %c0_8 = arith.constant 0 : index
    %8 = vector.load %arg4[%c0_7, %c0_8] : memref<2x1xf32, #tpu.memory_space<vmem>>, vector<2x1xf32>
    %9 = vector.broadcast %8 : vector<2x1xf32> to vector<2x256xf32>
    %10 = arith.addf %7, %9 : vector<2x256xf32>
    %c0_9 = arith.constant 0 : index
    %c0_10 = arith.constant 0 : index
    %11 = vector.load %arg6[%c0_9, %c0_10] : memref<2x256xf32, #tpu.memory_space<vmem>>, vector<2x256xf32>
    tpu.vector_store %arg6[%c0_9, %c0_10], %10 {strides = array<i32>} : memref<2x256xf32, #tpu.memory_space<vmem>>, vector<2x256xf32>,
    %c0_11 = arith.constant 0 : index
    %c0_12 = arith.constant 0 : index
    %12 = vector.load %arg5[%c0_11, %c0_12] : memref<2x1xf32, #tpu.memory_space<vmem>>, vector<2x1xf32>
    %13 = vector.broadcast %12 : vector<2x1xf32> to vector<2x256xf32>
    %14 = arith.mulf %4, %13 : vector<2x256xf32>
    %c0_13 = arith.constant 0 : index
    %c0_14 = arith.constant 0 : index
    %15 = vector.load %arg7[%c0_13, %c0_14] : memref<2x256xf32, #tpu.memory_space<vmem>>, vector<2x256xf32>
    tpu.vector_store %arg7[%c0_13, %c0_14], %14 {strides = array<i32>} : memref<2x256xf32, #tpu.memory_space<vmem>>, vector<2x256xf32>,
    return
  }
  func.func @transform_0(%arg0: i32) -> (i32, i32) {
    %c0_i32 = arith.constant 0 : i32
    %c0_i32_0 = arith.constant 0 : i32
    return %c0_i32, %arg0 : i32, i32
  }
  func.func @transform_1(%arg0: i32) -> (i32, i32) {
    %c0_i32 = arith.constant 0 : i32
    %c0_i32_0 = arith.constant 0 : i32
    return %c0_i32, %arg0 : i32, i32
  }
  func.func @transform_2(%arg0: i32) -> (i32, i32) {
    %c0_i32 = arith.constant 0 : i32
    %c0_i32_0 = arith.constant 0 : i32
    %c0_i32_1 = arith.constant 0 : i32
    return %c0_i32, %c0_i32_0 : i32, i32
  }
  func.func @transform_3(%arg0: i32) -> (i32, i32) {
    %c0_i32 = arith.constant 0 : i32
    %c0_i32_0 = arith.constant 0 : i32
    %c0_i32_1 = arith.constant 0 : i32
    return %c0_i32, %c0_i32_0 : i32, i32
  }
  func.func @transform_4(%arg0: i32) -> (i32, i32) {
    %c0_i32 = arith.constant 0 : i32
    %c0_i32_0 = arith.constant 0 : i32
    %c0_i32_1 = arith.constant 0 : i32
    return %c0_i32, %c0_i32_0 : i32, i32
  }
  func.func @transform_5(%arg0: i32) -> (i32, i32) {
    %c0_i32 = arith.constant 0 : i32
    %c0_i32_0 = arith.constant 0 : i32
    return %c0_i32, %arg0 : i32, i32
  }
  func.func @transform_6(%arg0: i32) -> (i32, i32) {
    %c0_i32 = arith.constant 0 : i32
    %c0_i32_0 = arith.constant 0 : i32
    return %c0_i32, %arg0 : i32, i32
  }
}

module attributes {stable_mosaic.version = 11 : i64} {
  func.func @_nconv_kernel(%arg0: i32, %arg1: memref<2x256xf32, #tpu.memory_space<vmem>>, %arg2: memref<2x256xf32, #tpu.memory_space<vmem>>, %arg3: memref<1x2xf32, #tpu.memory_space<vmem>>, %arg4: memref<1x1xf32, #tpu.memory_space<vmem>>, %arg5: memref<1x1xf32, #tpu.memory_space<vmem>>, %arg6: memref<1x256xf32, #tpu.memory_space<vmem>>, %arg7: memref<1x256xf32, #tpu.memory_space<vmem>>) attributes {dimension_semantics = [#tpu.dimension_semantics<parallel>], iteration_bounds = array<i64: 2>, scalar_prefetch = 0 : i64, scratch_operands = 0 : i64, tpu.core_type = #tpu.core_type<tc>, window_params = [{transform_indices = @transform_0, window_bounds = array<i64: 2, 256>}, {transform_indices = @transform_1, window_bounds = array<i64: 2, 256>}, {pipeline_mode = #tpu.pipeline_mode<synchronous>, transform_indices = @transform_2, window_bounds = array<i64: 1, 2>}, {pipeline_mode = #tpu.pipeline_mode<synchronous>, transform_indices = @transform_3, window_bounds = array<i64: 1, 1>}, {pipeline_mode = #tpu.pipeline_mode<synchronous>, transform_indices = @transform_4, window_bounds = array<i64: 1, 1>}, {transform_indices = @transform_5, window_bounds = array<i64: 1, 256>}, {transform_indices = @transform_6, window_bounds = array<i64: 1, 256>}]} {
    %c0 = arith.constant 0 : index
    %c0_0 = arith.constant 0 : index
    %0 = vector.load %arg3[%c0, %c0_0] : memref<1x2xf32, #tpu.memory_space<vmem>>, vector<1x2xf32>
    %c0_1 = arith.constant 0 : index
    %c0_2 = arith.constant 0 : index
    %1 = vector.load %arg1[%c0_1, %c0_2] : memref<2x256xf32, #tpu.memory_space<vmem>>, vector<2x256xf32>
    %cst = arith.constant dense<0.000000e+00> : vector<1x256xf32>
    %2 = tpu.matmul %0, %1, %cst {dimension_numbers = #tpu.dot_dimension_numbers<[1], [0], [0], [1], [0, 0, 1, 1], [], []>} : vector<1x2xf32>, vector<2x256xf32>, vector<1x256xf32> -> vector<1x256xf32>
    %c0_3 = arith.constant 0 : index
    %c0_4 = arith.constant 0 : index
    %3 = vector.load %arg2[%c0_3, %c0_4] : memref<2x256xf32, #tpu.memory_space<vmem>>, vector<2x256xf32>
    %cst_5 = arith.constant dense<0.000000e+00> : vector<1x256xf32>
    %4 = tpu.matmul %0, %3, %cst_5 {dimension_numbers = #tpu.dot_dimension_numbers<[1], [0], [0], [1], [0, 0, 1, 1], [], []>} : vector<1x2xf32>, vector<2x256xf32>, vector<1x256xf32> -> vector<1x256xf32>
    %cst_6 = arith.constant 9.99999968E-21 : f32
    %5 = vector.broadcast %cst_6 : f32 to vector<1x256xf32>
    %6 = arith.addf %4, %5 : vector<1x256xf32>
    %7 = arith.divf %2, %6 : vector<1x256xf32>
    %c0_7 = arith.constant 0 : index
    %c0_8 = arith.constant 0 : index
    %8 = vector.load %arg4[%c0_7, %c0_8] : memref<1x1xf32, #tpu.memory_space<vmem>>, vector<1x1xf32>
    %9 = vector.broadcast %8 : vector<1x1xf32> to vector<1x256xf32>
    %10 = arith.addf %7, %9 : vector<1x256xf32>
    %c0_9 = arith.constant 0 : index
    %c0_10 = arith.constant 0 : index
    %11 = vector.load %arg6[%c0_9, %c0_10] : memref<1x256xf32, #tpu.memory_space<vmem>>, vector<1x256xf32>
    tpu.vector_store %arg6[%c0_9, %c0_10], %10 {strides = array<i32>} : memref<1x256xf32, #tpu.memory_space<vmem>>, vector<1x256xf32>,
    %c0_11 = arith.constant 0 : index
    %c0_12 = arith.constant 0 : index
    %12 = vector.load %arg5[%c0_11, %c0_12] : memref<1x1xf32, #tpu.memory_space<vmem>>, vector<1x1xf32>
    %13 = vector.broadcast %12 : vector<1x1xf32> to vector<1x256xf32>
    %14 = arith.mulf %4, %13 : vector<1x256xf32>
    %c0_13 = arith.constant 0 : index
    %c0_14 = arith.constant 0 : index
    %15 = vector.load %arg7[%c0_13, %c0_14] : memref<1x256xf32, #tpu.memory_space<vmem>>, vector<1x256xf32>
    tpu.vector_store %arg7[%c0_13, %c0_14], %14 {strides = array<i32>} : memref<1x256xf32, #tpu.memory_space<vmem>>, vector<1x256xf32>,
    return
  }
  func.func @transform_0(%arg0: i32) -> (i32, i32) {
    %c0_i32 = arith.constant 0 : i32
    %c0_i32_0 = arith.constant 0 : i32
    return %c0_i32, %arg0 : i32, i32
  }
  func.func @transform_1(%arg0: i32) -> (i32, i32) {
    %c0_i32 = arith.constant 0 : i32
    %c0_i32_0 = arith.constant 0 : i32
    return %c0_i32, %arg0 : i32, i32
  }
  func.func @transform_2(%arg0: i32) -> (i32, i32) {
    %c0_i32 = arith.constant 0 : i32
    %c0_i32_0 = arith.constant 0 : i32
    %c0_i32_1 = arith.constant 0 : i32
    return %c0_i32, %c0_i32_0 : i32, i32
  }
  func.func @transform_3(%arg0: i32) -> (i32, i32) {
    %c0_i32 = arith.constant 0 : i32
    %c0_i32_0 = arith.constant 0 : i32
    %c0_i32_1 = arith.constant 0 : i32
    return %c0_i32, %c0_i32_0 : i32, i32
  }
  func.func @transform_4(%arg0: i32) -> (i32, i32) {
    %c0_i32 = arith.constant 0 : i32
    %c0_i32_0 = arith.constant 0 : i32
    %c0_i32_1 = arith.constant 0 : i32
    return %c0_i32, %c0_i32_0 : i32, i32
  }
  func.func @transform_5(%arg0: i32) -> (i32, i32) {
    %c0_i32 = arith.constant 0 : i32
    %c0_i32_0 = arith.constant 0 : i32
    return %c0_i32, %arg0 : i32, i32
  }
  func.func @transform_6(%arg0: i32) -> (i32, i32) {
    %c0_i32 = arith.constant 0 : i32
    %c0_i32_0 = arith.constant 0 : i32
    return %c0_i32, %arg0 : i32, i32
  }
}

</mosaic_0001>

<llo_original>
// kernel: normcnn_forward.11
$region0: #{normcnn_forward.11}
  #allocation0 [shape = 'u32[]', space=smem, size = 0x4, offset = 0x4, fixed_abs, tag = 'smem constant byte address 0x4 - core index']
  #allocation1 [shape = 'u32[144,128]{1,0:T(1,128)}', space=vmem, size = 0x12000, scoped, tag = 'internal scratch']
  %s0 = inlined_call_operand.vmem [shape: f32[25,512], index: 0, kind: input, shape index: {}]
  %s1 = inlined_call_operand.vmem [shape: f32[25,512], index: 1, kind: input, shape index: {}]
  %s2 = inlined_call_operand.vmem [shape: f32[2,25], index: 2, kind: input, shape index: {}]
  %s3 = inlined_call_operand.vmem [shape: f32[2,1], index: 3, kind: input, shape index: {}]
  %s4 = inlined_call_operand.vmem [shape: f32[2,1], index: 4, kind: input, shape index: {}]
  %s5 = inlined_call_operand.vmem [shape: f32[2,512], index: 5, kind: output, shape index: {0}]
  %s6 = inlined_call_operand.vmem [shape: f32[2,512], index: 6, kind: output, shape index: {1}]
  %7 = xla_tuple %s5, %s6
  %s8 = sld [smem:[#allocation0]]
  $region107: #{normcnn_forward.11} parent=0
    _
  %s10 = ssub.s32 1, %s8
  %s11 = scalar_select 0, %s10, %s8
  $region1: #{normcnn_forward.11} parent=0
    #allocation2 [shape = 'u8[65536]{0}', space=vmem, size = 0x10000, scoped, tag = 'input window, operand 0']
    #allocation3 [shape = 'u8[65536]{0}', space=vmem, size = 0x10000, scoped, tag = 'input window, operand 1']
    loop: start=0, step=1, limit=4
    $region2: #{normcnn_forward.11} parent=1 // loop_pre_header
      _
    $region3: #{normcnn_forward.11} parent=1 // loop_header
      %s13 = sphi 0, %s17
      %p14 = scmp.ge.s32.totalorder %s13, 4
      %s23 = sphi 0, %s25
      %s26 = sphi 0, %s23
      %s27 = sphi 0, %s26
      %s43 = sphi 0, %s27
      %s49 = sphi 0, %s51
      %s52 = sphi 0, %s49
      %s53 = sphi 0, %s52
      %s69 = sphi 0, %s53
      %s73 = sphi 0, %s73
      %s75 = sphi 0, %s73
      %s76 = sphi 0, %s75
      %s90 = sphi 0, %s76
      %s94 = sphi 0, %s94
      %s96 = sphi 0, %s94
      %s97 = sphi 0, %s96
      %s111 = sphi 0, %s97
      %s115 = sphi 0, %s115
      %s117 = sphi 0, %s115
      %s118 = sphi 0, %s117
      %s132 = sphi 0, %s118
      %s138 = sphi 0, %s140
      %s141 = sphi 0, %s138
      %s142 = sphi 0, %s141
      %s158 = sphi 0, %s142
      %s164 = sphi 0, %s166
      %s167 = sphi 0, %s164
      %s168 = sphi 0, %s167
      %s184 = sphi 0, %s168
    $region4: #{normcnn_forward.11} parent=1 // loop_header_branch
      %16 = sbr.rel (%p14) target = $region8
    $region5: #{normcnn_forward.11} parent=1 // loop_body
      %s18 = ssub.s32 %s13, 1
      %s19 = ssub.s32 %s13, 2
      %s20 = sadd.s32 %s13, 1
      %s21 = ssub.s32 %s13, %s20
      %p22 = scmp.eq.s32.totalorder %s21, 0
      %s24 = sadd.s32 %s23, 1
      %s25 = scalar_select %p22, %s23, %s24
      %p28 = pneg %p22
      %p29 = scmp.eq.s32.totalorder %s13, 1
      %p30 = por %p28, %p29
      %p31 = scmp.ne.s32.totalorder %s23, %s26
      %p32 = scmp.eq.s32.totalorder %s13, 0
      %p33 = por %p31, %p32
      %p34 = scmp.ne.s32.totalorder %s23, %s26
      %p35 = scmp.eq.s32.totalorder %s18, 1
      %p36 = por %p34, %p35
      %p37 = scmp.ne.s32.totalorder %s26, %s27
      %p38 = scmp.eq.s32.totalorder %s18, 0
      %p39 = por %p37, %p38
      %p40 = scmp.ne.s32.totalorder %s26, %s27
      %p41 = scmp.eq.s32.totalorder %s19, 1
      %p42 = por %p40, %p41
      %p44 = scmp.ne.s32.totalorder %s27, %s43
      %p45 = scmp.eq.s32.totalorder %s19, 0
      %p46 = por %p44, %p45
      %s47 = ssub.s32 %s13, %s20
      %p48 = scmp.eq.s32.totalorder %s47, 0
      %s50 = sadd.s32 %s49, 1
      %s51 = scalar_select %p48, %s49, %s50
      %p54 = pneg %p48
      %p55 = scmp.eq.s32.totalorder %s13, 1
      %p56 = por %p54, %p55
      %p57 = scmp.ne.s32.totalorder %s49, %s52
      %p58 = scmp.eq.s32.totalorder %s13, 0
      %p59 = por %p57, %p58
      %p60 = scmp.ne.s32.totalorder %s49, %s52
      %p61 = scmp.eq.s32.totalorder %s18, 1
      %p62 = por %p60, %p61
      %p63 = scmp.ne.s32.totalorder %s52, %s53
      %p64 = scmp.eq.s32.totalorder %s18, 0
      %p65 = por %p63, %p64
      %p66 = scmp.ne.s32.totalorder %s52, %s53
      %p67 = scmp.eq.s32.totalorder %s19, 1
      %p68 = por %p66, %p67
      %p70 = scmp.ne.s32.totalorder %s53, %s69
      %p71 = scmp.eq.s32.totalorder %s19, 0
      %p72 = por %p70, %p71
      %s74 = sadd.s32 %s73, 1
      %p77 = scmp.eq.s32.totalorder %s13, 1
      %p78 = scmp.ne.s32.totalorder %s73, %s75
      %p79 = scmp.eq.s32.totalorder %s13, 0
      %p80 = por %p78, %p79
      %p81 = scmp.ne.s32.totalorder %s73, %s75
      %p82 = scmp.eq.s32.totalorder %s18, 1
      %p83 = por %p81, %p82
      %p84 = scmp.ne.s32.totalorder %s75, %s76
      %p85 = scmp.eq.s32.totalorder %s18, 0
      %p86 = por %p84, %p85
      %p87 = scmp.ne.s32.totalorder %s75, %s76
      %p88 = scmp.eq.s32.totalorder %s19, 1
      %p89 = por %p87, %p88
      %p91 = scmp.ne.s32.totalorder %s76, %s90
      %p92 = scmp.eq.s32.totalorder %s19, 0
      %p93 = por %p91, %p92
      %s95 = sadd.s32 %s94, 1
      %p98 = scmp.eq.s32.totalorder %s13, 1
      %p99 = scmp.ne.s32.totalorder %s94, %s96
      %p100 = scmp.eq.s32.totalorder %s13, 0
      %p101 = por %p99, %p100
      %p102 = scmp.ne.s32.totalorder %s94, %s96
      %p103 = scmp.eq.s32.totalorder %s18, 1
      %p104 = por %p102, %p103
      %p105 = scmp.ne.s32.totalorder %s96, %s97
      %p106 = scmp.eq.s32.totalorder %s18, 0
      %p107 = por %p105, %p106
      %p108 = scmp.ne.s32.totalorder %s96, %s97
      %p109 = scmp.eq.s32.totalorder %s19, 1
      %p110 = por %p108, %p109
      %p112 = scmp.ne.s32.totalorder %s97, %s111
      %p113 = scmp.eq.s32.totalorder %s19, 0
      %p114 = por %p112, %p113
      %s116 = sadd.s32 %s115, 1
      %p119 = scmp.eq.s32.totalorder %s13, 1
      %p120 = scmp.ne.s32.totalorder %s115, %s117
      %p121 = scmp.eq.s32.totalorder %s13, 0
      %p122 = por %p120, %p121
      %p123 = scmp.ne.s32.totalorder %s115, %s117
      %p124 = scmp.eq.s32.totalorder %s18, 1
      %p125 = por %p123, %p124
      %p126 = scmp.ne.s32.totalorder %s117, %s118
      %p127 = scmp.eq.s32.totalorder %s18, 0
      %p128 = por %p126, %p127
      %p129 = scmp.ne.s32.totalorder %s117, %s118
      %p130 = scmp.eq.s32.totalorder %s19, 1
      %p131 = por %p129, %p130
      %p133 = scmp.ne.s32.totalorder %s118, %s132
      %p134 = scmp.eq.s32.totalorder %s19, 0
      %p135 = por %p133, %p134
      %s136 = ssub.s32 %s13, %s20
      %p137 = scmp.eq.s32.totalorder %s136, 0
      %s139 = sadd.s32 %s138, 1
      %s140 = scalar_select %p137, %s138, %s139
      %p143 = pneg %p137
      %p144 = scmp.eq.s32.totalorder %s13, 1
      %p145 = por %p143, %p144
      %p146 = scmp.ne.s32.totalorder %s138, %s141
      %p147 = scmp.eq.s32.totalorder %s13, 0
      %p148 = por %p146, %p147
      %p149 = scmp.ne.s32.totalorder %s138, %s141
      %p150 = scmp.eq.s32.totalorder %s18, 1
      %p151 = por %p149, %p150
      %p152 = scmp.ne.s32.totalorder %s141, %s142
      %p153 = scmp.eq.s32.totalorder %s18, 0
      %p154 = por %p152, %p153
      %p155 = scmp.ne.s32.totalorder %s141, %s142
      %p156 = scmp.eq.s32.totalorder %s19, 1
      %p157 = por %p155, %p156
      %p159 = scmp.ne.s32.totalorder %s142, %s158
      %p160 = scmp.eq.s32.totalorder %s19, 0
      %p161 = por %p159, %p160
      %s162 = ssub.s32 %s13, %s20
      %p163 = scmp.eq.s32.totalorder %s162, 0
      %s165 = sadd.s32 %s164, 1
      %s166 = scalar_select %p163, %s164, %s165
      %p169 = pneg %p163
      %p170 = scmp.eq.s32.totalorder %s13, 1
      %p171 = por %p169, %p170
      %p172 = scmp.ne.s32.totalorder %s164, %s167
      %p173 = scmp.eq.s32.totalorder %s13, 0
      %p174 = por %p172, %p173
      %p175 = scmp.ne.s32.totalorder %s164, %s167
      %p176 = scmp.eq.s32.totalorder %s18, 1
      %p177 = por %p175, %p176
      %p178 = scmp.ne.s32.totalorder %s167, %s168
      %p179 = scmp.eq.s32.totalorder %s18, 0
      %p180 = por %p178, %p179
      %p181 = scmp.ne.s32.totalorder %s167, %s168
      %p182 = scmp.eq.s32.totalorder %s19, 1
      %p183 = por %p181, %p182
      %p185 = scmp.ne.s32.totalorder %s168, %s184
      %p186 = scmp.eq.s32.totalorder %s19, 0
      %p187 = por %p185, %p186
      %p188 = scmp.le.s32.totalorder 1, %s13
      %p189 = scmp.lt.s32.totalorder %s13, 3
      %p190 = pnand %p188, %p189
      %p191 = pneg %p190
      // Predicated region
      $region9: #{normcnn_forward.11} parent=5 // pred_check
        _
      $region10: #{normcnn_forward.11} parent=5 // pred_check_branch
        %193 = sbr.rel (%p190) target = $region12
      $region11: #{normcnn_forward.11} parent=5 // pred_region
        %s194 = ssub.s32 %s13, 1
        // Predicated region
        $region13: #{normcnn_forward.11} parent=11 // pred_check
          %p195 = pneg %p86
        $region14: #{normcnn_forward.11} parent=11 // pred_check_branch
          %197 = sbr.rel (%p195) target = $region16
        $region15: #{normcnn_forward.11} parent=11 // pred_region
          _
        $region16: #{normcnn_forward.11} parent=11 // pred_fallthru
          _
        // Predicated region
        $region17: #{normcnn_forward.11} parent=11 // pred_check
          %p198 = pneg %p107
        $region18: #{normcnn_forward.11} parent=11 // pred_check_branch
          %200 = sbr.rel (%p198) target = $region20
        $region19: #{normcnn_forward.11} parent=11 // pred_region
          _
        $region20: #{normcnn_forward.11} parent=11 // pred_fallthru
          _
        // Predicated region
        $region21: #{normcnn_forward.11} parent=11 // pred_check
          %p201 = pneg %p128
        $region22: #{normcnn_forward.11} parent=11 // pred_check_branch
          %203 = sbr.rel (%p201) target = $region24
        $region23: #{normcnn_forward.11} parent=11 // pred_region
          _
        $region24: #{normcnn_forward.11} parent=11 // pred_fallthru
          _
      $region12: #{normcnn_forward.11} parent=5 // pred_fallthru
        _
      %p204 = scmp.lt.s32.totalorder %s13, 2
      // Predicated region
      $region25: #{normcnn_forward.11} parent=5 // pred_check
        %p205 = pneg %p204
      $region26: #{normcnn_forward.11} parent=5 // pred_check_branch
        %207 = sbr.rel (%p205) target = $region28
      $region27: #{normcnn_forward.11} parent=5 // pred_region
        // Predicated region
        $region29: #{normcnn_forward.11} parent=27 // pred_check
          %p208 = pneg %p33
        $region30: #{normcnn_forward.11} parent=27 // pred_check_branch
          %210 = sbr.rel (%p208) target = $region32
        $region31: #{normcnn_forward.11} parent=27 // pred_region
          %s211 = sand.u32 %s23, 1
          %s212 = sand.u32 %s23, 1
          %s213 = smul.addr %s212, 64
          %s214 = scalar_lea.vmem [#allocation2], %s213
          %s215 = smul.u32 2, %s13
          %s216 = smul.addr %s215, 8
          %s217 = scalar_lea.vmem %s0, %s216
          // Predicated region
          $region33: #{normcnn_forward.11} parent=31 // pred_check
            _
          $region34: #{normcnn_forward.11} parent=31 // pred_check_branch
            %219 = sbr.rel (0) target = $region36
          $region35: #{normcnn_forward.11} parent=31 // pred_region
            // Predicated region
            $region37: #{normcnn_forward.11} parent=35 // pred_check
              _
            $region38: #{normcnn_forward.11} parent=35 // pred_check_branch
              %221 = sbr.rel (0) target = $region40
            $region39: #{normcnn_forward.11} parent=35 // pred_region
              loop: start=0, step=1, limit=1
              $region41: #{normcnn_forward.11} parent=39 // loop_pre_header
                _
              $region42: #{normcnn_forward.11} parent=39 // loop_header
                %s223 = sphi 0, %s227
                %p224 = scmp.ge.s32.totalorder %s223, 1
                %s228 = sphi %s217, %s217
                %s229 = sphi %s214, %s214
              $region43: #{normcnn_forward.11} parent=39 // loop_header_branch
                %226 = sbr.rel (%p224) target = $region47
              $region44: #{normcnn_forward.11} parent=39 // loop_body
                %v230 = vld [vmem:[%s228] sm:$0xff]
                %231 = vst [vmem:[%s229] sm:$0xff] %v230
                %v232 = vld [vmem:[%s228 + $0x8] sm:$0xff]
                %233 = vst [vmem:[%s229 + $0x8] sm:$0xff] %v232
                %v234 = vld [vmem:[%s228 + $0x20] sm:$0xff]
                %235 = vst [vmem:[%s229 + $0x10] sm:$0xff] %v234
                %v236 = vld [vmem:[%s228 + $0x28] sm:$0xff]
                %237 = vst [vmem:[%s229 + $0x18] sm:$0xff] %v236
                %v238 = vld [vmem:[%s228 + $0x40] sm:$0xff]
                %239 = vst [vmem:[%s229 + $0x20] sm:$0xff] %v238
                %v240 = vld [vmem:[%s228 + $0x48] sm:$0xff]
                %241 = vst [vmem:[%s229 + $0x28] sm:$0xff] %v240
                %v242 = vld [vmem:[%s228 + $0x60] sm:$0xff]
                %243 = vst [vmem:[%s229 + $0x30] sm:$0xff] %v242
                %v244 = vld [vmem:[%s228 + $0x68] sm:$0xff]
                %245 = vst [vmem:[%s229 + $0x38] sm:$0xff] %v244
              $region45: #{normcnn_forward.11} parent=39 // loop_footer
                %s227 = sadd.s32 1, %s223
              $region46: #{normcnn_forward.11} parent=39 // loop_footer_branch
                %222 = sbr.rel target = $region42
              $region47: #{normcnn_forward.11} parent=39 // loop_exit
                _
            $region40: #{normcnn_forward.11} parent=35 // pred_fallthru
              _
            // Predicated region
            $region48: #{normcnn_forward.11} parent=35 // pred_check
              _
            $region49: #{normcnn_forward.11} parent=35 // pred_check_branch
              %247 = sbr.rel target = $region51
            $region50: #{normcnn_forward.11} parent=35 // pred_region
              _
            $region51: #{normcnn_forward.11} parent=35 // pred_fallthru
              _
          $region36: #{normcnn_forward.11} parent=31 // pred_fallthru
            _
          %248 = vnop
        $region32: #{normcnn_forward.11} parent=27 // pred_fallthru
          _
        // Predicated region
        $region52: #{normcnn_forward.11} parent=27 // pred_check
          %p249 = pneg %p59
        $region53: #{normcnn_forward.11} parent=27 // pred_check_branch
          %251 = sbr.rel (%p249) target = $region55
        $region54: #{normcnn_forward.11} parent=27 // pred_region
          %s252 = sand.u32 %s49, 1
          %s253 = sand.u32 %s49, 1
          %s254 = smul.addr %s253, 64
          %s255 = scalar_lea.vmem [#allocation3], %s254
          %s256 = smul.u32 2, %s13
          %s257 = smul.addr %s256, 8
          %s258 = scalar_lea.vmem %s1, %s257
          // Predicated region
          $region56: #{normcnn_forward.11} parent=54 // pred_check
            _
          $region57: #{normcnn_forward.11} parent=54 // pred_check_branch
            %260 = sbr.rel (0) target = $region59
          $region58: #{normcnn_forward.11} parent=54 // pred_region
            // Predicated region
            $region60: #{normcnn_forward.11} parent=58 // pred_check
              _
            $region61: #{normcnn_forward.11} parent=58 // pred_check_branch
              %262 = sbr.rel (0) target = $region63
            $region62: #{normcnn_forward.11} parent=58 // pred_region
              loop: start=0, step=1, limit=1
              $region64: #{normcnn_forward.11} parent=62 // loop_pre_header
                _
              $region65: #{normcnn_forward.11} parent=62 // loop_header
                %s264 = sphi 0, %s268
                %p265 = scmp.ge.s32.totalorder %s264, 1
                %s269 = sphi %s258, %s258
                %s270 = sphi %s255, %s255
              $region66: #{normcnn_forward.11} parent=62 // loop_header_branch
                %267 = sbr.rel (%p265) target = $region70
              $region67: #{normcnn_forward.11} parent=62 // loop_body
                %v271 = vld [vmem:[%s269] sm:$0xff]
                %272 = vst [vmem:[%s270] sm:$0xff] %v271
                %v273 = vld [vmem:[%s269 + $0x8] sm:$0xff]
                %274 = vst [vmem:[%s270 + $0x8] sm:$0xff] %v273
                %v275 = vld [vmem:[%s269 + $0x20] sm:$0xff]
                %276 = vst [vmem:[%s270 + $0x10] sm:$0xff] %v275
                %v277 = vld [vmem:[%s269 + $0x28] sm:$0xff]
                %278 = vst [vmem:[%s270 + $0x18] sm:$0xff] %v277
                %v279 = vld [vmem:[%s269 + $0x40] sm:$0xff]
                %280 = vst [vmem:[%s270 + $0x20] sm:$0xff] %v279
                %v281 = vld [vmem:[%s269 + $0x48] sm:$0xff]
                %282 = vst [vmem:[%s270 + $0x28] sm:$0xff] %v281
                %v283 = vld [vmem:[%s269 + $0x60] sm:$0xff]
                %284 = vst [vmem:[%s270 + $0x30] sm:$0xff] %v283
                %v285 = vld [vmem:[%s269 + $0x68] sm:$0xff]
                %286 = vst [vmem:[%s270 + $0x38] sm:$0xff] %v285
              $region68: #{normcnn_forward.11} parent=62 // loop_footer
                %s268 = sadd.s32 1, %s264
              $region69: #{normcnn_forward.11} parent=62 // loop_footer_branch
                %263 = sbr.rel target = $region65
              $region70: #{normcnn_forward.11} parent=62 // loop_exit
                _
            $region63: #{normcnn_forward.11} parent=58 // pred_fallthru
              _
            // Predicated region
            $region71: #{normcnn_forward.11} parent=58 // pred_check
              _
            $region72: #{normcnn_forward.11} parent=58 // pred_check_branch
              %288 = sbr.rel target = $region74
            $region73: #{normcnn_forward.11} parent=58 // pred_region
              _
            $region74: #{normcnn_forward.11} parent=58 // pred_fallthru
              _
          $region59: #{normcnn_forward.11} parent=54 // pred_fallthru
            _
          %289 = vnop
        $region55: #{normcnn_forward.11} parent=27 // pred_fallthru
          _
      $region28: #{normcnn_forward.11} parent=5 // pred_fallthru
        _
      %p290 = scmp.le.s32.totalorder 1, %s13
      %p291 = scmp.lt.s32.totalorder %s13, 3
      %p292 = pnand %p290, %p291
      %p293 = pneg %p292
      // Predicated region
      $region75: #{normcnn_forward.11} parent=5 // pred_check
        _
      $region76: #{normcnn_forward.11} parent=5 // pred_check_branch
        %295 = sbr.rel (%p292) target = $region78
      $region77: #{normcnn_forward.11} parent=5 // pred_region
        %s296 = ssub.s32 %s13, 1
        %s297 = sand.u32 %s26, 1
        %s298 = sand.u32 %s26, 1
        %s299 = smul.addr %s298, 64
        %s300 = scalar_lea.vmem [#allocation2], %s299
        // Predicated region
        $region79: #{normcnn_forward.11} parent=77 // pred_check
          %p301 = pneg %p39
        $region80: #{normcnn_forward.11} parent=77 // pred_check_branch
          %303 = sbr.rel (%p301) target = $region82
        $region81: #{normcnn_forward.11} parent=77 // pred_region
          _
        $region82: #{normcnn_forward.11} parent=77 // pred_fallthru
          _
        %s304 = sand.u32 %s52, 1
        %s305 = sand.u32 %s52, 1
        %s306 = smul.addr %s305, 64
        %s307 = scalar_lea.vmem [#allocation3], %s306
        // Predicated region
        $region83: #{normcnn_forward.11} parent=77 // pred_check
          %p308 = pneg %p65
        $region84: #{normcnn_forward.11} parent=77 // pred_check_branch
          %310 = sbr.rel (%p308) target = $region86
        $region85: #{normcnn_forward.11} parent=77 // pred_region
          _
        $region86: #{normcnn_forward.11} parent=77 // pred_fallthru
          _
        %s311 = sand.u32 %s26, 1
        %s312 = sand.u32 %s26, 1
        %s313 = smul.addr %s312, 64
        %s314 = scalar_lea.vmem [#allocation2], %s313
        %p315 = pneg %p39
        %p316 = pneg %p36
        %s317 = sand.u32 %s52, 1
        %s318 = sand.u32 %s52, 1
        %s319 = smul.addr %s318, 64
        %s320 = scalar_lea.vmem [#allocation3], %s319
        %p321 = pneg %p65
        %p322 = pneg %p62
        %p323 = pneg %p86
        %p324 = pneg %p83
        %p325 = pneg %p107
        %p326 = pneg %p104
        %p327 = pneg %p128
        %p328 = pneg %p125
        %p329 = pneg %p154
        %p330 = pneg %p151
        %s331 = smul.u32 2, %s18
        %p332 = scmp.lt.s32.totalorder %s331, 3
        %s333 = scalar_select %p332, %s331, 3
        %s334 = smul.addr %s333, 2
        %s335 = scalar_lea.vmem %s5, %s334
        %p336 = pneg %p180
        %p337 = pneg %p177
        %s338 = smul.u32 2, %s18
        %p339 = scmp.lt.s32.totalorder %s338, 3
        %s340 = scalar_select %p339, %s338, 3
        %s341 = smul.addr %s340, 2
        %s342 = scalar_lea.vmem %s6, %s341
        %s343 = smul.u32 2, %s18
        %s344 = smul.u32 2, %s18
        %s345 = smul.u32 2, %s18
        %p346 = scmp.lt.s32.totalorder %s345, 3
        %s347 = scalar_select %p346, %s345, 3
        %s348 = smul.addr %s347, 2
        %s349 = scalar_lea.vmem %s5, %s348
        %s350 = smul.u32 2, %s18
        %s351 = smul.u32 2, %s18
        %p352 = scmp.lt.s32.totalorder %s351, 3
        %s353 = scalar_select %p352, %s351, 3
        %s354 = smul.addr %s353, 2
        %s355 = scalar_lea.vmem %s6, %s354
        %s356 = smul.u32 2, %s18
        %v357 = vld [vmem:[%s2] sm:$0x3]
        %v358 = vld [vmem:[%s300] sm:$0xff]
        %v359 = vld [vmem:[%s300 + $0x8] sm:$0xff]
        %v360 = vld [vmem:[%s300 + $0x10] sm:$0xff]
        %v361 = vld [vmem:[%s300 + $0x18] sm:$0xff]
        %v362 = vld [vmem:[%s300 + $0x20] sm:$0xff]
        %v363 = vld [vmem:[%s300 + $0x28] sm:$0xff]
        %v364 = vld [vmem:[%s300 + $0x30] sm:$0x1]
        %v365 = vld [vmem:[%s300 + $0x38] sm:$0x1]
        %vm366 = vcmask 203776
        %v368 = vsel %vm366, %v357, 0
        %vm370 = vcmask 1040384
        %v372 = vsel %vm370, %v364, 0
        %v375 = vsel %vm370, %v365, 0
        %377 = vmatprep.subr.mxu0 0.0
        %378 = vmatpush1.msra.mxu0 0.0
        %379 = vmatprep.subr.mxu0 0.0
        %380 = vmatpush1.msra.mxu0 0.0
        %381 = vmatprep.subr.mxu0 0.0
        %382 = vmatpush1.msra.mxu0 0.0
        %383 = vmatprep.subr.mxu0 0.0
        %384 = vmatpush1.msra.mxu0 0.0
        %385 = vmatprep.subr.mxu0 0.0
        %386 = vmatpush1.msra.mxu0 0.0
        %387 = vmatprep.subr.mxu0 0.0
        %388 = vmatpush1.msra.mxu0 0.0
        %389 = vmatprep.subr.mxu0 0.0
        %390 = vmatpush1.msra.mxu0 0.0
        %391 = vmatprep.subr.mxu0 0.0
        %392 = vmatpush1.msra.mxu0 0.0
        %393 = vmatprep.subr.mxu0 0.0
        %394 = vmatpush1.msra.mxu0 0.0
        %395 = vmatprep.subr.mxu0 0.0
        %396 = vmatpush1.msra.mxu0 0.0
        %397 = vmatprep.subr.mxu0 0.0
        %398 = vmatpush1.msra.mxu0 0.0
        %399 = vmatprep.subr.mxu0 0.0
        %400 = vmatpush1.msra.mxu0 0.0
        %401 = vmatprep.subr.mxu0 %v375
        %402 = vmatpush1.msra.mxu0 %v372
        %403 = vmatprep.subr.mxu0 %v363
        %404 = vmatpush1.msra.mxu0 %v362
        %405 = vmatprep.subr.mxu0 %v361
        %406 = vmatpush1.msra.mxu0 %v360
        %407 = vmatprep.subr.mxu0 %v359
        %408 = vmatpush1.msra.mxu0 %v358
        %409 = vmatprep.subr.mxu0 0.0
        %410 = vmatpush2.msra.mxu0 0.0
        %411 = vmatprep.subr.mxu0 0.0
        %412 = vmatpush2.msra.mxu0 0.0
        %413 = vmatprep.subr.mxu0 0.0
        %414 = vmatpush2.msra.mxu0 0.0
        %415 = vmatprep.subr.mxu0 0.0
        %416 = vmatpush2.msra.mxu0 0.0
        %417 = vmatprep.subr.mxu0 0.0
        %418 = vmatpush2.msra.mxu0 0.0
        %419 = vmatprep.subr.mxu0 0.0
        %420 = vmatpush2.msra.mxu0 0.0
        %421 = vmatprep.subr.mxu0 0.0
        %422 = vmatpush2.msra.mxu0 0.0
        %423 = vmatprep.subr.mxu0 0.0
        %424 = vmatpush2.msra.mxu0 0.0
        %425 = vmatprep.subr.mxu0 0.0
        %426 = vmatpush2.msra.mxu0 0.0
        %427 = vmatprep.subr.mxu0 0.0
        %428 = vmatpush2.msra.mxu0 0.0
        %429 = vmatprep.subr.mxu0 0.0
        %430 = vmatpush2.msra.mxu0 0.0
        %431 = vmatprep.subr.mxu0 0.0
        %432 = vmatpush2.msra.mxu0 0.0
        %433 = vmatprep.subr.mxu0 0.0
        %434 = vmatpush2.msra.mxu0 0.0
        %435 = vmatprep.subr.mxu0 0.0
        %436 = vmatpush2.msra.mxu0 0.0
        %437 = vmatprep.subr.mxu0 0.0
        %438 = vmatpush2.msra.mxu0 0.0
        %439 = vmatprep.subr.mxu0 0.0
        %440 = vmatpush2.msra.mxu0 0.0
        %441 = vmatprep.mubr.f32.mxu0 0.0
        %442 = vmatmul.mubr.f32.gmra.mxu0 %v368
        %v443 = vpop.f32.mrf.mxu0
        %v444 = vadd.f32 0.0, %v443
        %v445 = vpop.f32.mrf.mxu0
        %v446 = vadd.f32 0.0, %v445
        %447 = vdwg.mxu0
        %v448 = vld [vmem:[%s307] sm:$0xff]
        %v449 = vld [vmem:[%s307 + $0x8] sm:$0xff]
        %v450 = vld [vmem:[%s307 + $0x10] sm:$0xff]
        %v451 = vld [vmem:[%s307 + $0x18] sm:$0xff]
        %v452 = vld [vmem:[%s307 + $0x20] sm:$0xff]
        %v453 = vld [vmem:[%s307 + $0x28] sm:$0xff]
        %v454 = vld [vmem:[%s307 + $0x30] sm:$0x1]
        %v455 = vld [vmem:[%s307 + $0x38] sm:$0x1]
        %v457 = vsel %vm370, %v454, 0
        %v460 = vsel %vm370, %v455, 0
        %462 = vmatprep.subr.mxu0 0.0
        %463 = vmatpush1.msra.mxu0 0.0
        %464 = vmatprep.subr.mxu0 0.0
        %465 = vmatpush1.msra.mxu0 0.0
        %466 = vmatprep.subr.mxu0 0.0
        %467 = vmatpush1.msra.mxu0 0.0
        %468 = vmatprep.subr.mxu0 0.0
        %469 = vmatpush1.msra.mxu0 0.0
        %470 = vmatprep.subr.mxu0 0.0
        %471 = vmatpush1.msra.mxu0 0.0
        %472 = vmatprep.subr.mxu0 0.0
        %473 = vmatpush1.msra.mxu0 0.0
        %474 = vmatprep.subr.mxu0 0.0
        %475 = vmatpush1.msra.mxu0 0.0
        %476 = vmatprep.subr.mxu0 0.0
        %477 = vmatpush1.msra.mxu0 0.0
        %478 = vmatprep.subr.mxu0 0.0
        %479 = vmatpush1.msra.mxu0 0.0
        %480 = vmatprep.subr.mxu0 0.0
        %481 = vmatpush1.msra.mxu0 0.0
        %482 = vmatprep.subr.mxu0 0.0
        %483 = vmatpush1.msra.mxu0 0.0
        %484 = vmatprep.subr.mxu0 0.0
        %485 = vmatpush1.msra.mxu0 0.0
        %486 = vmatprep.subr.mxu0 %v460
        %487 = vmatpush1.msra.mxu0 %v457
        %488 = vmatprep.subr.mxu0 %v453
        %489 = vmatpush1.msra.mxu0 %v452
        %490 = vmatprep.subr.mxu0 %v451
        %491 = vmatpush1.msra.mxu0 %v450
        %492 = vmatprep.subr.mxu0 %v449
        %493 = vmatpush1.msra.mxu0 %v448
        %494 = vmatprep.subr.mxu0 0.0
        %495 = vmatpush2.msra.mxu0 0.0
        %496 = vmatprep.subr.mxu0 0.0
        %497 = vmatpush2.msra.mxu0 0.0
        %498 = vmatprep.subr.mxu0 0.0
        %499 = vmatpush2.msra.mxu0 0.0
        %500 = vmatprep.subr.mxu0 0.0
        %501 = vmatpush2.msra.mxu0 0.0
        %502 = vmatprep.subr.mxu0 0.0
        %503 = vmatpush2.msra.mxu0 0.0
        %504 = vmatprep.subr.mxu0 0.0
        %505 = vmatpush2.msra.mxu0 0.0
        %506 = vmatprep.subr.mxu0 0.0
        %507 = vmatpush2.msra.mxu0 0.0
        %508 = vmatprep.subr.mxu0 0.0
        %509 = vmatpush2.msra.mxu0 0.0
        %510 = vmatprep.subr.mxu0 0.0
        %511 = vmatpush2.msra.mxu0 0.0
        %512 = vmatprep.subr.mxu0 0.0
        %513 = vmatpush2.msra.mxu0 0.0
        %514 = vmatprep.subr.mxu0 0.0
        %515 = vmatpush2.msra.mxu0 0.0
        %516 = vmatprep.subr.mxu0 0.0
        %517 = vmatpush2.msra.mxu0 0.0
        %518 = vmatprep.subr.mxu0 0.0
        %519 = vmatpush2.msra.mxu0 0.0
        %520 = vmatprep.subr.mxu0 0.0
        %521 = vmatpush2.msra.mxu0 0.0
        %522 = vmatprep.subr.mxu0 0.0
        %523 = vmatpush2.msra.mxu0 0.0
        %524 = vmatprep.subr.mxu0 0.0
        %525 = vmatpush2.msra.mxu0 0.0
        %526 = vmatprep.mubr.f32.mxu0 0.0
        %527 = vmatmul.mubr.f32.gmra.mxu0 %v368
        %v528 = vpop.f32.mrf.mxu0
        %v529 = vadd.f32 0.0, %v528
        %v530 = vpop.f32.mrf.mxu0
        %v531 = vadd.f32 0.0, %v530
        %532 = vdwg.mxu0
        %v533 = vadd.f32 %v529, 1e-20
        %v534 = vadd.f32 %v531, 1e-20
        %v535 = vrcp.pop %v533
        %v536 = vmul.f32 %v444, %v535
        %v537 = vrcp.pop %v534
        %v538 = vmul.f32 %v446, %v537
        %v539 = vld [vmem:[%s3] sm:$0x3]
        %541 = vset.pattern.permute.xlu0 0
        %542 = vperm.xlu0 %541, %v539
        %v543 = vpop.permute.xlu0 %542
        %v545 = vadd.f32 %v536, %v543
        %v546 = vadd.f32 %v538, %v543
        %v549 = vcombine.low %v545, %v546
        %v551 = vunpack.c.l.s4 1983009808
        %v552 = vunpack.c.0.s8 %v551
        %v553 = vlaneseq
        %v554 = vshrl.u32 %v553, 7
        %v555 = vsub.s32 %v552, %v554
        %v556 = vrot.slane %v549, %v555
        %558 = vst [vmem:[%s349] sm:$0xf] %v556
        %v559 = vld [vmem:[%s4] sm:$0x3]
        %561 = vset.pattern.permute.xlu0 0
        %562 = vperm.xlu0 %561, %v559
        %v563 = vpop.permute.xlu0 %562
        %v565 = vmul.f32 %v529, %v563
        %v566 = vmul.f32 %v531, %v563
        %v569 = vcombine.low %v565, %v566
        %v571 = vunpack.c.l.s4 1983009808
        %v572 = vunpack.c.0.s8 %v571
        %v573 = vlaneseq
        %v574 = vshrl.u32 %v573, 7
        %v575 = vsub.s32 %v572, %v574
        %v576 = vrot.slane %v569, %v575
        %578 = vst [vmem:[%s355] sm:$0xf] %v576
        %s579 = smul.u32 2, %s18
        %p580 = scmp.lt.s32.totalorder %s579, 3
        %s581 = scalar_select %p580, %s579, 3
        %s582 = smul.addr %s581, 2
        %s583 = scalar_lea.vmem %s5, %s582
        %s584 = smul.u32 2, %s18
        %p585 = scmp.lt.s32.totalorder %s584, 3
        %s586 = scalar_select %p585, %s584, 3
        %s587 = smul.addr %s586, 2
        %s588 = scalar_lea.vmem %s6, %s587
        // Predicated region
        $region87: #{normcnn_forward.11} parent=77 // pred_check
          %p589 = pneg %p151
        $region88: #{normcnn_forward.11} parent=77 // pred_check_branch
          %591 = sbr.rel (%p589) target = $region90
        $region89: #{normcnn_forward.11} parent=77 // pred_region
          %s592 = smul.u32 2, %s18
        $region90: #{normcnn_forward.11} parent=77 // pred_fallthru
          _
        // Predicated region
        $region91: #{normcnn_forward.11} parent=77 // pred_check
          %p593 = pneg %p177
        $region92: #{normcnn_forward.11} parent=77 // pred_check_branch
          %595 = sbr.rel (%p593) target = $region94
        $region93: #{normcnn_forward.11} parent=77 // pred_region
          %s596 = smul.u32 2, %s18
        $region94: #{normcnn_forward.11} parent=77 // pred_fallthru
          _
      $region78: #{normcnn_forward.11} parent=5 // pred_fallthru
        _
      %p597 = scmp.le.s32.totalorder 2, %s13
      // Predicated region
      $region95: #{normcnn_forward.11} parent=5 // pred_check
        %p598 = pneg %p597
      $region96: #{normcnn_forward.11} parent=5 // pred_check_branch
        %600 = sbr.rel (%p598) target = $region98
      $region97: #{normcnn_forward.11} parent=5 // pred_region
        %s601 = ssub.s32 %s13, 2
        // Predicated region
        $region99: #{normcnn_forward.11} parent=97 // pred_check
          %p602 = pneg %p157
        $region100: #{normcnn_forward.11} parent=97 // pred_check_branch
          %604 = sbr.rel (%p602) target = $region102
        $region101: #{normcnn_forward.11} parent=97 // pred_region
          %s605 = smul.u32 2, %s19
          %p606 = scmp.lt.s32.totalorder %s605, 3
          %s607 = scalar_select %p606, %s605, 3
          %s608 = smul.addr %s607, 2
          %s609 = scalar_lea.vmem %s5, %s608
        $region102: #{normcnn_forward.11} parent=97 // pred_fallthru
          _
        // Predicated region
        $region103: #{normcnn_forward.11} parent=97 // pred_check
          %p610 = pneg %p183
        $region104: #{normcnn_forward.11} parent=97 // pred_check_branch
          %612 = sbr.rel (%p610) target = $region106
        $region105: #{normcnn_forward.11} parent=97 // pred_region
          %s613 = smul.u32 2, %s19
          %p614 = scmp.lt.s32.totalorder %s613, 3
          %s615 = scalar_select %p614, %s613, 3
          %s616 = smul.addr %s615, 2
          %s617 = scalar_lea.vmem %s6, %s616
        $region106: #{normcnn_forward.11} parent=97 // pred_fallthru
          _
      $region98: #{normcnn_forward.11} parent=5 // pred_fallthru
        _
    $region6: #{normcnn_forward.11} parent=1 // loop_footer
      %s17 = sadd.s32 1, %s13
    $region7: #{normcnn_forward.11} parent=1 // loop_footer_branch
      %12 = sbr.rel target = $region3
    $region8: #{normcnn_forward.11} parent=1 // loop_exit
      _

// kernel: normcnn_forward.12
$region0: #{normcnn_forward.12}
  #allocation0 [shape = 'u32[]', space=smem, size = 0x4, offset = 0x4, fixed_abs, tag = 'smem constant byte address 0x4 - core index']
  #allocation1 [shape = 'u32[144,128]{1,0:T(1,128)}', space=vmem, size = 0x12000, scoped, tag = 'internal scratch']
  %s0 = inlined_call_operand.vmem [shape: f32[50,512], index: 0, kind: input, shape index: {}]
  %s1 = inlined_call_operand.vmem [shape: f32[50,512], index: 1, kind: input, shape index: {}]
  %s2 = inlined_call_operand.vmem [shape: f32[2,50], index: 2, kind: input, shape index: {}]
  %s3 = inlined_call_operand.vmem [shape: f32[2,1], index: 3, kind: input, shape index: {}]
  %s4 = inlined_call_operand.vmem [shape: f32[2,1], index: 4, kind: input, shape index: {}]
  %s5 = inlined_call_operand.vmem [shape: f32[2,512], index: 5, kind: output, shape index: {0}]
  %s6 = inlined_call_operand.vmem [shape: f32[2,512], index: 6, kind: output, shape index: {1}]
  %7 = xla_tuple %s5, %s6
  %s8 = sld [smem:[#allocation0]]
  $region107: #{normcnn_forward.12} parent=0
    _
  %s10 = ssub.s32 1, %s8
  %s11 = scalar_select 0, %s10, %s8
  $region1: #{normcnn_forward.12} parent=0
    #allocation2 [shape = 'u8[114688]{0}', space=vmem, size = 0x1c000, scoped, tag = 'input window, operand 0']
    #allocation3 [shape = 'u8[114688]{0}', space=vmem, size = 0x1c000, scoped, tag = 'input window, operand 1']
    loop: start=0, step=1, limit=4
    $region2: #{normcnn_forward.12} parent=1 // loop_pre_header
      _
    $region3: #{normcnn_forward.12} parent=1 // loop_header
      %s13 = sphi 0, %s17
      %p14 = scmp.ge.s32.totalorder %s13, 4
      %s23 = sphi 0, %s25
      %s26 = sphi 0, %s23
      %s27 = sphi 0, %s26
      %s43 = sphi 0, %s27
      %s49 = sphi 0, %s51
      %s52 = sphi 0, %s49
      %s53 = sphi 0, %s52
      %s69 = sphi 0, %s53
      %s73 = sphi 0, %s73
      %s75 = sphi 0, %s73
      %s76 = sphi 0, %s75
      %s90 = sphi 0, %s76
      %s94 = sphi 0, %s94
      %s96 = sphi 0, %s94
      %s97 = sphi 0, %s96
      %s111 = sphi 0, %s97
      %s115 = sphi 0, %s115
      %s117 = sphi 0, %s115
      %s118 = sphi 0, %s117
      %s132 = sphi 0, %s118
      %s138 = sphi 0, %s140
      %s141 = sphi 0, %s138
      %s142 = sphi 0, %s141
      %s158 = sphi 0, %s142
      %s164 = sphi 0, %s166
      %s167 = sphi 0, %s164
      %s168 = sphi 0, %s167
      %s184 = sphi 0, %s168
    $region4: #{normcnn_forward.12} parent=1 // loop_header_branch
      %16 = sbr.rel (%p14) target = $region8
    $region5: #{normcnn_forward.12} parent=1 // loop_body
      %s18 = ssub.s32 %s13, 1
      %s19 = ssub.s32 %s13, 2
      %s20 = sadd.s32 %s13, 1
      %s21 = ssub.s32 %s13, %s20
      %p22 = scmp.eq.s32.totalorder %s21, 0
      %s24 = sadd.s32 %s23, 1
      %s25 = scalar_select %p22, %s23, %s24
      %p28 = pneg %p22
      %p29 = scmp.eq.s32.totalorder %s13, 1
      %p30 = por %p28, %p29
      %p31 = scmp.ne.s32.totalorder %s23, %s26
      %p32 = scmp.eq.s32.totalorder %s13, 0
      %p33 = por %p31, %p32
      %p34 = scmp.ne.s32.totalorder %s23, %s26
      %p35 = scmp.eq.s32.totalorder %s18, 1
      %p36 = por %p34, %p35
      %p37 = scmp.ne.s32.totalorder %s26, %s27
      %p38 = scmp.eq.s32.totalorder %s18, 0
      %p39 = por %p37, %p38
      %p40 = scmp.ne.s32.totalorder %s26, %s27
      %p41 = scmp.eq.s32.totalorder %s19, 1
      %p42 = por %p40, %p41
      %p44 = scmp.ne.s32.totalorder %s27, %s43
      %p45 = scmp.eq.s32.totalorder %s19, 0
      %p46 = por %p44, %p45
      %s47 = ssub.s32 %s13, %s20
      %p48 = scmp.eq.s32.totalorder %s47, 0
      %s50 = sadd.s32 %s49, 1
      %s51 = scalar_select %p48, %s49, %s50
      %p54 = pneg %p48
      %p55 = scmp.eq.s32.totalorder %s13, 1
      %p56 = por %p54, %p55
      %p57 = scmp.ne.s32.totalorder %s49, %s52
      %p58 = scmp.eq.s32.totalorder %s13, 0
      %p59 = por %p57, %p58
      %p60 = scmp.ne.s32.totalorder %s49, %s52
      %p61 = scmp.eq.s32.totalorder %s18, 1
      %p62 = por %p60, %p61
      %p63 = scmp.ne.s32.totalorder %s52, %s53
      %p64 = scmp.eq.s32.totalorder %s18, 0
      %p65 = por %p63, %p64
      %p66 = scmp.ne.s32.totalorder %s52, %s53
      %p67 = scmp.eq.s32.totalorder %s19, 1
      %p68 = por %p66, %p67
      %p70 = scmp.ne.s32.totalorder %s53, %s69
      %p71 = scmp.eq.s32.totalorder %s19, 0
      %p72 = por %p70, %p71
      %s74 = sadd.s32 %s73, 1
      %p77 = scmp.eq.s32.totalorder %s13, 1
      %p78 = scmp.ne.s32.totalorder %s73, %s75
      %p79 = scmp.eq.s32.totalorder %s13, 0
      %p80 = por %p78, %p79
      %p81 = scmp.ne.s32.totalorder %s73, %s75
      %p82 = scmp.eq.s32.totalorder %s18, 1
      %p83 = por %p81, %p82
      %p84 = scmp.ne.s32.totalorder %s75, %s76
      %p85 = scmp.eq.s32.totalorder %s18, 0
      %p86 = por %p84, %p85
      %p87 = scmp.ne.s32.totalorder %s75, %s76
      %p88 = scmp.eq.s32.totalorder %s19, 1
      %p89 = por %p87, %p88
      %p91 = scmp.ne.s32.totalorder %s76, %s90
      %p92 = scmp.eq.s32.totalorder %s19, 0
      %p93 = por %p91, %p92
      %s95 = sadd.s32 %s94, 1
      %p98 = scmp.eq.s32.totalorder %s13, 1
      %p99 = scmp.ne.s32.totalorder %s94, %s96
      %p100 = scmp.eq.s32.totalorder %s13, 0
      %p101 = por %p99, %p100
      %p102 = scmp.ne.s32.totalorder %s94, %s96
      %p103 = scmp.eq.s32.totalorder %s18, 1
      %p104 = por %p102, %p103
      %p105 = scmp.ne.s32.totalorder %s96, %s97
      %p106 = scmp.eq.s32.totalorder %s18, 0
      %p107 = por %p105, %p106
      %p108 = scmp.ne.s32.totalorder %s96, %s97
      %p109 = scmp.eq.s32.totalorder %s19, 1
      %p110 = por %p108, %p109
      %p112 = scmp.ne.s32.totalorder %s97, %s111
      %p113 = scmp.eq.s32.totalorder %s19, 0
      %p114 = por %p112, %p113
      %s116 = sadd.s32 %s115, 1
      %p119 = scmp.eq.s32.totalorder %s13, 1
      %p120 = scmp.ne.s32.totalorder %s115, %s117
      %p121 = scmp.eq.s32.totalorder %s13, 0
      %p122 = por %p120, %p121
      %p123 = scmp.ne.s32.totalorder %s115, %s117
      %p124 = scmp.eq.s32.totalorder %s18, 1
      %p125 = por %p123, %p124
      %p126 = scmp.ne.s32.totalorder %s117, %s118
      %p127 = scmp.eq.s32.totalorder %s18, 0
      %p128 = por %p126, %p127
      %p129 = scmp.ne.s32.totalorder %s117, %s118
      %p130 = scmp.eq.s32.totalorder %s19, 1
      %p131 = por %p129, %p130
      %p133 = scmp.ne.s32.totalorder %s118, %s132
      %p134 = scmp.eq.s32.totalorder %s19, 0
      %p135 = por %p133, %p134
      %s136 = ssub.s32 %s13, %s20
      %p137 = scmp.eq.s32.totalorder %s136, 0
      %s139 = sadd.s32 %s138, 1
      %s140 = scalar_select %p137, %s138, %s139
      %p143 = pneg %p137
      %p144 = scmp.eq.s32.totalorder %s13, 1
      %p145 = por %p143, %p144
      %p146 = scmp.ne.s32.totalorder %s138, %s141
      %p147 = scmp.eq.s32.totalorder %s13, 0
      %p148 = por %p146, %p147
      %p149 = scmp.ne.s32.totalorder %s138, %s141
      %p150 = scmp.eq.s32.totalorder %s18, 1
      %p151 = por %p149, %p150
      %p152 = scmp.ne.s32.totalorder %s141, %s142
      %p153 = scmp.eq.s32.totalorder %s18, 0
      %p154 = por %p152, %p153
      %p155 = scmp.ne.s32.totalorder %s141, %s142
      %p156 = scmp.eq.s32.totalorder %s19, 1
      %p157 = por %p155, %p156
      %p159 = scmp.ne.s32.totalorder %s142, %s158
      %p160 = scmp.eq.s32.totalorder %s19, 0
      %p161 = por %p159, %p160
      %s162 = ssub.s32 %s13, %s20
      %p163 = scmp.eq.s32.totalorder %s162, 0
      %s165 = sadd.s32 %s164, 1
      %s166 = scalar_select %p163, %s164, %s165
      %p169 = pneg %p163
      %p170 = scmp.eq.s32.totalorder %s13, 1
      %p171 = por %p169, %p170
      %p172 = scmp.ne.s32.totalorder %s164, %s167
      %p173 = scmp.eq.s32.totalorder %s13, 0
      %p174 = por %p172, %p173
      %p175 = scmp.ne.s32.totalorder %s164, %s167
      %p176 = scmp.eq.s32.totalorder %s18, 1
      %p177 = por %p175, %p176
      %p178 = scmp.ne.s32.totalorder %s167, %s168
      %p179 = scmp.eq.s32.totalorder %s18, 0
      %p180 = por %p178, %p179
      %p181 = scmp.ne.s32.totalorder %s167, %s168
      %p182 = scmp.eq.s32.totalorder %s19, 1
      %p183 = por %p181, %p182
      %p185 = scmp.ne.s32.totalorder %s168, %s184
      %p186 = scmp.eq.s32.totalorder %s19, 0
      %p187 = por %p185, %p186
      %p188 = scmp.le.s32.totalorder 1, %s13
      %p189 = scmp.lt.s32.totalorder %s13, 3
      %p190 = pnand %p188, %p189
      %p191 = pneg %p190
      // Predicated region
      $region9: #{normcnn_forward.12} parent=5 // pred_check
        _
      $region10: #{normcnn_forward.12} parent=5 // pred_check_branch
        %193 = sbr.rel (%p190) target = $region12
      $region11: #{normcnn_forward.12} parent=5 // pred_region
        %s194 = ssub.s32 %s13, 1
        // Predicated region
        $region13: #{normcnn_forward.12} parent=11 // pred_check
          %p195 = pneg %p86
        $region14: #{normcnn_forward.12} parent=11 // pred_check_branch
          %197 = sbr.rel (%p195) target = $region16
        $region15: #{normcnn_forward.12} parent=11 // pred_region
          _
        $region16: #{normcnn_forward.12} parent=11 // pred_fallthru
          _
        // Predicated region
        $region17: #{normcnn_forward.12} parent=11 // pred_check
          %p198 = pneg %p107
        $region18: #{normcnn_forward.12} parent=11 // pred_check_branch
          %200 = sbr.rel (%p198) target = $region20
        $region19: #{normcnn_forward.12} parent=11 // pred_region
          _
        $region20: #{normcnn_forward.12} parent=11 // pred_fallthru
          _
        // Predicated region
        $region21: #{normcnn_forward.12} parent=11 // pred_check
          %p201 = pneg %p128
        $region22: #{normcnn_forward.12} parent=11 // pred_check_branch
          %203 = sbr.rel (%p201) target = $region24
        $region23: #{normcnn_forward.12} parent=11 // pred_region
          _
        $region24: #{normcnn_forward.12} parent=11 // pred_fallthru
          _
      $region12: #{normcnn_forward.12} parent=5 // pred_fallthru
        _
      %p204 = scmp.lt.s32.totalorder %s13, 2
      // Predicated region
      $region25: #{normcnn_forward.12} parent=5 // pred_check
        %p205 = pneg %p204
      $region26: #{normcnn_forward.12} parent=5 // pred_check_branch
        %207 = sbr.rel (%p205) target = $region28
      $region27: #{normcnn_forward.12} parent=5 // pred_region
        // Predicated region
        $region29: #{normcnn_forward.12} parent=27 // pred_check
          %p208 = pneg %p33
        $region30: #{normcnn_forward.12} parent=27 // pred_check_branch
          %210 = sbr.rel (%p208) target = $region32
        $region31: #{normcnn_forward.12} parent=27 // pred_region
          %s211 = sand.u32 %s23, 1
          %s212 = sand.u32 %s23, 1
          %s213 = smul.addr %s212, 112
          %s214 = scalar_lea.vmem [#allocation2], %s213
          %s215 = smul.u32 2, %s13
          %s216 = smul.addr %s215, 8
          %s217 = scalar_lea.vmem %s0, %s216
          // Predicated region
          $region33: #{normcnn_forward.12} parent=31 // pred_check
            _
          $region34: #{normcnn_forward.12} parent=31 // pred_check_branch
            %219 = sbr.rel (0) target = $region36
          $region35: #{normcnn_forward.12} parent=31 // pred_region
            // Predicated region
            $region37: #{normcnn_forward.12} parent=35 // pred_check
              _
            $region38: #{normcnn_forward.12} parent=35 // pred_check_branch
              %221 = sbr.rel (0) target = $region40
            $region39: #{normcnn_forward.12} parent=35 // pred_region
              loop: start=0, step=1, limit=1
              $region41: #{normcnn_forward.12} parent=39 // loop_pre_header
                _
              $region42: #{normcnn_forward.12} parent=39 // loop_header
                %s223 = sphi 0, %s227
                %p224 = scmp.ge.s32.totalorder %s223, 1
                %s228 = sphi %s217, %s217
                %s229 = sphi %s214, %s214
              $region43: #{normcnn_forward.12} parent=39 // loop_header_branch
                %226 = sbr.rel (%p224) target = $region47
              $region44: #{normcnn_forward.12} parent=39 // loop_body
                %v230 = vld [vmem:[%s228] sm:$0xff]
                %231 = vst [vmem:[%s229] sm:$0xff] %v230
                %v232 = vld [vmem:[%s228 + $0x8] sm:$0xff]
                %233 = vst [vmem:[%s229 + $0x8] sm:$0xff] %v232
                %v234 = vld [vmem:[%s228 + $0x20] sm:$0xff]
                %235 = vst [vmem:[%s229 + $0x10] sm:$0xff] %v234
                %v236 = vld [vmem:[%s228 + $0x28] sm:$0xff]
                %237 = vst [vmem:[%s229 + $0x18] sm:$0xff] %v236
                %v238 = vld [vmem:[%s228 + $0x40] sm:$0xff]
                %239 = vst [vmem:[%s229 + $0x20] sm:$0xff] %v238
                %v240 = vld [vmem:[%s228 + $0x48] sm:$0xff]
                %241 = vst [vmem:[%s229 + $0x28] sm:$0xff] %v240
                %v242 = vld [vmem:[%s228 + $0x60] sm:$0xff]
                %243 = vst [vmem:[%s229 + $0x30] sm:$0xff] %v242
                %v244 = vld [vmem:[%s228 + $0x68] sm:$0xff]
                %245 = vst [vmem:[%s229 + $0x38] sm:$0xff] %v244
                %v246 = vld [vmem:[%s228 + $0x80] sm:$0xff]
                %247 = vst [vmem:[%s229 + $0x40] sm:$0xff] %v246
                %v248 = vld [vmem:[%s228 + $0x88] sm:$0xff]
                %249 = vst [vmem:[%s229 + $0x48] sm:$0xff] %v248
                %v250 = vld [vmem:[%s228 + $0xa0] sm:$0xff]
                %251 = vst [vmem:[%s229 + $0x50] sm:$0xff] %v250
                %v252 = vld [vmem:[%s228 + $0xa8] sm:$0xff]
                %253 = vst [vmem:[%s229 + $0x58] sm:$0xff] %v252
                %v254 = vld [vmem:[%s228 + $0xc0] sm:$0xff]
                %255 = vst [vmem:[%s229 + $0x60] sm:$0xff] %v254
                %v256 = vld [vmem:[%s228 + $0xc8] sm:$0xff]
                %257 = vst [vmem:[%s229 + $0x68] sm:$0xff] %v256
              $region45: #{normcnn_forward.12} parent=39 // loop_footer
                %s227 = sadd.s32 1, %s223
              $region46: #{normcnn_forward.12} parent=39 // loop_footer_branch
                %222 = sbr.rel target = $region42
              $region47: #{normcnn_forward.12} parent=39 // loop_exit
                _
            $region40: #{normcnn_forward.12} parent=35 // pred_fallthru
              _
            // Predicated region
            $region48: #{normcnn_forward.12} parent=35 // pred_check
              _
            $region49: #{normcnn_forward.12} parent=35 // pred_check_branch
              %259 = sbr.rel target = $region51
            $region50: #{normcnn_forward.12} parent=35 // pred_region
              _
            $region51: #{normcnn_forward.12} parent=35 // pred_fallthru
              _
          $region36: #{normcnn_forward.12} parent=31 // pred_fallthru
            _
          %260 = vnop
        $region32: #{normcnn_forward.12} parent=27 // pred_fallthru
          _
        // Predicated region
        $region52: #{normcnn_forward.12} parent=27 // pred_check
          %p261 = pneg %p59
        $region53: #{normcnn_forward.12} parent=27 // pred_check_branch
          %263 = sbr.rel (%p261) target = $region55
        $region54: #{normcnn_forward.12} parent=27 // pred_region
          %s264 = sand.u32 %s49, 1
          %s265 = sand.u32 %s49, 1
          %s266 = smul.addr %s265, 112
          %s267 = scalar_lea.vmem [#allocation3], %s266
          %s268 = smul.u32 2, %s13
          %s269 = smul.addr %s268, 8
          %s270 = scalar_lea.vmem %s1, %s269
          // Predicated region
          $region56: #{normcnn_forward.12} parent=54 // pred_check
            _
          $region57: #{normcnn_forward.12} parent=54 // pred_check_branch
            %272 = sbr.rel (0) target = $region59
          $region58: #{normcnn_forward.12} parent=54 // pred_region
            // Predicated region
            $region60: #{normcnn_forward.12} parent=58 // pred_check
              _
            $region61: #{normcnn_forward.12} parent=58 // pred_check_branch
              %274 = sbr.rel (0) target = $region63
            $region62: #{normcnn_forward.12} parent=58 // pred_region
              loop: start=0, step=1, limit=1
              $region64: #{normcnn_forward.12} parent=62 // loop_pre_header
                _
              $region65: #{normcnn_forward.12} parent=62 // loop_header
                %s276 = sphi 0, %s280
                %p277 = scmp.ge.s32.totalorder %s276, 1
                %s281 = sphi %s270, %s270
                %s282 = sphi %s267, %s267
              $region66: #{normcnn_forward.12} parent=62 // loop_header_branch
                %279 = sbr.rel (%p277) target = $region70
              $region67: #{normcnn_forward.12} parent=62 // loop_body
                %v283 = vld [vmem:[%s281] sm:$0xff]
                %284 = vst [vmem:[%s282] sm:$0xff] %v283
                %v285 = vld [vmem:[%s281 + $0x8] sm:$0xff]
                %286 = vst [vmem:[%s282 + $0x8] sm:$0xff] %v285
                %v287 = vld [vmem:[%s281 + $0x20] sm:$0xff]
                %288 = vst [vmem:[%s282 + $0x10] sm:$0xff] %v287
                %v289 = vld [vmem:[%s281 + $0x28] sm:$0xff]
                %290 = vst [vmem:[%s282 + $0x18] sm:$0xff] %v289
                %v291 = vld [vmem:[%s281 + $0x40] sm:$0xff]
                %292 = vst [vmem:[%s282 + $0x20] sm:$0xff] %v291
                %v293 = vld [vmem:[%s281 + $0x48] sm:$0xff]
                %294 = vst [vmem:[%s282 + $0x28] sm:$0xff] %v293
                %v295 = vld [vmem:[%s281 + $0x60] sm:$0xff]
                %296 = vst [vmem:[%s282 + $0x30] sm:$0xff] %v295
                %v297 = vld [vmem:[%s281 + $0x68] sm:$0xff]
                %298 = vst [vmem:[%s282 + $0x38] sm:$0xff] %v297
                %v299 = vld [vmem:[%s281 + $0x80] sm:$0xff]
                %300 = vst [vmem:[%s282 + $0x40] sm:$0xff] %v299
                %v301 = vld [vmem:[%s281 + $0x88] sm:$0xff]
                %302 = vst [vmem:[%s282 + $0x48] sm:$0xff] %v301
                %v303 = vld [vmem:[%s281 + $0xa0] sm:$0xff]
                %304 = vst [vmem:[%s282 + $0x50] sm:$0xff] %v303
                %v305 = vld [vmem:[%s281 + $0xa8] sm:$0xff]
                %306 = vst [vmem:[%s282 + $0x58] sm:$0xff] %v305
                %v307 = vld [vmem:[%s281 + $0xc0] sm:$0xff]
                %308 = vst [vmem:[%s282 + $0x60] sm:$0xff] %v307
                %v309 = vld [vmem:[%s281 + $0xc8] sm:$0xff]
                %310 = vst [vmem:[%s282 + $0x68] sm:$0xff] %v309
              $region68: #{normcnn_forward.12} parent=62 // loop_footer
                %s280 = sadd.s32 1, %s276
              $region69: #{normcnn_forward.12} parent=62 // loop_footer_branch
                %275 = sbr.rel target = $region65
              $region70: #{normcnn_forward.12} parent=62 // loop_exit
                _
            $region63: #{normcnn_forward.12} parent=58 // pred_fallthru
              _
            // Predicated region
            $region71: #{normcnn_forward.12} parent=58 // pred_check
              _
            $region72: #{normcnn_forward.12} parent=58 // pred_check_branch
              %312 = sbr.rel target = $region74
            $region73: #{normcnn_forward.12} parent=58 // pred_region
              _
            $region74: #{normcnn_forward.12} parent=58 // pred_fallthru
              _
          $region59: #{normcnn_forward.12} parent=54 // pred_fallthru
            _
          %313 = vnop
        $region55: #{normcnn_forward.12} parent=27 // pred_fallthru
          _
      $region28: #{normcnn_forward.12} parent=5 // pred_fallthru
        _
      %p314 = scmp.le.s32.totalorder 1, %s13
      %p315 = scmp.lt.s32.totalorder %s13, 3
      %p316 = pnand %p314, %p315
      %p317 = pneg %p316
      // Predicated region
      $region75: #{normcnn_forward.12} parent=5 // pred_check
        _
      $region76: #{normcnn_forward.12} parent=5 // pred_check_branch
        %319 = sbr.rel (%p316) target = $region78
      $region77: #{normcnn_forward.12} parent=5 // pred_region
        %s320 = ssub.s32 %s13, 1
        %s321 = sand.u32 %s26, 1
        %s322 = sand.u32 %s26, 1
        %s323 = smul.addr %s322, 112
        %s324 = scalar_lea.vmem [#allocation2], %s323
        // Predicated region
        $region79: #{normcnn_forward.12} parent=77 // pred_check
          %p325 = pneg %p39
        $region80: #{normcnn_forward.12} parent=77 // pred_check_branch
          %327 = sbr.rel (%p325) target = $region82
        $region81: #{normcnn_forward.12} parent=77 // pred_region
          _
        $region82: #{normcnn_forward.12} parent=77 // pred_fallthru
          _
        %s328 = sand.u32 %s52, 1
        %s329 = sand.u32 %s52, 1
        %s330 = smul.addr %s329, 112
        %s331 = scalar_lea.vmem [#allocation3], %s330
        // Predicated region
        $region83: #{normcnn_forward.12} parent=77 // pred_check
          %p332 = pneg %p65
        $region84: #{normcnn_forward.12} parent=77 // pred_check_branch
          %334 = sbr.rel (%p332) target = $region86
        $region85: #{normcnn_forward.12} parent=77 // pred_region
          _
        $region86: #{normcnn_forward.12} parent=77 // pred_fallthru
          _
        %s335 = sand.u32 %s26, 1
        %s336 = sand.u32 %s26, 1
        %s337 = smul.addr %s336, 112
        %s338 = scalar_lea.vmem [#allocation2], %s337
        %p339 = pneg %p39
        %p340 = pneg %p36
        %s341 = sand.u32 %s52, 1
        %s342 = sand.u32 %s52, 1
        %s343 = smul.addr %s342, 112
        %s344 = scalar_lea.vmem [#allocation3], %s343
        %p345 = pneg %p65
        %p346 = pneg %p62
        %p347 = pneg %p86
        %p348 = pneg %p83
        %p349 = pneg %p107
        %p350 = pneg %p104
        %p351 = pneg %p128
        %p352 = pneg %p125
        %p353 = pneg %p154
        %p354 = pneg %p151
        %s355 = smul.u32 2, %s18
        %p356 = scmp.lt.s32.totalorder %s355, 3
        %s357 = scalar_select %p356, %s355, 3
        %s358 = smul.addr %s357, 2
        %s359 = scalar_lea.vmem %s5, %s358
        %p360 = pneg %p180
        %p361 = pneg %p177
        %s362 = smul.u32 2, %s18
        %p363 = scmp.lt.s32.totalorder %s362, 3
        %s364 = scalar_select %p363, %s362, 3
        %s365 = smul.addr %s364, 2
        %s366 = scalar_lea.vmem %s6, %s365
        %s367 = smul.u32 2, %s18
        %s368 = smul.u32 2, %s18
        %s369 = smul.u32 2, %s18
        %p370 = scmp.lt.s32.totalorder %s369, 3
        %s371 = scalar_select %p370, %s369, 3
        %s372 = smul.addr %s371, 2
        %s373 = scalar_lea.vmem %s5, %s372
        %s374 = smul.u32 2, %s18
        %s375 = smul.u32 2, %s18
        %p376 = scmp.lt.s32.totalorder %s375, 3
        %s377 = scalar_select %p376, %s375, 3
        %s378 = smul.addr %s377, 2
        %s379 = scalar_lea.vmem %s6, %s378
        %s380 = smul.u32 2, %s18
        %v381 = vld [vmem:[%s2] sm:$0x3]
        %v382 = vld [vmem:[%s324] sm:$0xff]
        %v383 = vld [vmem:[%s324 + $0x8] sm:$0xff]
        %v384 = vld [vmem:[%s324 + $0x10] sm:$0xff]
        %v385 = vld [vmem:[%s324 + $0x18] sm:$0xff]
        %v386 = vld [vmem:[%s324 + $0x20] sm:$0xff]
        %v387 = vld [vmem:[%s324 + $0x28] sm:$0xff]
        %v388 = vld [vmem:[%s324 + $0x30] sm:$0xff]
        %v389 = vld [vmem:[%s324 + $0x38] sm:$0xff]
        %v390 = vld [vmem:[%s324 + $0x40] sm:$0xff]
        %v391 = vld [vmem:[%s324 + $0x48] sm:$0xff]
        %v392 = vld [vmem:[%s324 + $0x50] sm:$0xff]
        %v393 = vld [vmem:[%s324 + $0x58] sm:$0xff]
        %v394 = vld [vmem:[%s324 + $0x60] sm:$0x3]
        %v395 = vld [vmem:[%s324 + $0x68] sm:$0x3]
        %vm396 = vcmask 408576
        %v398 = vsel %vm396, %v381, 0
        %vm400 = vcmask 1041408
        %v402 = vsel %vm400, %v394, 0
        %v405 = vsel %vm400, %v395, 0
        %407 = vmatprep.subr.mxu0 0.0
        %408 = vmatpush1.msra.mxu0 0.0
        %409 = vmatprep.subr.mxu0 0.0
        %410 = vmatpush1.msra.mxu0 0.0
        %411 = vmatprep.subr.mxu0 0.0
        %412 = vmatpush1.msra.mxu0 0.0
        %413 = vmatprep.subr.mxu0 0.0
        %414 = vmatpush1.msra.mxu0 0.0
        %415 = vmatprep.subr.mxu0 0.0
        %416 = vmatpush1.msra.mxu0 0.0
        %417 = vmatprep.subr.mxu0 0.0
        %418 = vmatpush1.msra.mxu0 0.0
        %419 = vmatprep.subr.mxu0 0.0
        %420 = vmatpush1.msra.mxu0 0.0
        %421 = vmatprep.subr.mxu0 0.0
        %422 = vmatpush1.msra.mxu0 0.0
        %423 = vmatprep.subr.mxu0 0.0
        %424 = vmatpush1.msra.mxu0 0.0
        %425 = vmatprep.subr.mxu0 %v405
        %426 = vmatpush1.msra.mxu0 %v402
        %427 = vmatprep.subr.mxu0 %v393
        %428 = vmatpush1.msra.mxu0 %v392
        %429 = vmatprep.subr.mxu0 %v391
        %430 = vmatpush1.msra.mxu0 %v390
        %431 = vmatprep.subr.mxu0 %v389
        %432 = vmatpush1.msra.mxu0 %v388
        %433 = vmatprep.subr.mxu0 %v387
        %434 = vmatpush1.msra.mxu0 %v386
        %435 = vmatprep.subr.mxu0 %v385
        %436 = vmatpush1.msra.mxu0 %v384
        %437 = vmatprep.subr.mxu0 %v383
        %438 = vmatpush1.msra.mxu0 %v382
        %439 = vmatprep.subr.mxu0 0.0
        %440 = vmatpush2.msra.mxu0 0.0
        %441 = vmatprep.subr.mxu0 0.0
        %442 = vmatpush2.msra.mxu0 0.0
        %443 = vmatprep.subr.mxu0 0.0
        %444 = vmatpush2.msra.mxu0 0.0
        %445 = vmatprep.subr.mxu0 0.0
        %446 = vmatpush2.msra.mxu0 0.0
        %447 = vmatprep.subr.mxu0 0.0
        %448 = vmatpush2.msra.mxu0 0.0
        %449 = vmatprep.subr.mxu0 0.0
        %450 = vmatpush2.msra.mxu0 0.0
        %451 = vmatprep.subr.mxu0 0.0
        %452 = vmatpush2.msra.mxu0 0.0
        %453 = vmatprep.subr.mxu0 0.0
        %454 = vmatpush2.msra.mxu0 0.0
        %455 = vmatprep.subr.mxu0 0.0
        %456 = vmatpush2.msra.mxu0 0.0
        %457 = vmatprep.subr.mxu0 0.0
        %458 = vmatpush2.msra.mxu0 0.0
        %459 = vmatprep.subr.mxu0 0.0
        %460 = vmatpush2.msra.mxu0 0.0
        %461 = vmatprep.subr.mxu0 0.0
        %462 = vmatpush2.msra.mxu0 0.0
        %463 = vmatprep.subr.mxu0 0.0
        %464 = vmatpush2.msra.mxu0 0.0
        %465 = vmatprep.subr.mxu0 0.0
        %466 = vmatpush2.msra.mxu0 0.0
        %467 = vmatprep.subr.mxu0 0.0
        %468 = vmatpush2.msra.mxu0 0.0
        %469 = vmatprep.subr.mxu0 0.0
        %470 = vmatpush2.msra.mxu0 0.0
        %471 = vmatprep.mubr.f32.mxu0 0.0
        %472 = vmatmul.mubr.f32.gmra.mxu0 %v398
        %v473 = vpop.f32.mrf.mxu0
        %v474 = vadd.f32 0.0, %v473
        %v475 = vpop.f32.mrf.mxu0
        %v476 = vadd.f32 0.0, %v475
        %477 = vdwg.mxu0
        %v478 = vld [vmem:[%s331] sm:$0xff]
        %v479 = vld [vmem:[%s331 + $0x8] sm:$0xff]
        %v480 = vld [vmem:[%s331 + $0x10] sm:$0xff]
        %v481 = vld [vmem:[%s331 + $0x18] sm:$0xff]
        %v482 = vld [vmem:[%s331 + $0x20] sm:$0xff]
        %v483 = vld [vmem:[%s331 + $0x28] sm:$0xff]
        %v484 = vld [vmem:[%s331 + $0x30] sm:$0xff]
        %v485 = vld [vmem:[%s331 + $0x38] sm:$0xff]
        %v486 = vld [vmem:[%s331 + $0x40] sm:$0xff]
        %v487 = vld [vmem:[%s331 + $0x48] sm:$0xff]
        %v488 = vld [vmem:[%s331 + $0x50] sm:$0xff]
        %v489 = vld [vmem:[%s331 + $0x58] sm:$0xff]
        %v490 = vld [vmem:[%s331 + $0x60] sm:$0x3]
        %v491 = vld [vmem:[%s331 + $0x68] sm:$0x3]
        %v493 = vsel %vm400, %v490, 0
        %v496 = vsel %vm400, %v491, 0
        %498 = vmatprep.subr.mxu0 0.0
        %499 = vmatpush1.msra.mxu0 0.0
        %500 = vmatprep.subr.mxu0 0.0
        %501 = vmatpush1.msra.mxu0 0.0
        %502 = vmatprep.subr.mxu0 0.0
        %503 = vmatpush1.msra.mxu0 0.0
        %504 = vmatprep.subr.mxu0 0.0
        %505 = vmatpush1.msra.mxu0 0.0
        %506 = vmatprep.subr.mxu0 0.0
        %507 = vmatpush1.msra.mxu0 0.0
        %508 = vmatprep.subr.mxu0 0.0
        %509 = vmatpush1.msra.mxu0 0.0
        %510 = vmatprep.subr.mxu0 0.0
        %511 = vmatpush1.msra.mxu0 0.0
        %512 = vmatprep.subr.mxu0 0.0
        %513 = vmatpush1.msra.mxu0 0.0
        %514 = vmatprep.subr.mxu0 0.0
        %515 = vmatpush1.msra.mxu0 0.0
        %516 = vmatprep.subr.mxu0 %v496
        %517 = vmatpush1.msra.mxu0 %v493
        %518 = vmatprep.subr.mxu0 %v489
        %519 = vmatpush1.msra.mxu0 %v488
        %520 = vmatprep.subr.mxu0 %v487
        %521 = vmatpush1.msra.mxu0 %v486
        %522 = vmatprep.subr.mxu0 %v485
        %523 = vmatpush1.msra.mxu0 %v484
        %524 = vmatprep.subr.mxu0 %v483
        %525 = vmatpush1.msra.mxu0 %v482
        %526 = vmatprep.subr.mxu0 %v481
        %527 = vmatpush1.msra.mxu0 %v480
        %528 = vmatprep.subr.mxu0 %v479
        %529 = vmatpush1.msra.mxu0 %v478
        %530 = vmatprep.subr.mxu0 0.0
        %531 = vmatpush2.msra.mxu0 0.0
        %532 = vmatprep.subr.mxu0 0.0
        %533 = vmatpush2.msra.mxu0 0.0
        %534 = vmatprep.subr.mxu0 0.0
        %535 = vmatpush2.msra.mxu0 0.0
        %536 = vmatprep.subr.mxu0 0.0
        %537 = vmatpush2.msra.mxu0 0.0
        %538 = vmatprep.subr.mxu0 0.0
        %539 = vmatpush2.msra.mxu0 0.0
        %540 = vmatprep.subr.mxu0 0.0
        %541 = vmatpush2.msra.mxu0 0.0
        %542 = vmatprep.subr.mxu0 0.0
        %543 = vmatpush2.msra.mxu0 0.0
        %544 = vmatprep.subr.mxu0 0.0
        %545 = vmatpush2.msra.mxu0 0.0
        %546 = vmatprep.subr.mxu0 0.0
        %547 = vmatpush2.msra.mxu0 0.0
        %548 = vmatprep.subr.mxu0 0.0
        %549 = vmatpush2.msra.mxu0 0.0
        %550 = vmatprep.subr.mxu0 0.0
        %551 = vmatpush2.msra.mxu0 0.0
        %552 = vmatprep.subr.mxu0 0.0
        %553 = vmatpush2.msra.mxu0 0.0
        %554 = vmatprep.subr.mxu0 0.0
        %555 = vmatpush2.msra.mxu0 0.0
        %556 = vmatprep.subr.mxu0 0.0
        %557 = vmatpush2.msra.mxu0 0.0
        %558 = vmatprep.subr.mxu0 0.0
        %559 = vmatpush2.msra.mxu0 0.0
        %560 = vmatprep.subr.mxu0 0.0
        %561 = vmatpush2.msra.mxu0 0.0
        %562 = vmatprep.mubr.f32.mxu0 0.0
        %563 = vmatmul.mubr.f32.gmra.mxu0 %v398
        %v564 = vpop.f32.mrf.mxu0
        %v565 = vadd.f32 0.0, %v564
        %v566 = vpop.f32.mrf.mxu0
        %v567 = vadd.f32 0.0, %v566
        %568 = vdwg.mxu0
        %v569 = vadd.f32 %v565, 1e-20
        %v570 = vadd.f32 %v567, 1e-20
        %v571 = vrcp.pop %v569
        %v572 = vmul.f32 %v474, %v571
        %v573 = vrcp.pop %v570
        %v574 = vmul.f32 %v476, %v573
        %v575 = vld [vmem:[%s3] sm:$0x3]
        %577 = vset.pattern.permute.xlu0 0
        %578 = vperm.xlu0 %577, %v575
        %v579 = vpop.permute.xlu0 %578
        %v581 = vadd.f32 %v572, %v579
        %v582 = vadd.f32 %v574, %v579
        %v585 = vcombine.low %v581, %v582
        %v587 = vunpack.c.l.s4 1983009808
        %v588 = vunpack.c.0.s8 %v587
        %v589 = vlaneseq
        %v590 = vshrl.u32 %v589, 7
        %v591 = vsub.s32 %v588, %v590
        %v592 = vrot.slane %v585, %v591
        %594 = vst [vmem:[%s373] sm:$0xf] %v592
        %v595 = vld [vmem:[%s4] sm:$0x3]
        %597 = vset.pattern.permute.xlu0 0
        %598 = vperm.xlu0 %597, %v595
        %v599 = vpop.permute.xlu0 %598
        %v601 = vmul.f32 %v565, %v599
        %v602 = vmul.f32 %v567, %v599
        %v605 = vcombine.low %v601, %v602
        %v607 = vunpack.c.l.s4 1983009808
        %v608 = vunpack.c.0.s8 %v607
        %v609 = vlaneseq
        %v610 = vshrl.u32 %v609, 7
        %v611 = vsub.s32 %v608, %v610
        %v612 = vrot.slane %v605, %v611
        %614 = vst [vmem:[%s379] sm:$0xf] %v612
        %s615 = smul.u32 2, %s18
        %p616 = scmp.lt.s32.totalorder %s615, 3
        %s617 = scalar_select %p616, %s615, 3
        %s618 = smul.addr %s617, 2
        %s619 = scalar_lea.vmem %s5, %s618
        %s620 = smul.u32 2, %s18
        %p621 = scmp.lt.s32.totalorder %s620, 3
        %s622 = scalar_select %p621, %s620, 3
        %s623 = smul.addr %s622, 2
        %s624 = scalar_lea.vmem %s6, %s623
        // Predicated region
        $region87: #{normcnn_forward.12} parent=77 // pred_check
          %p625 = pneg %p151
        $region88: #{normcnn_forward.12} parent=77 // pred_check_branch
          %627 = sbr.rel (%p625) target = $region90
        $region89: #{normcnn_forward.12} parent=77 // pred_region
          %s628 = smul.u32 2, %s18
        $region90: #{normcnn_forward.12} parent=77 // pred_fallthru
          _
        // Predicated region
        $region91: #{normcnn_forward.12} parent=77 // pred_check
          %p629 = pneg %p177
        $region92: #{normcnn_forward.12} parent=77 // pred_check_branch
          %631 = sbr.rel (%p629) target = $region94
        $region93: #{normcnn_forward.12} parent=77 // pred_region
          %s632 = smul.u32 2, %s18
        $region94: #{normcnn_forward.12} parent=77 // pred_fallthru
          _
      $region78: #{normcnn_forward.12} parent=5 // pred_fallthru
        _
      %p633 = scmp.le.s32.totalorder 2, %s13
      // Predicated region
      $region95: #{normcnn_forward.12} parent=5 // pred_check
        %p634 = pneg %p633
      $region96: #{normcnn_forward.12} parent=5 // pred_check_branch
        %636 = sbr.rel (%p634) target = $region98
      $region97: #{normcnn_forward.12} parent=5 // pred_region
        %s637 = ssub.s32 %s13, 2
        // Predicated region
        $region99: #{normcnn_forward.12} parent=97 // pred_check
          %p638 = pneg %p157
        $region100: #{normcnn_forward.12} parent=97 // pred_check_branch
          %640 = sbr.rel (%p638) target = $region102
        $region101: #{normcnn_forward.12} parent=97 // pred_region
          %s641 = smul.u32 2, %s19
          %p642 = scmp.lt.s32.totalorder %s641, 3
          %s643 = scalar_select %p642, %s641, 3
          %s644 = smul.addr %s643, 2
          %s645 = scalar_lea.vmem %s5, %s644
        $region102: #{normcnn_forward.12} parent=97 // pred_fallthru
          _
        // Predicated region
        $region103: #{normcnn_forward.12} parent=97 // pred_check
          %p646 = pneg %p183
        $region104: #{normcnn_forward.12} parent=97 // pred_check_branch
          %648 = sbr.rel (%p646) target = $region106
        $region105: #{normcnn_forward.12} parent=97 // pred_region
          %s649 = smul.u32 2, %s19
          %p650 = scmp.lt.s32.totalorder %s649, 3
          %s651 = scalar_select %p650, %s649, 3
          %s652 = smul.addr %s651, 2
          %s653 = scalar_lea.vmem %s6, %s652
        $region106: #{normcnn_forward.12} parent=97 // pred_fallthru
          _
      $region98: #{normcnn_forward.12} parent=5 // pred_fallthru
        _
    $region6: #{normcnn_forward.12} parent=1 // loop_footer
      %s17 = sadd.s32 1, %s13
    $region7: #{normcnn_forward.12} parent=1 // loop_footer_branch
      %12 = sbr.rel target = $region3
    $region8: #{normcnn_forward.12} parent=1 // loop_exit
      _

// kernel: normcnn_forward.14
$region0: #{normcnn_forward.14}
  #allocation0 [shape = 'u32[]', space=smem, size = 0x4, offset = 0x4, fixed_abs, tag = 'smem constant byte address 0x4 - core index']
  #allocation1 [shape = 'u32[144,128]{1,0:T(1,128)}', space=vmem, size = 0x12000, scoped, tag = 'internal scratch']
  %s0 = inlined_call_operand.vmem [shape: f32[50,128], index: 0, kind: input, shape index: {}]
  %s1 = inlined_call_operand.vmem [shape: f32[50,128], index: 1, kind: input, shape index: {}]
  %s2 = inlined_call_operand.vmem [shape: f32[2,50], index: 2, kind: input, shape index: {}]
  %s3 = inlined_call_operand.vmem [shape: f32[2,1], index: 3, kind: input, shape index: {}]
  %s4 = inlined_call_operand.vmem [shape: f32[2,1], index: 4, kind: input, shape index: {}]
  %s5 = inlined_call_operand.vmem [shape: f32[2,128], index: 5, kind: output, shape index: {0}]
  %s6 = inlined_call_operand.vmem [shape: f32[2,128], index: 6, kind: output, shape index: {1}]
  %7 = xla_tuple %s5, %s6
  %s8 = sld [smem:[#allocation0]]
  $region38: #{normcnn_forward.14} parent=0
    _
  %s10 = ssub.s32 1, %s8
  %s11 = scalar_select 0, %s10, %s8
  // Predicated region
  $region2: #{normcnn_forward.14} parent=0 // pred_check
    _
  $region3: #{normcnn_forward.14} parent=0 // pred_check_branch
    %13 = sbr.rel (0) target = $region5
  $region4: #{normcnn_forward.14} parent=0 // pred_region
    _
  $region5: #{normcnn_forward.14} parent=0 // pred_fallthru
    _
  // Predicated region
  $region6: #{normcnn_forward.14} parent=0 // pred_check
    _
  $region7: #{normcnn_forward.14} parent=0 // pred_check_branch
    %15 = sbr.rel (0) target = $region9
  $region8: #{normcnn_forward.14} parent=0 // pred_region
    _
  $region9: #{normcnn_forward.14} parent=0 // pred_fallthru
    _
  // Predicated region
  $region10: #{normcnn_forward.14} parent=0 // pred_check
    _
  $region11: #{normcnn_forward.14} parent=0 // pred_check_branch
    %17 = sbr.rel (0) target = $region13
  $region12: #{normcnn_forward.14} parent=0 // pred_region
    _
  $region13: #{normcnn_forward.14} parent=0 // pred_fallthru
    _
  // Predicated region
  $region14: #{normcnn_forward.14} parent=0 // pred_check
    _
  $region15: #{normcnn_forward.14} parent=0 // pred_check_branch
    %19 = sbr.rel (0) target = $region17
  $region16: #{normcnn_forward.14} parent=0 // pred_region
    _
  $region17: #{normcnn_forward.14} parent=0 // pred_fallthru
    _
  // Predicated region
  $region18: #{normcnn_forward.14} parent=0 // pred_check
    _
  $region19: #{normcnn_forward.14} parent=0 // pred_check_branch
    %21 = sbr.rel (0) target = $region21
  $region20: #{normcnn_forward.14} parent=0 // pred_region
    _
  $region21: #{normcnn_forward.14} parent=0 // pred_fallthru
    _
  %v22 = vld [vmem:[%s2] sm:$0x3]
  %v23 = vld [vmem:[%s0] sm:$0xff]
  %v24 = vld [vmem:[%s0 + $0x8] sm:$0xff]
  %v25 = vld [vmem:[%s0 + $0x10] sm:$0xff]
  %v26 = vld [vmem:[%s0 + $0x18] sm:$0xff]
  %v27 = vld [vmem:[%s0 + $0x20] sm:$0xff]
  %v28 = vld [vmem:[%s0 + $0x28] sm:$0xff]
  %v29 = vld [vmem:[%s0 + $0x30] sm:$0x3]
  %vm30 = vcmask 408576
  %v32 = vsel %vm30, %v22, 0
  %vm34 = vcmask 1041408
  %v36 = vsel %vm34, %v29, 0
  %38 = vmatprep.subr.mxu0 0.0
  %39 = vmatpush1.msra.mxu0 0.0
  %40 = vmatprep.subr.mxu0 0.0
  %41 = vmatpush1.msra.mxu0 0.0
  %42 = vmatprep.subr.mxu0 0.0
  %43 = vmatpush1.msra.mxu0 0.0
  %44 = vmatprep.subr.mxu0 0.0
  %45 = vmatpush1.msra.mxu0 0.0
  %46 = vmatprep.subr.mxu0 0.0
  %47 = vmatpush1.msra.mxu0 0.0
  %48 = vmatprep.subr.mxu0 0.0
  %49 = vmatpush1.msra.mxu0 0.0
  %50 = vmatprep.subr.mxu0 0.0
  %51 = vmatpush1.msra.mxu0 0.0
  %52 = vmatprep.subr.mxu0 0.0
  %53 = vmatpush1.msra.mxu0 0.0
  %54 = vmatprep.subr.mxu0 0.0
  %55 = vmatpush1.msra.mxu0 0.0
  %56 = vmatprep.subr.mxu0 0.0
  %57 = vmatpush1.msra.mxu0 %v36
  %58 = vmatprep.subr.mxu0 0.0
  %59 = vmatpush1.msra.mxu0 %v28
  %60 = vmatprep.subr.mxu0 0.0
  %61 = vmatpush1.msra.mxu0 %v27
  %62 = vmatprep.subr.mxu0 0.0
  %63 = vmatpush1.msra.mxu0 %v26
  %64 = vmatprep.subr.mxu0 0.0
  %65 = vmatpush1.msra.mxu0 %v25
  %66 = vmatprep.subr.mxu0 0.0
  %67 = vmatpush1.msra.mxu0 %v24
  %68 = vmatprep.subr.mxu0 0.0
  %69 = vmatpush1.msra.mxu0 %v23
  %70 = vmatprep.subr.mxu0 0.0
  %71 = vmatpush2.msra.mxu0 0.0
  %72 = vmatprep.subr.mxu0 0.0
  %73 = vmatpush2.msra.mxu0 0.0
  %74 = vmatprep.subr.mxu0 0.0
  %75 = vmatpush2.msra.mxu0 0.0
  %76 = vmatprep.subr.mxu0 0.0
  %77 = vmatpush2.msra.mxu0 0.0
  %78 = vmatprep.subr.mxu0 0.0
  %79 = vmatpush2.msra.mxu0 0.0
  %80 = vmatprep.subr.mxu0 0.0
  %81 = vmatpush2.msra.mxu0 0.0
  %82 = vmatprep.subr.mxu0 0.0
  %83 = vmatpush2.msra.mxu0 0.0
  %84 = vmatprep.subr.mxu0 0.0
  %85 = vmatpush2.msra.mxu0 0.0
  %86 = vmatprep.subr.mxu0 0.0
  %87 = vmatpush2.msra.mxu0 0.0
  %88 = vmatprep.subr.mxu0 0.0
  %89 = vmatpush2.msra.mxu0 0.0
  %90 = vmatprep.subr.mxu0 0.0
  %91 = vmatpush2.msra.mxu0 0.0
  %92 = vmatprep.subr.mxu0 0.0
  %93 = vmatpush2.msra.mxu0 0.0
  %94 = vmatprep.subr.mxu0 0.0
  %95 = vmatpush2.msra.mxu0 0.0
  %96 = vmatprep.subr.mxu0 0.0
  %97 = vmatpush2.msra.mxu0 0.0
  %98 = vmatprep.subr.mxu0 0.0
  %99 = vmatpush2.msra.mxu0 0.0
  %100 = vmatprep.subr.mxu0 0.0
  %101 = vmatpush2.msra.mxu0 0.0
  %102 = vmatprep.mubr.f32.mxu0 0.0
  %103 = vmatmul.mubr.f32.gmra.mxu0 %v32
  %v104 = vpop.f32.mrf.mxu0
  %v105 = vadd.f32 0.0, %v104
  %v106 = vpop.f32.mrf.mxu0
  %107 = vdwg.mxu0
  %v108 = vld [vmem:[%s1] sm:$0xff]
  %v109 = vld [vmem:[%s1 + $0x8] sm:$0xff]
  %v110 = vld [vmem:[%s1 + $0x10] sm:$0xff]
  %v111 = vld [vmem:[%s1 + $0x18] sm:$0xff]
  %v112 = vld [vmem:[%s1 + $0x20] sm:$0xff]
  %v113 = vld [vmem:[%s1 + $0x28] sm:$0xff]
  %v114 = vld [vmem:[%s1 + $0x30] sm:$0x3]
  %v116 = vsel %vm34, %v114, 0
  %118 = vmatprep.subr.mxu0 0.0
  %119 = vmatpush1.msra.mxu0 0.0
  %120 = vmatprep.subr.mxu0 0.0
  %121 = vmatpush1.msra.mxu0 0.0
  %122 = vmatprep.subr.mxu0 0.0
  %123 = vmatpush1.msra.mxu0 0.0
  %124 = vmatprep.subr.mxu0 0.0
  %125 = vmatpush1.msra.mxu0 0.0
  %126 = vmatprep.subr.mxu0 0.0
  %127 = vmatpush1.msra.mxu0 0.0
  %128 = vmatprep.subr.mxu0 0.0
  %129 = vmatpush1.msra.mxu0 0.0
  %130 = vmatprep.subr.mxu0 0.0
  %131 = vmatpush1.msra.mxu0 0.0
  %132 = vmatprep.subr.mxu0 0.0
  %133 = vmatpush1.msra.mxu0 0.0
  %134 = vmatprep.subr.mxu0 0.0
  %135 = vmatpush1.msra.mxu0 0.0
  %136 = vmatprep.subr.mxu0 0.0
  %137 = vmatpush1.msra.mxu0 %v116
  %138 = vmatprep.subr.mxu0 0.0
  %139 = vmatpush1.msra.mxu0 %v113
  %140 = vmatprep.subr.mxu0 0.0
  %141 = vmatpush1.msra.mxu0 %v112
  %142 = vmatprep.subr.mxu0 0.0
  %143 = vmatpush1.msra.mxu0 %v111
  %144 = vmatprep.subr.mxu0 0.0
  %145 = vmatpush1.msra.mxu0 %v110
  %146 = vmatprep.subr.mxu0 0.0
  %147 = vmatpush1.msra.mxu0 %v109
  %148 = vmatprep.subr.mxu0 0.0
  %149 = vmatpush1.msra.mxu0 %v108
  %150 = vmatprep.subr.mxu0 0.0
  %151 = vmatpush2.msra.mxu0 0.0
  %152 = vmatprep.subr.mxu0 0.0
  %153 = vmatpush2.msra.mxu0 0.0
  %154 = vmatprep.subr.mxu0 0.0
  %155 = vmatpush2.msra.mxu0 0.0
  %156 = vmatprep.subr.mxu0 0.0
  %157 = vmatpush2.msra.mxu0 0.0
  %158 = vmatprep.subr.mxu0 0.0
  %159 = vmatpush2.msra.mxu0 0.0
  %160 = vmatprep.subr.mxu0 0.0
  %161 = vmatpush2.msra.mxu0 0.0
  %162 = vmatprep.subr.mxu0 0.0
  %163 = vmatpush2.msra.mxu0 0.0
  %164 = vmatprep.subr.mxu0 0.0
  %165 = vmatpush2.msra.mxu0 0.0
  %166 = vmatprep.subr.mxu0 0.0
  %167 = vmatpush2.msra.mxu0 0.0
  %168 = vmatprep.subr.mxu0 0.0
  %169 = vmatpush2.msra.mxu0 0.0
  %170 = vmatprep.subr.mxu0 0.0
  %171 = vmatpush2.msra.mxu0 0.0
  %172 = vmatprep.subr.mxu0 0.0
  %173 = vmatpush2.msra.mxu0 0.0
  %174 = vmatprep.subr.mxu0 0.0
  %175 = vmatpush2.msra.mxu0 0.0
  %176 = vmatprep.subr.mxu0 0.0
  %177 = vmatpush2.msra.mxu0 0.0
  %178 = vmatprep.subr.mxu0 0.0
  %179 = vmatpush2.msra.mxu0 0.0
  %180 = vmatprep.subr.mxu0 0.0
  %181 = vmatpush2.msra.mxu0 0.0
  %182 = vmatprep.mubr.f32.mxu0 0.0
  %183 = vmatmul.mubr.f32.gmra.mxu0 %v32
  %v184 = vpop.f32.mrf.mxu0
  %v185 = vadd.f32 0.0, %v184
  %v186 = vpop.f32.mrf.mxu0
  %187 = vdwg.mxu0
  %v188 = vadd.f32 %v185, 1e-20
  %v189 = vrcp.pop %v188
  %v190 = vmul.f32 %v105, %v189
  %v191 = vld [vmem:[%s3] sm:$0x3]
  %193 = vset.pattern.permute.xlu0 0
  %194 = vperm.xlu0 %193, %v191
  %v195 = vpop.permute.xlu0 %194
  %v197 = vadd.f32 %v190, %v195
  %198 = vst [vmem:[%s5] sm:$0x3] %v197
  %v199 = vld [vmem:[%s4] sm:$0x3]
  %201 = vset.pattern.permute.xlu0 0
  %202 = vperm.xlu0 %201, %v199
  %v203 = vpop.permute.xlu0 %202
  %v205 = vmul.f32 %v185, %v203
  %206 = vst [vmem:[%s6] sm:$0x3] %v205
  // Predicated region
  $region22: #{normcnn_forward.14} parent=0 // pred_check
    _
  $region23: #{normcnn_forward.14} parent=0 // pred_check_branch
    %208 = sbr.rel (0) target = $region25
  $region24: #{normcnn_forward.14} parent=0 // pred_region
    _
  $region25: #{normcnn_forward.14} parent=0 // pred_fallthru
    _
  // Predicated region
  $region26: #{normcnn_forward.14} parent=0 // pred_check
    _
  $region27: #{normcnn_forward.14} parent=0 // pred_check_branch
    %210 = sbr.rel (0) target = $region29
  $region28: #{normcnn_forward.14} parent=0 // pred_region
    _
  $region29: #{normcnn_forward.14} parent=0 // pred_fallthru
    _
  // Predicated region
  $region30: #{normcnn_forward.14} parent=0 // pred_check
    _
  $region31: #{normcnn_forward.14} parent=0 // pred_check_branch
    %212 = sbr.rel (0) target = $region33
  $region32: #{normcnn_forward.14} parent=0 // pred_region
    _
  $region33: #{normcnn_forward.14} parent=0 // pred_fallthru
    _
  // Predicated region
  $region34: #{normcnn_forward.14} parent=0 // pred_check
    _
  $region35: #{normcnn_forward.14} parent=0 // pred_check_branch
    %214 = sbr.rel (0) target = $region37
  $region36: #{normcnn_forward.14} parent=0 // pred_region
    _
  $region37: #{normcnn_forward.14} parent=0 // pred_fallthru
    _

// kernel: normcnn_forward.16
$region0: #{normcnn_forward.16}
  #allocation0 [shape = 'u32[]', space=smem, size = 0x4, offset = 0x4, fixed_abs, tag = 'smem constant byte address 0x4 - core index']
  #allocation1 [shape = 'u32[144,128]{1,0:T(1,128)}', space=vmem, size = 0x12000, scoped, tag = 'internal scratch']
  %s0 = inlined_call_operand.vmem [shape: f32[50,32], index: 0, kind: input, shape index: {}]
  %s1 = inlined_call_operand.vmem [shape: f32[50,32], index: 1, kind: input, shape index: {}]
  %s2 = inlined_call_operand.vmem [shape: f32[2,50], index: 2, kind: input, shape index: {}]
  %s3 = inlined_call_operand.vmem [shape: f32[2,1], index: 3, kind: input, shape index: {}]
  %s4 = inlined_call_operand.vmem [shape: f32[2,1], index: 4, kind: input, shape index: {}]
  %s5 = inlined_call_operand.vmem [shape: f32[2,32], index: 5, kind: output, shape index: {0}]
  %s6 = inlined_call_operand.vmem [shape: f32[2,32], index: 6, kind: output, shape index: {1}]
  %7 = xla_tuple %s5, %s6
  %s8 = sld [smem:[#allocation0]]
  $region38: #{normcnn_forward.16} parent=0
    _
  %s10 = ssub.s32 1, %s8
  %s11 = scalar_select 0, %s10, %s8
  // Predicated region
  $region2: #{normcnn_forward.16} parent=0 // pred_check
    _
  $region3: #{normcnn_forward.16} parent=0 // pred_check_branch
    %13 = sbr.rel (0) target = $region5
  $region4: #{normcnn_forward.16} parent=0 // pred_region
    _
  $region5: #{normcnn_forward.16} parent=0 // pred_fallthru
    _
  // Predicated region
  $region6: #{normcnn_forward.16} parent=0 // pred_check
    _
  $region7: #{normcnn_forward.16} parent=0 // pred_check_branch
    %15 = sbr.rel (0) target = $region9
  $region8: #{normcnn_forward.16} parent=0 // pred_region
    _
  $region9: #{normcnn_forward.16} parent=0 // pred_fallthru
    _
  // Predicated region
  $region10: #{normcnn_forward.16} parent=0 // pred_check
    _
  $region11: #{normcnn_forward.16} parent=0 // pred_check_branch
    %17 = sbr.rel (0) target = $region13
  $region12: #{normcnn_forward.16} parent=0 // pred_region
    _
  $region13: #{normcnn_forward.16} parent=0 // pred_fallthru
    _
  // Predicated region
  $region14: #{normcnn_forward.16} parent=0 // pred_check
    _
  $region15: #{normcnn_forward.16} parent=0 // pred_check_branch
    %19 = sbr.rel (0) target = $region17
  $region16: #{normcnn_forward.16} parent=0 // pred_region
    _
  $region17: #{normcnn_forward.16} parent=0 // pred_fallthru
    _
  // Predicated region
  $region18: #{normcnn_forward.16} parent=0 // pred_check
    _
  $region19: #{normcnn_forward.16} parent=0 // pred_check_branch
    %21 = sbr.rel (0) target = $region21
  $region20: #{normcnn_forward.16} parent=0 // pred_region
    _
  $region21: #{normcnn_forward.16} parent=0 // pred_fallthru
    _
  %v22 = vld [vmem:[%s2] sm:$0x3]
  %v23 = vld [vmem:[%s0] sm:$0xff]
  %v24 = vld [vmem:[%s0 + $0x8] sm:$0xff]
  %v25 = vld [vmem:[%s0 + $0x10] sm:$0xff]
  %v26 = vld [vmem:[%s0 + $0x18] sm:$0xff]
  %v27 = vld [vmem:[%s0 + $0x20] sm:$0xff]
  %v28 = vld [vmem:[%s0 + $0x28] sm:$0xff]
  %v29 = vld [vmem:[%s0 + $0x30] sm:$0x3]
  %vm30 = vcmask 408576
  %v32 = vsel %vm30, %v22, 0
  %vm34 = vcmask 1041408
  %v36 = vsel %vm34, %v29, 0
  %38 = vmatprep.subr.mxu0 0.0
  %39 = vmatpush1.msra.mxu0 0.0
  %40 = vmatprep.subr.mxu0 0.0
  %41 = vmatpush1.msra.mxu0 0.0
  %42 = vmatprep.subr.mxu0 0.0
  %43 = vmatpush1.msra.mxu0 0.0
  %44 = vmatprep.subr.mxu0 0.0
  %45 = vmatpush1.msra.mxu0 0.0
  %46 = vmatprep.subr.mxu0 0.0
  %47 = vmatpush1.msra.mxu0 0.0
  %48 = vmatprep.subr.mxu0 0.0
  %49 = vmatpush1.msra.mxu0 0.0
  %50 = vmatprep.subr.mxu0 0.0
  %51 = vmatpush1.msra.mxu0 0.0
  %52 = vmatprep.subr.mxu0 0.0
  %53 = vmatpush1.msra.mxu0 0.0
  %54 = vmatprep.subr.mxu0 0.0
  %55 = vmatpush1.msra.mxu0 0.0
  %56 = vmatprep.subr.mxu0 0.0
  %57 = vmatpush1.msra.mxu0 %v36
  %58 = vmatprep.subr.mxu0 0.0
  %59 = vmatpush1.msra.mxu0 %v28
  %60 = vmatprep.subr.mxu0 0.0
  %61 = vmatpush1.msra.mxu0 %v27
  %62 = vmatprep.subr.mxu0 0.0
  %63 = vmatpush1.msra.mxu0 %v26
  %64 = vmatprep.subr.mxu0 0.0
  %65 = vmatpush1.msra.mxu0 %v25
  %66 = vmatprep.subr.mxu0 0.0
  %67 = vmatpush1.msra.mxu0 %v24
  %68 = vmatprep.subr.mxu0 0.0
  %69 = vmatpush1.msra.mxu0 %v23
  %70 = vmatprep.subr.mxu0 0.0
  %71 = vmatpush2.msra.mxu0 0.0
  %72 = vmatprep.subr.mxu0 0.0
  %73 = vmatpush2.msra.mxu0 0.0
  %74 = vmatprep.subr.mxu0 0.0
  %75 = vmatpush2.msra.mxu0 0.0
  %76 = vmatprep.subr.mxu0 0.0
  %77 = vmatpush2.msra.mxu0 0.0
  %78 = vmatprep.subr.mxu0 0.0
  %79 = vmatpush2.msra.mxu0 0.0
  %80 = vmatprep.subr.mxu0 0.0
  %81 = vmatpush2.msra.mxu0 0.0
  %82 = vmatprep.subr.mxu0 0.0
  %83 = vmatpush2.msra.mxu0 0.0
  %84 = vmatprep.subr.mxu0 0.0
  %85 = vmatpush2.msra.mxu0 0.0
  %86 = vmatprep.subr.mxu0 0.0
  %87 = vmatpush2.msra.mxu0 0.0
  %88 = vmatprep.subr.mxu0 0.0
  %89 = vmatpush2.msra.mxu0 0.0
  %90 = vmatprep.subr.mxu0 0.0
  %91 = vmatpush2.msra.mxu0 0.0
  %92 = vmatprep.subr.mxu0 0.0
  %93 = vmatpush2.msra.mxu0 0.0
  %94 = vmatprep.subr.mxu0 0.0
  %95 = vmatpush2.msra.mxu0 0.0
  %96 = vmatprep.subr.mxu0 0.0
  %97 = vmatpush2.msra.mxu0 0.0
  %98 = vmatprep.subr.mxu0 0.0
  %99 = vmatpush2.msra.mxu0 0.0
  %100 = vmatprep.subr.mxu0 0.0
  %101 = vmatpush2.msra.mxu0 0.0
  %102 = vmatprep.mubr.f32.mxu0 0.0
  %103 = vmatmul.mubr.f32.gmra.mxu0 %v32
  %v104 = vpop.f32.mrf.mxu0
  %v105 = vadd.f32 0.0, %v104
  %v106 = vpop.f32.mrf.mxu0
  %107 = vdwg.mxu0
  %v108 = vld [vmem:[%s1] sm:$0xff]
  %v109 = vld [vmem:[%s1 + $0x8] sm:$0xff]
  %v110 = vld [vmem:[%s1 + $0x10] sm:$0xff]
  %v111 = vld [vmem:[%s1 + $0x18] sm:$0xff]
  %v112 = vld [vmem:[%s1 + $0x20] sm:$0xff]
  %v113 = vld [vmem:[%s1 + $0x28] sm:$0xff]
  %v114 = vld [vmem:[%s1 + $0x30] sm:$0x3]
  %v116 = vsel %vm34, %v114, 0
  %118 = vmatprep.subr.mxu0 0.0
  %119 = vmatpush1.msra.mxu0 0.0
  %120 = vmatprep.subr.mxu0 0.0
  %121 = vmatpush1.msra.mxu0 0.0
  %122 = vmatprep.subr.mxu0 0.0
  %123 = vmatpush1.msra.mxu0 0.0
  %124 = vmatprep.subr.mxu0 0.0
  %125 = vmatpush1.msra.mxu0 0.0
  %126 = vmatprep.subr.mxu0 0.0
  %127 = vmatpush1.msra.mxu0 0.0
  %128 = vmatprep.subr.mxu0 0.0
  %129 = vmatpush1.msra.mxu0 0.0
  %130 = vmatprep.subr.mxu0 0.0
  %131 = vmatpush1.msra.mxu0 0.0
  %132 = vmatprep.subr.mxu0 0.0
  %133 = vmatpush1.msra.mxu0 0.0
  %134 = vmatprep.subr.mxu0 0.0
  %135 = vmatpush1.msra.mxu0 0.0
  %136 = vmatprep.subr.mxu0 0.0
  %137 = vmatpush1.msra.mxu0 %v116
  %138 = vmatprep.subr.mxu0 0.0
  %139 = vmatpush1.msra.mxu0 %v113
  %140 = vmatprep.subr.mxu0 0.0
  %141 = vmatpush1.msra.mxu0 %v112
  %142 = vmatprep.subr.mxu0 0.0
  %143 = vmatpush1.msra.mxu0 %v111
  %144 = vmatprep.subr.mxu0 0.0
  %145 = vmatpush1.msra.mxu0 %v110
  %146 = vmatprep.subr.mxu0 0.0
  %147 = vmatpush1.msra.mxu0 %v109
  %148 = vmatprep.subr.mxu0 0.0
  %149 = vmatpush1.msra.mxu0 %v108
  %150 = vmatprep.subr.mxu0 0.0
  %151 = vmatpush2.msra.mxu0 0.0
  %152 = vmatprep.subr.mxu0 0.0
  %153 = vmatpush2.msra.mxu0 0.0
  %154 = vmatprep.subr.mxu0 0.0
  %155 = vmatpush2.msra.mxu0 0.0
  %156 = vmatprep.subr.mxu0 0.0
  %157 = vmatpush2.msra.mxu0 0.0
  %158 = vmatprep.subr.mxu0 0.0
  %159 = vmatpush2.msra.mxu0 0.0
  %160 = vmatprep.subr.mxu0 0.0
  %161 = vmatpush2.msra.mxu0 0.0
  %162 = vmatprep.subr.mxu0 0.0
  %163 = vmatpush2.msra.mxu0 0.0
  %164 = vmatprep.subr.mxu0 0.0
  %165 = vmatpush2.msra.mxu0 0.0
  %166 = vmatprep.subr.mxu0 0.0
  %167 = vmatpush2.msra.mxu0 0.0
  %168 = vmatprep.subr.mxu0 0.0
  %169 = vmatpush2.msra.mxu0 0.0
  %170 = vmatprep.subr.mxu0 0.0
  %171 = vmatpush2.msra.mxu0 0.0
  %172 = vmatprep.subr.mxu0 0.0
  %173 = vmatpush2.msra.mxu0 0.0
  %174 = vmatprep.subr.mxu0 0.0
  %175 = vmatpush2.msra.mxu0 0.0
  %176 = vmatprep.subr.mxu0 0.0
  %177 = vmatpush2.msra.mxu0 0.0
  %178 = vmatprep.subr.mxu0 0.0
  %179 = vmatpush2.msra.mxu0 0.0
  %180 = vmatprep.subr.mxu0 0.0
  %181 = vmatpush2.msra.mxu0 0.0
  %182 = vmatprep.mubr.f32.mxu0 0.0
  %183 = vmatmul.mubr.f32.gmra.mxu0 %v32
  %v184 = vpop.f32.mrf.mxu0
  %v185 = vadd.f32 0.0, %v184
  %v186 = vpop.f32.mrf.mxu0
  %187 = vdwg.mxu0
  %v188 = vadd.f32 %v185, 1e-20
  %v189 = vrcp.pop %v188
  %v190 = vmul.f32 %v105, %v189
  %v191 = vld [vmem:[%s3] sm:$0x3]
  %193 = vset.pattern.permute.xlu0 0
  %194 = vperm.xlu0 %193, %v191
  %v195 = vpop.permute.xlu0 %194
  %v197 = vadd.f32 %v190, %v195
  %vm198 = vcmask 254976
  %199 = vst.msk [vmem:[%s5] sm:$0x3] %vm198, %v197
  %v200 = vld [vmem:[%s4] sm:$0x3]
  %202 = vset.pattern.permute.xlu0 0
  %203 = vperm.xlu0 %202, %v200
  %v204 = vpop.permute.xlu0 %203
  %v206 = vmul.f32 %v185, %v204
  %207 = vst.msk [vmem:[%s6] sm:$0x3] %vm198, %v206
  // Predicated region
  $region22: #{normcnn_forward.16} parent=0 // pred_check
    _
  $region23: #{normcnn_forward.16} parent=0 // pred_check_branch
    %209 = sbr.rel (0) target = $region25
  $region24: #{normcnn_forward.16} parent=0 // pred_region
    _
  $region25: #{normcnn_forward.16} parent=0 // pred_fallthru
    _
  // Predicated region
  $region26: #{normcnn_forward.16} parent=0 // pred_check
    _
  $region27: #{normcnn_forward.16} parent=0 // pred_check_branch
    %211 = sbr.rel (0) target = $region29
  $region28: #{normcnn_forward.16} parent=0 // pred_region
    _
  $region29: #{normcnn_forward.16} parent=0 // pred_fallthru
    _
  // Predicated region
  $region30: #{normcnn_forward.16} parent=0 // pred_check
    _
  $region31: #{normcnn_forward.16} parent=0 // pred_check_branch
    %213 = sbr.rel (0) target = $region33
  $region32: #{normcnn_forward.16} parent=0 // pred_region
    _
  $region33: #{normcnn_forward.16} parent=0 // pred_fallthru
    _
  // Predicated region
  $region34: #{normcnn_forward.16} parent=0 // pred_check
    _
  $region35: #{normcnn_forward.16} parent=0 // pred_check_branch
    %215 = sbr.rel (0) target = $region37
  $region36: #{normcnn_forward.16} parent=0 // pred_region
    _
  $region37: #{normcnn_forward.16} parent=0 // pred_fallthru
    _

// kernel: normcnn_forward.17
$region0: #{normcnn_forward.17}
  #allocation0 [shape = 'u32[]', space=smem, size = 0x4, offset = 0x4, fixed_abs, tag = 'smem constant byte address 0x4 - core index']
  #allocation1 [shape = 'u32[144,128]{1,0:T(1,128)}', space=vmem, size = 0x12000, scoped, tag = 'internal scratch']
  %s0 = inlined_call_operand.vmem [shape: f32[50,8], index: 0, kind: input, shape index: {}]
  %s1 = inlined_call_operand.vmem [shape: f32[50,8], index: 1, kind: input, shape index: {}]
  %s2 = inlined_call_operand.vmem [shape: f32[2,50], index: 2, kind: input, shape index: {}]
  %s3 = inlined_call_operand.vmem [shape: f32[2,1], index: 3, kind: input, shape index: {}]
  %s4 = inlined_call_operand.vmem [shape: f32[2,1], index: 4, kind: input, shape index: {}]
  %s5 = inlined_call_operand.vmem [shape: f32[2,8], index: 5, kind: output, shape index: {0}]
  %s6 = inlined_call_operand.vmem [shape: f32[2,8], index: 6, kind: output, shape index: {1}]
  %7 = xla_tuple %s5, %s6
  %s8 = sld [smem:[#allocation0]]
  $region38: #{normcnn_forward.17} parent=0
    _
  %s10 = ssub.s32 1, %s8
  %s11 = scalar_select 0, %s10, %s8
  // Predicated region
  $region2: #{normcnn_forward.17} parent=0 // pred_check
    _
  $region3: #{normcnn_forward.17} parent=0 // pred_check_branch
    %13 = sbr.rel (0) target = $region5
  $region4: #{normcnn_forward.17} parent=0 // pred_region
    _
  $region5: #{normcnn_forward.17} parent=0 // pred_fallthru
    _
  // Predicated region
  $region6: #{normcnn_forward.17} parent=0 // pred_check
    _
  $region7: #{normcnn_forward.17} parent=0 // pred_check_branch
    %15 = sbr.rel (0) target = $region9
  $region8: #{normcnn_forward.17} parent=0 // pred_region
    _
  $region9: #{normcnn_forward.17} parent=0 // pred_fallthru
    _
  // Predicated region
  $region10: #{normcnn_forward.17} parent=0 // pred_check
    _
  $region11: #{normcnn_forward.17} parent=0 // pred_check_branch
    %17 = sbr.rel (0) target = $region13
  $region12: #{normcnn_forward.17} parent=0 // pred_region
    _
  $region13: #{normcnn_forward.17} parent=0 // pred_fallthru
    _
  // Predicated region
  $region14: #{normcnn_forward.17} parent=0 // pred_check
    _
  $region15: #{normcnn_forward.17} parent=0 // pred_check_branch
    %19 = sbr.rel (0) target = $region17
  $region16: #{normcnn_forward.17} parent=0 // pred_region
    _
  $region17: #{normcnn_forward.17} parent=0 // pred_fallthru
    _
  // Predicated region
  $region18: #{normcnn_forward.17} parent=0 // pred_check
    _
  $region19: #{normcnn_forward.17} parent=0 // pred_check_branch
    %21 = sbr.rel (0) target = $region21
  $region20: #{normcnn_forward.17} parent=0 // pred_region
    _
  $region21: #{normcnn_forward.17} parent=0 // pred_fallthru
    _
  %v22 = vld [vmem:[%s2] sm:$0x3]
  %v23 = vld [vmem:[%s0] sm:$0xff]
  %v24 = vld [vmem:[%s0 + $0x8] sm:$0xff]
  %v25 = vld [vmem:[%s0 + $0x10] sm:$0xff]
  %v26 = vld [vmem:[%s0 + $0x18] sm:$0xff]
  %v27 = vld [vmem:[%s0 + $0x20] sm:$0xff]
  %v28 = vld [vmem:[%s0 + $0x28] sm:$0xff]
  %v29 = vld [vmem:[%s0 + $0x30] sm:$0x3]
  %vm30 = vcmask 408576
  %v32 = vsel %vm30, %v22, 0
  %vm34 = vcmask 1041408
  %v36 = vsel %vm34, %v29, 0
  %38 = vmatprep.subr.mxu0 0.0
  %39 = vmatpush1.msra.mxu0 0.0
  %40 = vmatprep.subr.mxu0 0.0
  %41 = vmatpush1.msra.mxu0 0.0
  %42 = vmatprep.subr.mxu0 0.0
  %43 = vmatpush1.msra.mxu0 0.0
  %44 = vmatprep.subr.mxu0 0.0
  %45 = vmatpush1.msra.mxu0 0.0
  %46 = vmatprep.subr.mxu0 0.0
  %47 = vmatpush1.msra.mxu0 0.0
  %48 = vmatprep.subr.mxu0 0.0
  %49 = vmatpush1.msra.mxu0 0.0
  %50 = vmatprep.subr.mxu0 0.0
  %51 = vmatpush1.msra.mxu0 0.0
  %52 = vmatprep.subr.mxu0 0.0
  %53 = vmatpush1.msra.mxu0 0.0
  %54 = vmatprep.subr.mxu0 0.0
  %55 = vmatpush1.msra.mxu0 0.0
  %56 = vmatprep.subr.mxu0 0.0
  %57 = vmatpush1.msra.mxu0 %v36
  %58 = vmatprep.subr.mxu0 0.0
  %59 = vmatpush1.msra.mxu0 %v28
  %60 = vmatprep.subr.mxu0 0.0
  %61 = vmatpush1.msra.mxu0 %v27
  %62 = vmatprep.subr.mxu0 0.0
  %63 = vmatpush1.msra.mxu0 %v26
  %64 = vmatprep.subr.mxu0 0.0
  %65 = vmatpush1.msra.mxu0 %v25
  %66 = vmatprep.subr.mxu0 0.0
  %67 = vmatpush1.msra.mxu0 %v24
  %68 = vmatprep.subr.mxu0 0.0
  %69 = vmatpush1.msra.mxu0 %v23
  %70 = vmatprep.subr.mxu0 0.0
  %71 = vmatpush2.msra.mxu0 0.0
  %72 = vmatprep.subr.mxu0 0.0
  %73 = vmatpush2.msra.mxu0 0.0
  %74 = vmatprep.subr.mxu0 0.0
  %75 = vmatpush2.msra.mxu0 0.0
  %76 = vmatprep.subr.mxu0 0.0
  %77 = vmatpush2.msra.mxu0 0.0
  %78 = vmatprep.subr.mxu0 0.0
  %79 = vmatpush2.msra.mxu0 0.0
  %80 = vmatprep.subr.mxu0 0.0
  %81 = vmatpush2.msra.mxu0 0.0
  %82 = vmatprep.subr.mxu0 0.0
  %83 = vmatpush2.msra.mxu0 0.0
  %84 = vmatprep.subr.mxu0 0.0
  %85 = vmatpush2.msra.mxu0 0.0
  %86 = vmatprep.subr.mxu0 0.0
  %87 = vmatpush2.msra.mxu0 0.0
  %88 = vmatprep.subr.mxu0 0.0
  %89 = vmatpush2.msra.mxu0 0.0
  %90 = vmatprep.subr.mxu0 0.0
  %91 = vmatpush2.msra.mxu0 0.0
  %92 = vmatprep.subr.mxu0 0.0
  %93 = vmatpush2.msra.mxu0 0.0
  %94 = vmatprep.subr.mxu0 0.0
  %95 = vmatpush2.msra.mxu0 0.0
  %96 = vmatprep.subr.mxu0 0.0
  %97 = vmatpush2.msra.mxu0 0.0
  %98 = vmatprep.subr.mxu0 0.0
  %99 = vmatpush2.msra.mxu0 0.0
  %100 = vmatprep.subr.mxu0 0.0
  %101 = vmatpush2.msra.mxu0 0.0
  %102 = vmatprep.mubr.f32.mxu0 0.0
  %103 = vmatmul.mubr.f32.gmra.mxu0 %v32
  %v104 = vpop.f32.mrf.mxu0
  %v105 = vadd.f32 0.0, %v104
  %v106 = vpop.f32.mrf.mxu0
  %107 = vdwg.mxu0
  %v108 = vld [vmem:[%s1] sm:$0xff]
  %v109 = vld [vmem:[%s1 + $0x8] sm:$0xff]
  %v110 = vld [vmem:[%s1 + $0x10] sm:$0xff]
  %v111 = vld [vmem:[%s1 + $0x18] sm:$0xff]
  %v112 = vld [vmem:[%s1 + $0x20] sm:$0xff]
  %v113 = vld [vmem:[%s1 + $0x28] sm:$0xff]
  %v114 = vld [vmem:[%s1 + $0x30] sm:$0x3]
  %v116 = vsel %vm34, %v114, 0
  %118 = vmatprep.subr.mxu0 0.0
  %119 = vmatpush1.msra.mxu0 0.0
  %120 = vmatprep.subr.mxu0 0.0
  %121 = vmatpush1.msra.mxu0 0.0
  %122 = vmatprep.subr.mxu0 0.0
  %123 = vmatpush1.msra.mxu0 0.0
  %124 = vmatprep.subr.mxu0 0.0
  %125 = vmatpush1.msra.mxu0 0.0
  %126 = vmatprep.subr.mxu0 0.0
  %127 = vmatpush1.msra.mxu0 0.0
  %128 = vmatprep.subr.mxu0 0.0
  %129 = vmatpush1.msra.mxu0 0.0
  %130 = vmatprep.subr.mxu0 0.0
  %131 = vmatpush1.msra.mxu0 0.0
  %132 = vmatprep.subr.mxu0 0.0
  %133 = vmatpush1.msra.mxu0 0.0
  %134 = vmatprep.subr.mxu0 0.0
  %135 = vmatpush1.msra.mxu0 0.0
  %136 = vmatprep.subr.mxu0 0.0
  %137 = vmatpush1.msra.mxu0 %v116
  %138 = vmatprep.subr.mxu0 0.0
  %139 = vmatpush1.msra.mxu0 %v113
  %140 = vmatprep.subr.mxu0 0.0
  %141 = vmatpush1.msra.mxu0 %v112
  %142 = vmatprep.subr.mxu0 0.0
  %143 = vmatpush1.msra.mxu0 %v111
  %144 = vmatprep.subr.mxu0 0.0
  %145 = vmatpush1.msra.mxu0 %v110
  %146 = vmatprep.subr.mxu0 0.0
  %147 = vmatpush1.msra.mxu0 %v109
  %148 = vmatprep.subr.mxu0 0.0
  %149 = vmatpush1.msra.mxu0 %v108
  %150 = vmatprep.subr.mxu0 0.0
  %151 = vmatpush2.msra.mxu0 0.0
  %152 = vmatprep.subr.mxu0 0.0
  %153 = vmatpush2.msra.mxu0 0.0
  %154 = vmatprep.subr.mxu0 0.0
  %155 = vmatpush2.msra.mxu0 0.0
  %156 = vmatprep.subr.mxu0 0.0
  %157 = vmatpush2.msra.mxu0 0.0
  %158 = vmatprep.subr.mxu0 0.0
  %159 = vmatpush2.msra.mxu0 0.0
  %160 = vmatprep.subr.mxu0 0.0
  %161 = vmatpush2.msra.mxu0 0.0
  %162 = vmatprep.subr.mxu0 0.0
  %163 = vmatpush2.msra.mxu0 0.0
  %164 = vmatprep.subr.mxu0 0.0
  %165 = vmatpush2.msra.mxu0 0.0
  %166 = vmatprep.subr.mxu0 0.0
  %167 = vmatpush2.msra.mxu0 0.0
  %168 = vmatprep.subr.mxu0 0.0
  %169 = vmatpush2.msra.mxu0 0.0
  %170 = vmatprep.subr.mxu0 0.0
  %171 = vmatpush2.msra.mxu0 0.0
  %172 = vmatprep.subr.mxu0 0.0
  %173 = vmatpush2.msra.mxu0 0.0
  %174 = vmatprep.subr.mxu0 0.0
  %175 = vmatpush2.msra.mxu0 0.0
  %176 = vmatprep.subr.mxu0 0.0
  %177 = vmatpush2.msra.mxu0 0.0
  %178 = vmatprep.subr.mxu0 0.0
  %179 = vmatpush2.msra.mxu0 0.0
  %180 = vmatprep.subr.mxu0 0.0
  %181 = vmatpush2.msra.mxu0 0.0
  %182 = vmatprep.mubr.f32.mxu0 0.0
  %183 = vmatmul.mubr.f32.gmra.mxu0 %v32
  %v184 = vpop.f32.mrf.mxu0
  %v185 = vadd.f32 0.0, %v184
  %v186 = vpop.f32.mrf.mxu0
  %187 = vdwg.mxu0
  %v188 = vadd.f32 %v185, 1e-20
  %v189 = vrcp.pop %v188
  %v190 = vmul.f32 %v105, %v189
  %v191 = vld [vmem:[%s3] sm:$0x3]
  %193 = vset.pattern.permute.xlu0 0
  %194 = vperm.xlu0 %193, %v191
  %v195 = vpop.permute.xlu0 %194
  %v197 = vadd.f32 %v190, %v195
  %vm198 = vcmask 58368
  %199 = vst.msk [vmem:[%s5] sm:$0x3] %vm198, %v197
  %v200 = vld [vmem:[%s4] sm:$0x3]
  %202 = vset.pattern.permute.xlu0 0
  %203 = vperm.xlu0 %202, %v200
  %v204 = vpop.permute.xlu0 %203
  %v206 = vmul.f32 %v185, %v204
  %207 = vst.msk [vmem:[%s6] sm:$0x3] %vm198, %v206
  // Predicated region
  $region22: #{normcnn_forward.17} parent=0 // pred_check
    _
  $region23: #{normcnn_forward.17} parent=0 // pred_check_branch
    %209 = sbr.rel (0) target = $region25
  $region24: #{normcnn_forward.17} parent=0 // pred_region
    _
  $region25: #{normcnn_forward.17} parent=0 // pred_fallthru
    _
  // Predicated region
  $region26: #{normcnn_forward.17} parent=0 // pred_check
    _
  $region27: #{normcnn_forward.17} parent=0 // pred_check_branch
    %211 = sbr.rel (0) target = $region29
  $region28: #{normcnn_forward.17} parent=0 // pred_region
    _
  $region29: #{normcnn_forward.17} parent=0 // pred_fallthru
    _
  // Predicated region
  $region30: #{normcnn_forward.17} parent=0 // pred_check
    _
  $region31: #{normcnn_forward.17} parent=0 // pred_check_branch
    %213 = sbr.rel (0) target = $region33
  $region32: #{normcnn_forward.17} parent=0 // pred_region
    _
  $region33: #{normcnn_forward.17} parent=0 // pred_fallthru
    _
  // Predicated region
  $region34: #{normcnn_forward.17} parent=0 // pred_check
    _
  $region35: #{normcnn_forward.17} parent=0 // pred_check_branch
    %215 = sbr.rel (0) target = $region37
  $region36: #{normcnn_forward.17} parent=0 // pred_region
    _
  $region37: #{normcnn_forward.17} parent=0 // pred_fallthru
    _

// kernel: normcnn_forward.18
$region0: #{normcnn_forward.18}
  #allocation0 [shape = 'u32[]', space=smem, size = 0x4, offset = 0x4, fixed_abs, tag = 'smem constant byte address 0x4 - core index']
  #allocation1 [shape = 'u32[144,128]{1,0:T(1,128)}', space=vmem, size = 0x12000, scoped, tag = 'internal scratch']
  %s0 = inlined_call_operand.vmem [shape: f32[36,32], index: 0, kind: input, shape index: {}]
  %s1 = inlined_call_operand.vmem [shape: f32[36,32], index: 1, kind: input, shape index: {}]
  %s2 = inlined_call_operand.vmem [shape: f32[2,36], index: 2, kind: input, shape index: {}]
  %s3 = inlined_call_operand.vmem [shape: f32[2,1], index: 3, kind: input, shape index: {}]
  %s4 = inlined_call_operand.vmem [shape: f32[2,1], index: 4, kind: input, shape index: {}]
  %s5 = inlined_call_operand.vmem [shape: f32[2,32], index: 5, kind: output, shape index: {0}]
  %s6 = inlined_call_operand.vmem [shape: f32[2,32], index: 6, kind: output, shape index: {1}]
  %7 = xla_tuple %s5, %s6
  %s8 = sld [smem:[#allocation0]]
  $region38: #{normcnn_forward.18} parent=0
    _
  %s10 = ssub.s32 1, %s8
  %s11 = scalar_select 0, %s10, %s8
  // Predicated region
  $region2: #{normcnn_forward.18} parent=0 // pred_check
    _
  $region3: #{normcnn_forward.18} parent=0 // pred_check_branch
    %13 = sbr.rel (0) target = $region5
  $region4: #{normcnn_forward.18} parent=0 // pred_region
    _
  $region5: #{normcnn_forward.18} parent=0 // pred_fallthru
    _
  // Predicated region
  $region6: #{normcnn_forward.18} parent=0 // pred_check
    _
  $region7: #{normcnn_forward.18} parent=0 // pred_check_branch
    %15 = sbr.rel (0) target = $region9
  $region8: #{normcnn_forward.18} parent=0 // pred_region
    _
  $region9: #{normcnn_forward.18} parent=0 // pred_fallthru
    _
  // Predicated region
  $region10: #{normcnn_forward.18} parent=0 // pred_check
    _
  $region11: #{normcnn_forward.18} parent=0 // pred_check_branch
    %17 = sbr.rel (0) target = $region13
  $region12: #{normcnn_forward.18} parent=0 // pred_region
    _
  $region13: #{normcnn_forward.18} parent=0 // pred_fallthru
    _
  // Predicated region
  $region14: #{normcnn_forward.18} parent=0 // pred_check
    _
  $region15: #{normcnn_forward.18} parent=0 // pred_check_branch
    %19 = sbr.rel (0) target = $region17
  $region16: #{normcnn_forward.18} parent=0 // pred_region
    _
  $region17: #{normcnn_forward.18} parent=0 // pred_fallthru
    _
  // Predicated region
  $region18: #{normcnn_forward.18} parent=0 // pred_check
    _
  $region19: #{normcnn_forward.18} parent=0 // pred_check_branch
    %21 = sbr.rel (0) target = $region21
  $region20: #{normcnn_forward.18} parent=0 // pred_region
    _
  $region21: #{normcnn_forward.18} parent=0 // pred_fallthru
    _
  %v22 = vld [vmem:[%s2] sm:$0x3]
  %v23 = vld [vmem:[%s0] sm:$0xff]
  %v24 = vld [vmem:[%s0 + $0x8] sm:$0xff]
  %v25 = vld [vmem:[%s0 + $0x10] sm:$0xff]
  %v26 = vld [vmem:[%s0 + $0x18] sm:$0xff]
  %v27 = vld [vmem:[%s0 + $0x20] sm:$0xf]
  %vm28 = vcmask 293888
  %v30 = vsel %vm28, %v22, 0
  %vm32 = vcmask 1043456
  %v34 = vsel %vm32, %v27, 0
  %36 = vmatprep.subr.mxu0 0.0
  %37 = vmatpush1.msra.mxu0 0.0
  %38 = vmatprep.subr.mxu0 0.0
  %39 = vmatpush1.msra.mxu0 0.0
  %40 = vmatprep.subr.mxu0 0.0
  %41 = vmatpush1.msra.mxu0 0.0
  %42 = vmatprep.subr.mxu0 0.0
  %43 = vmatpush1.msra.mxu0 0.0
  %44 = vmatprep.subr.mxu0 0.0
  %45 = vmatpush1.msra.mxu0 0.0
  %46 = vmatprep.subr.mxu0 0.0
  %47 = vmatpush1.msra.mxu0 0.0
  %48 = vmatprep.subr.mxu0 0.0
  %49 = vmatpush1.msra.mxu0 0.0
  %50 = vmatprep.subr.mxu0 0.0
  %51 = vmatpush1.msra.mxu0 0.0
  %52 = vmatprep.subr.mxu0 0.0
  %53 = vmatpush1.msra.mxu0 0.0
  %54 = vmatprep.subr.mxu0 0.0
  %55 = vmatpush1.msra.mxu0 0.0
  %56 = vmatprep.subr.mxu0 0.0
  %57 = vmatpush1.msra.mxu0 0.0
  %58 = vmatprep.subr.mxu0 0.0
  %59 = vmatpush1.msra.mxu0 %v34
  %60 = vmatprep.subr.mxu0 0.0
  %61 = vmatpush1.msra.mxu0 %v26
  %62 = vmatprep.subr.mxu0 0.0
  %63 = vmatpush1.msra.mxu0 %v25
  %64 = vmatprep.subr.mxu0 0.0
  %65 = vmatpush1.msra.mxu0 %v24
  %66 = vmatprep.subr.mxu0 0.0
  %67 = vmatpush1.msra.mxu0 %v23
  %68 = vmatprep.subr.mxu0 0.0
  %69 = vmatpush2.msra.mxu0 0.0
  %70 = vmatprep.subr.mxu0 0.0
  %71 = vmatpush2.msra.mxu0 0.0
  %72 = vmatprep.subr.mxu0 0.0
  %73 = vmatpush2.msra.mxu0 0.0
  %74 = vmatprep.subr.mxu0 0.0
  %75 = vmatpush2.msra.mxu0 0.0
  %76 = vmatprep.subr.mxu0 0.0
  %77 = vmatpush2.msra.mxu0 0.0
  %78 = vmatprep.subr.mxu0 0.0
  %79 = vmatpush2.msra.mxu0 0.0
  %80 = vmatprep.subr.mxu0 0.0
  %81 = vmatpush2.msra.mxu0 0.0
  %82 = vmatprep.subr.mxu0 0.0
  %83 = vmatpush2.msra.mxu0 0.0
  %84 = vmatprep.subr.mxu0 0.0
  %85 = vmatpush2.msra.mxu0 0.0
  %86 = vmatprep.subr.mxu0 0.0
  %87 = vmatpush2.msra.mxu0 0.0
  %88 = vmatprep.subr.mxu0 0.0
  %89 = vmatpush2.msra.mxu0 0.0
  %90 = vmatprep.subr.mxu0 0.0
  %91 = vmatpush2.msra.mxu0 0.0
  %92 = vmatprep.subr.mxu0 0.0
  %93 = vmatpush2.msra.mxu0 0.0
  %94 = vmatprep.subr.mxu0 0.0
  %95 = vmatpush2.msra.mxu0 0.0
  %96 = vmatprep.subr.mxu0 0.0
  %97 = vmatpush2.msra.mxu0 0.0
  %98 = vmatprep.subr.mxu0 0.0
  %99 = vmatpush2.msra.mxu0 0.0
  %100 = vmatprep.mubr.f32.mxu0 0.0
  %101 = vmatmul.mubr.f32.gmra.mxu0 %v30
  %v102 = vpop.f32.mrf.mxu0
  %v103 = vadd.f32 0.0, %v102
  %v104 = vpop.f32.mrf.mxu0
  %105 = vdwg.mxu0
  %v106 = vld [vmem:[%s1] sm:$0xff]
  %v107 = vld [vmem:[%s1 + $0x8] sm:$0xff]
  %v108 = vld [vmem:[%s1 + $0x10] sm:$0xff]
  %v109 = vld [vmem:[%s1 + $0x18] sm:$0xff]
  %v110 = vld [vmem:[%s1 + $0x20] sm:$0xf]
  %v112 = vsel %vm32, %v110, 0
  %114 = vmatprep.subr.mxu0 0.0
  %115 = vmatpush1.msra.mxu0 0.0
  %116 = vmatprep.subr.mxu0 0.0
  %117 = vmatpush1.msra.mxu0 0.0
  %118 = vmatprep.subr.mxu0 0.0
  %119 = vmatpush1.msra.mxu0 0.0
  %120 = vmatprep.subr.mxu0 0.0
  %121 = vmatpush1.msra.mxu0 0.0
  %122 = vmatprep.subr.mxu0 0.0
  %123 = vmatpush1.msra.mxu0 0.0
  %124 = vmatprep.subr.mxu0 0.0
  %125 = vmatpush1.msra.mxu0 0.0
  %126 = vmatprep.subr.mxu0 0.0
  %127 = vmatpush1.msra.mxu0 0.0
  %128 = vmatprep.subr.mxu0 0.0
  %129 = vmatpush1.msra.mxu0 0.0
  %130 = vmatprep.subr.mxu0 0.0
  %131 = vmatpush1.msra.mxu0 0.0
  %132 = vmatprep.subr.mxu0 0.0
  %133 = vmatpush1.msra.mxu0 0.0
  %134 = vmatprep.subr.mxu0 0.0
  %135 = vmatpush1.msra.mxu0 0.0
  %136 = vmatprep.subr.mxu0 0.0
  %137 = vmatpush1.msra.mxu0 %v112
  %138 = vmatprep.subr.mxu0 0.0
  %139 = vmatpush1.msra.mxu0 %v109
  %140 = vmatprep.subr.mxu0 0.0
  %141 = vmatpush1.msra.mxu0 %v108
  %142 = vmatprep.subr.mxu0 0.0
  %143 = vmatpush1.msra.mxu0 %v107
  %144 = vmatprep.subr.mxu0 0.0
  %145 = vmatpush1.msra.mxu0 %v106
  %146 = vmatprep.subr.mxu0 0.0
  %147 = vmatpush2.msra.mxu0 0.0
  %148 = vmatprep.subr.mxu0 0.0
  %149 = vmatpush2.msra.mxu0 0.0
  %150 = vmatprep.subr.mxu0 0.0
  %151 = vmatpush2.msra.mxu0 0.0
  %152 = vmatprep.subr.mxu0 0.0
  %153 = vmatpush2.msra.mxu0 0.0
  %154 = vmatprep.subr.mxu0 0.0
  %155 = vmatpush2.msra.mxu0 0.0
  %156 = vmatprep.subr.mxu0 0.0
  %157 = vmatpush2.msra.mxu0 0.0
  %158 = vmatprep.subr.mxu0 0.0
  %159 = vmatpush2.msra.mxu0 0.0
  %160 = vmatprep.subr.mxu0 0.0
  %161 = vmatpush2.msra.mxu0 0.0
  %162 = vmatprep.subr.mxu0 0.0
  %163 = vmatpush2.msra.mxu0 0.0
  %164 = vmatprep.subr.mxu0 0.0
  %165 = vmatpush2.msra.mxu0 0.0
  %166 = vmatprep.subr.mxu0 0.0
  %167 = vmatpush2.msra.mxu0 0.0
  %168 = vmatprep.subr.mxu0 0.0
  %169 = vmatpush2.msra.mxu0 0.0
  %170 = vmatprep.subr.mxu0 0.0
  %171 = vmatpush2.msra.mxu0 0.0
  %172 = vmatprep.subr.mxu0 0.0
  %173 = vmatpush2.msra.mxu0 0.0
  %174 = vmatprep.subr.mxu0 0.0
  %175 = vmatpush2.msra.mxu0 0.0
  %176 = vmatprep.subr.mxu0 0.0
  %177 = vmatpush2.msra.mxu0 0.0
  %178 = vmatprep.mubr.f32.mxu0 0.0
  %179 = vmatmul.mubr.f32.gmra.mxu0 %v30
  %v180 = vpop.f32.mrf.mxu0
  %v181 = vadd.f32 0.0, %v180
  %v182 = vpop.f32.mrf.mxu0
  %183 = vdwg.mxu0
  %v184 = vadd.f32 %v181, 1e-20
  %v185 = vrcp.pop %v184
  %v186 = vmul.f32 %v103, %v185
  %v187 = vld [vmem:[%s3] sm:$0x3]
  %189 = vset.pattern.permute.xlu0 0
  %190 = vperm.xlu0 %189, %v187
  %v191 = vpop.permute.xlu0 %190
  %v193 = vadd.f32 %v186, %v191
  %vm194 = vcmask 254976
  %195 = vst.msk [vmem:[%s5] sm:$0x3] %vm194, %v193
  %v196 = vld [vmem:[%s4] sm:$0x3]
  %198 = vset.pattern.permute.xlu0 0
  %199 = vperm.xlu0 %198, %v196
  %v200 = vpop.permute.xlu0 %199
  %v202 = vmul.f32 %v181, %v200
  %203 = vst.msk [vmem:[%s6] sm:$0x3] %vm194, %v202
  // Predicated region
  $region22: #{normcnn_forward.18} parent=0 // pred_check
    _
  $region23: #{normcnn_forward.18} parent=0 // pred_check_branch
    %205 = sbr.rel (0) target = $region25
  $region24: #{normcnn_forward.18} parent=0 // pred_region
    _
  $region25: #{normcnn_forward.18} parent=0 // pred_fallthru
    _
  // Predicated region
  $region26: #{normcnn_forward.18} parent=0 // pred_check
    _
  $region27: #{normcnn_forward.18} parent=0 // pred_check_branch
    %207 = sbr.rel (0) target = $region29
  $region28: #{normcnn_forward.18} parent=0 // pred_region
    _
  $region29: #{normcnn_forward.18} parent=0 // pred_fallthru
    _
  // Predicated region
  $region30: #{normcnn_forward.18} parent=0 // pred_check
    _
  $region31: #{normcnn_forward.18} parent=0 // pred_check_branch
    %209 = sbr.rel (0) target = $region33
  $region32: #{normcnn_forward.18} parent=0 // pred_region
    _
  $region33: #{normcnn_forward.18} parent=0 // pred_fallthru
    _
  // Predicated region
  $region34: #{normcnn_forward.18} parent=0 // pred_check
    _
  $region35: #{normcnn_forward.18} parent=0 // pred_check_branch
    %211 = sbr.rel (0) target = $region37
  $region36: #{normcnn_forward.18} parent=0 // pred_region
    _
  $region37: #{normcnn_forward.18} parent=0 // pred_fallthru
    _

// kernel: normcnn_forward.19
$region0: #{normcnn_forward.19}
  #allocation0 [shape = 'u32[]', space=smem, size = 0x4, offset = 0x4, fixed_abs, tag = 'smem constant byte address 0x4 - core index']
  #allocation1 [shape = 'u32[144,128]{1,0:T(1,128)}', space=vmem, size = 0x12000, scoped, tag = 'internal scratch']
  %s0 = inlined_call_operand.vmem [shape: f32[36,128], index: 0, kind: input, shape index: {}]
  %s1 = inlined_call_operand.vmem [shape: f32[36,128], index: 1, kind: input, shape index: {}]
  %s2 = inlined_call_operand.vmem [shape: f32[2,36], index: 2, kind: input, shape index: {}]
  %s3 = inlined_call_operand.vmem [shape: f32[2,1], index: 3, kind: input, shape index: {}]
  %s4 = inlined_call_operand.vmem [shape: f32[2,1], index: 4, kind: input, shape index: {}]
  %s5 = inlined_call_operand.vmem [shape: f32[2,128], index: 5, kind: output, shape index: {0}]
  %s6 = inlined_call_operand.vmem [shape: f32[2,128], index: 6, kind: output, shape index: {1}]
  %7 = xla_tuple %s5, %s6
  %s8 = sld [smem:[#allocation0]]
  $region38: #{normcnn_forward.19} parent=0
    _
  %s10 = ssub.s32 1, %s8
  %s11 = scalar_select 0, %s10, %s8
  // Predicated region
  $region2: #{normcnn_forward.19} parent=0 // pred_check
    _
  $region3: #{normcnn_forward.19} parent=0 // pred_check_branch
    %13 = sbr.rel (0) target = $region5
  $region4: #{normcnn_forward.19} parent=0 // pred_region
    _
  $region5: #{normcnn_forward.19} parent=0 // pred_fallthru
    _
  // Predicated region
  $region6: #{normcnn_forward.19} parent=0 // pred_check
    _
  $region7: #{normcnn_forward.19} parent=0 // pred_check_branch
    %15 = sbr.rel (0) target = $region9
  $region8: #{normcnn_forward.19} parent=0 // pred_region
    _
  $region9: #{normcnn_forward.19} parent=0 // pred_fallthru
    _
  // Predicated region
  $region10: #{normcnn_forward.19} parent=0 // pred_check
    _
  $region11: #{normcnn_forward.19} parent=0 // pred_check_branch
    %17 = sbr.rel (0) target = $region13
  $region12: #{normcnn_forward.19} parent=0 // pred_region
    _
  $region13: #{normcnn_forward.19} parent=0 // pred_fallthru
    _
  // Predicated region
  $region14: #{normcnn_forward.19} parent=0 // pred_check
    _
  $region15: #{normcnn_forward.19} parent=0 // pred_check_branch
    %19 = sbr.rel (0) target = $region17
  $region16: #{normcnn_forward.19} parent=0 // pred_region
    _
  $region17: #{normcnn_forward.19} parent=0 // pred_fallthru
    _
  // Predicated region
  $region18: #{normcnn_forward.19} parent=0 // pred_check
    _
  $region19: #{normcnn_forward.19} parent=0 // pred_check_branch
    %21 = sbr.rel (0) target = $region21
  $region20: #{normcnn_forward.19} parent=0 // pred_region
    _
  $region21: #{normcnn_forward.19} parent=0 // pred_fallthru
    _
  %v22 = vld [vmem:[%s2] sm:$0x3]
  %v23 = vld [vmem:[%s0] sm:$0xff]
  %v24 = vld [vmem:[%s0 + $0x8] sm:$0xff]
  %v25 = vld [vmem:[%s0 + $0x10] sm:$0xff]
  %v26 = vld [vmem:[%s0 + $0x18] sm:$0xff]
  %v27 = vld [vmem:[%s0 + $0x20] sm:$0xf]
  %vm28 = vcmask 293888
  %v30 = vsel %vm28, %v22, 0
  %vm32 = vcmask 1043456
  %v34 = vsel %vm32, %v27, 0
  %36 = vmatprep.subr.mxu0 0.0
  %37 = vmatpush1.msra.mxu0 0.0
  %38 = vmatprep.subr.mxu0 0.0
  %39 = vmatpush1.msra.mxu0 0.0
  %40 = vmatprep.subr.mxu0 0.0
  %41 = vmatpush1.msra.mxu0 0.0
  %42 = vmatprep.subr.mxu0 0.0
  %43 = vmatpush1.msra.mxu0 0.0
  %44 = vmatprep.subr.mxu0 0.0
  %45 = vmatpush1.msra.mxu0 0.0
  %46 = vmatprep.subr.mxu0 0.0
  %47 = vmatpush1.msra.mxu0 0.0
  %48 = vmatprep.subr.mxu0 0.0
  %49 = vmatpush1.msra.mxu0 0.0
  %50 = vmatprep.subr.mxu0 0.0
  %51 = vmatpush1.msra.mxu0 0.0
  %52 = vmatprep.subr.mxu0 0.0
  %53 = vmatpush1.msra.mxu0 0.0
  %54 = vmatprep.subr.mxu0 0.0
  %55 = vmatpush1.msra.mxu0 0.0
  %56 = vmatprep.subr.mxu0 0.0
  %57 = vmatpush1.msra.mxu0 0.0
  %58 = vmatprep.subr.mxu0 0.0
  %59 = vmatpush1.msra.mxu0 %v34
  %60 = vmatprep.subr.mxu0 0.0
  %61 = vmatpush1.msra.mxu0 %v26
  %62 = vmatprep.subr.mxu0 0.0
  %63 = vmatpush1.msra.mxu0 %v25
  %64 = vmatprep.subr.mxu0 0.0
  %65 = vmatpush1.msra.mxu0 %v24
  %66 = vmatprep.subr.mxu0 0.0
  %67 = vmatpush1.msra.mxu0 %v23
  %68 = vmatprep.subr.mxu0 0.0
  %69 = vmatpush2.msra.mxu0 0.0
  %70 = vmatprep.subr.mxu0 0.0
  %71 = vmatpush2.msra.mxu0 0.0
  %72 = vmatprep.subr.mxu0 0.0
  %73 = vmatpush2.msra.mxu0 0.0
  %74 = vmatprep.subr.mxu0 0.0
  %75 = vmatpush2.msra.mxu0 0.0
  %76 = vmatprep.subr.mxu0 0.0
  %77 = vmatpush2.msra.mxu0 0.0
  %78 = vmatprep.subr.mxu0 0.0
  %79 = vmatpush2.msra.mxu0 0.0
  %80 = vmatprep.subr.mxu0 0.0
  %81 = vmatpush2.msra.mxu0 0.0
  %82 = vmatprep.subr.mxu0 0.0
  %83 = vmatpush2.msra.mxu0 0.0
  %84 = vmatprep.subr.mxu0 0.0
  %85 = vmatpush2.msra.mxu0 0.0
  %86 = vmatprep.subr.mxu0 0.0
  %87 = vmatpush2.msra.mxu0 0.0
  %88 = vmatprep.subr.mxu0 0.0
  %89 = vmatpush2.msra.mxu0 0.0
  %90 = vmatprep.subr.mxu0 0.0
  %91 = vmatpush2.msra.mxu0 0.0
  %92 = vmatprep.subr.mxu0 0.0
  %93 = vmatpush2.msra.mxu0 0.0
  %94 = vmatprep.subr.mxu0 0.0
  %95 = vmatpush2.msra.mxu0 0.0
  %96 = vmatprep.subr.mxu0 0.0
  %97 = vmatpush2.msra.mxu0 0.0
  %98 = vmatprep.subr.mxu0 0.0
  %99 = vmatpush2.msra.mxu0 0.0
  %100 = vmatprep.mubr.f32.mxu0 0.0
  %101 = vmatmul.mubr.f32.gmra.mxu0 %v30
  %v102 = vpop.f32.mrf.mxu0
  %v103 = vadd.f32 0.0, %v102
  %v104 = vpop.f32.mrf.mxu0
  %105 = vdwg.mxu0
  %v106 = vld [vmem:[%s1] sm:$0xff]
  %v107 = vld [vmem:[%s1 + $0x8] sm:$0xff]
  %v108 = vld [vmem:[%s1 + $0x10] sm:$0xff]
  %v109 = vld [vmem:[%s1 + $0x18] sm:$0xff]
  %v110 = vld [vmem:[%s1 + $0x20] sm:$0xf]
  %v112 = vsel %vm32, %v110, 0
  %114 = vmatprep.subr.mxu0 0.0
  %115 = vmatpush1.msra.mxu0 0.0
  %116 = vmatprep.subr.mxu0 0.0
  %117 = vmatpush1.msra.mxu0 0.0
  %118 = vmatprep.subr.mxu0 0.0
  %119 = vmatpush1.msra.mxu0 0.0
  %120 = vmatprep.subr.mxu0 0.0
  %121 = vmatpush1.msra.mxu0 0.0
  %122 = vmatprep.subr.mxu0 0.0
  %123 = vmatpush1.msra.mxu0 0.0
  %124 = vmatprep.subr.mxu0 0.0
  %125 = vmatpush1.msra.mxu0 0.0
  %126 = vmatprep.subr.mxu0 0.0
  %127 = vmatpush1.msra.mxu0 0.0
  %128 = vmatprep.subr.mxu0 0.0
  %129 = vmatpush1.msra.mxu0 0.0
  %130 = vmatprep.subr.mxu0 0.0
  %131 = vmatpush1.msra.mxu0 0.0
  %132 = vmatprep.subr.mxu0 0.0
  %133 = vmatpush1.msra.mxu0 0.0
  %134 = vmatprep.subr.mxu0 0.0
  %135 = vmatpush1.msra.mxu0 0.0
  %136 = vmatprep.subr.mxu0 0.0
  %137 = vmatpush1.msra.mxu0 %v112
  %138 = vmatprep.subr.mxu0 0.0
  %139 = vmatpush1.msra.mxu0 %v109
  %140 = vmatprep.subr.mxu0 0.0
  %141 = vmatpush1.msra.mxu0 %v108
  %142 = vmatprep.subr.mxu0 0.0
  %143 = vmatpush1.msra.mxu0 %v107
  %144 = vmatprep.subr.mxu0 0.0
  %145 = vmatpush1.msra.mxu0 %v106
  %146 = vmatprep.subr.mxu0 0.0
  %147 = vmatpush2.msra.mxu0 0.0
  %148 = vmatprep.subr.mxu0 0.0
  %149 = vmatpush2.msra.mxu0 0.0
  %150 = vmatprep.subr.mxu0 0.0
  %151 = vmatpush2.msra.mxu0 0.0
  %152 = vmatprep.subr.mxu0 0.0
  %153 = vmatpush2.msra.mxu0 0.0
  %154 = vmatprep.subr.mxu0 0.0
  %155 = vmatpush2.msra.mxu0 0.0
  %156 = vmatprep.subr.mxu0 0.0
  %157 = vmatpush2.msra.mxu0 0.0
  %158 = vmatprep.subr.mxu0 0.0
  %159 = vmatpush2.msra.mxu0 0.0
  %160 = vmatprep.subr.mxu0 0.0
  %161 = vmatpush2.msra.mxu0 0.0
  %162 = vmatprep.subr.mxu0 0.0
  %163 = vmatpush2.msra.mxu0 0.0
  %164 = vmatprep.subr.mxu0 0.0
  %165 = vmatpush2.msra.mxu0 0.0
  %166 = vmatprep.subr.mxu0 0.0
  %167 = vmatpush2.msra.mxu0 0.0
  %168 = vmatprep.subr.mxu0 0.0
  %169 = vmatpush2.msra.mxu0 0.0
  %170 = vmatprep.subr.mxu0 0.0
  %171 = vmatpush2.msra.mxu0 0.0
  %172 = vmatprep.subr.mxu0 0.0
  %173 = vmatpush2.msra.mxu0 0.0
  %174 = vmatprep.subr.mxu0 0.0
  %175 = vmatpush2.msra.mxu0 0.0
  %176 = vmatprep.subr.mxu0 0.0
  %177 = vmatpush2.msra.mxu0 0.0
  %178 = vmatprep.mubr.f32.mxu0 0.0
  %179 = vmatmul.mubr.f32.gmra.mxu0 %v30
  %v180 = vpop.f32.mrf.mxu0
  %v181 = vadd.f32 0.0, %v180
  %v182 = vpop.f32.mrf.mxu0
  %183 = vdwg.mxu0
  %v184 = vadd.f32 %v181, 1e-20
  %v185 = vrcp.pop %v184
  %v186 = vmul.f32 %v103, %v185
  %v187 = vld [vmem:[%s3] sm:$0x3]
  %189 = vset.pattern.permute.xlu0 0
  %190 = vperm.xlu0 %189, %v187
  %v191 = vpop.permute.xlu0 %190
  %v193 = vadd.f32 %v186, %v191
  %194 = vst [vmem:[%s5] sm:$0x3] %v193
  %v195 = vld [vmem:[%s4] sm:$0x3]
  %197 = vset.pattern.permute.xlu0 0
  %198 = vperm.xlu0 %197, %v195
  %v199 = vpop.permute.xlu0 %198
  %v201 = vmul.f32 %v181, %v199
  %202 = vst [vmem:[%s6] sm:$0x3] %v201
  // Predicated region
  $region22: #{normcnn_forward.19} parent=0 // pred_check
    _
  $region23: #{normcnn_forward.19} parent=0 // pred_check_branch
    %204 = sbr.rel (0) target = $region25
  $region24: #{normcnn_forward.19} parent=0 // pred_region
    _
  $region25: #{normcnn_forward.19} parent=0 // pred_fallthru
    _
  // Predicated region
  $region26: #{normcnn_forward.19} parent=0 // pred_check
    _
  $region27: #{normcnn_forward.19} parent=0 // pred_check_branch
    %206 = sbr.rel (0) target = $region29
  $region28: #{normcnn_forward.19} parent=0 // pred_region
    _
  $region29: #{normcnn_forward.19} parent=0 // pred_fallthru
    _
  // Predicated region
  $region30: #{normcnn_forward.19} parent=0 // pred_check
    _
  $region31: #{normcnn_forward.19} parent=0 // pred_check_branch
    %208 = sbr.rel (0) target = $region33
  $region32: #{normcnn_forward.19} parent=0 // pred_region
    _
  $region33: #{normcnn_forward.19} parent=0 // pred_fallthru
    _
  // Predicated region
  $region34: #{normcnn_forward.19} parent=0 // pred_check
    _
  $region35: #{normcnn_forward.19} parent=0 // pred_check_branch
    %210 = sbr.rel (0) target = $region37
  $region36: #{normcnn_forward.19} parent=0 // pred_region
    _
  $region37: #{normcnn_forward.19} parent=0 // pred_fallthru
    _

// kernel: normcnn_forward.20
$region0: #{normcnn_forward.20}
  #allocation0 [shape = 'u32[]', space=smem, size = 0x4, offset = 0x4, fixed_abs, tag = 'smem constant byte address 0x4 - core index']
  #allocation1 [shape = 'u32[144,128]{1,0:T(1,128)}', space=vmem, size = 0x12000, scoped, tag = 'internal scratch']
  %s0 = inlined_call_operand.vmem [shape: f32[36,512], index: 0, kind: input, shape index: {}]
  %s1 = inlined_call_operand.vmem [shape: f32[36,512], index: 1, kind: input, shape index: {}]
  %s2 = inlined_call_operand.vmem [shape: f32[2,36], index: 2, kind: input, shape index: {}]
  %s3 = inlined_call_operand.vmem [shape: f32[2,1], index: 3, kind: input, shape index: {}]
  %s4 = inlined_call_operand.vmem [shape: f32[2,1], index: 4, kind: input, shape index: {}]
  %s5 = inlined_call_operand.vmem [shape: f32[2,512], index: 5, kind: output, shape index: {0}]
  %s6 = inlined_call_operand.vmem [shape: f32[2,512], index: 6, kind: output, shape index: {1}]
  %7 = xla_tuple %s5, %s6
  %s8 = sld [smem:[#allocation0]]
  $region107: #{normcnn_forward.20} parent=0
    _
  %s10 = ssub.s32 1, %s8
  %s11 = scalar_select 0, %s10, %s8
  $region1: #{normcnn_forward.20} parent=0
    #allocation2 [shape = 'u8[81920]{0}', space=vmem, size = 0x14000, scoped, tag = 'input window, operand 0']
    #allocation3 [shape = 'u8[81920]{0}', space=vmem, size = 0x14000, scoped, tag = 'input window, operand 1']
    loop: start=0, step=1, limit=4
    $region2: #{normcnn_forward.20} parent=1 // loop_pre_header
      _
    $region3: #{normcnn_forward.20} parent=1 // loop_header
      %s13 = sphi 0, %s17
      %p14 = scmp.ge.s32.totalorder %s13, 4
      %s23 = sphi 0, %s25
      %s26 = sphi 0, %s23
      %s27 = sphi 0, %s26
      %s43 = sphi 0, %s27
      %s49 = sphi 0, %s51
      %s52 = sphi 0, %s49
      %s53 = sphi 0, %s52
      %s69 = sphi 0, %s53
      %s73 = sphi 0, %s73
      %s75 = sphi 0, %s73
      %s76 = sphi 0, %s75
      %s90 = sphi 0, %s76
      %s94 = sphi 0, %s94
      %s96 = sphi 0, %s94
      %s97 = sphi 0, %s96
      %s111 = sphi 0, %s97
      %s115 = sphi 0, %s115
      %s117 = sphi 0, %s115
      %s118 = sphi 0, %s117
      %s132 = sphi 0, %s118
      %s138 = sphi 0, %s140
      %s141 = sphi 0, %s138
      %s142 = sphi 0, %s141
      %s158 = sphi 0, %s142
      %s164 = sphi 0, %s166
      %s167 = sphi 0, %s164
      %s168 = sphi 0, %s167
      %s184 = sphi 0, %s168
    $region4: #{normcnn_forward.20} parent=1 // loop_header_branch
      %16 = sbr.rel (%p14) target = $region8
    $region5: #{normcnn_forward.20} parent=1 // loop_body
      %s18 = ssub.s32 %s13, 1
      %s19 = ssub.s32 %s13, 2
      %s20 = sadd.s32 %s13, 1
      %s21 = ssub.s32 %s13, %s20
      %p22 = scmp.eq.s32.totalorder %s21, 0
      %s24 = sadd.s32 %s23, 1
      %s25 = scalar_select %p22, %s23, %s24
      %p28 = pneg %p22
      %p29 = scmp.eq.s32.totalorder %s13, 1
      %p30 = por %p28, %p29
      %p31 = scmp.ne.s32.totalorder %s23, %s26
      %p32 = scmp.eq.s32.totalorder %s13, 0
      %p33 = por %p31, %p32
      %p34 = scmp.ne.s32.totalorder %s23, %s26
      %p35 = scmp.eq.s32.totalorder %s18, 1
      %p36 = por %p34, %p35
      %p37 = scmp.ne.s32.totalorder %s26, %s27
      %p38 = scmp.eq.s32.totalorder %s18, 0
      %p39 = por %p37, %p38
      %p40 = scmp.ne.s32.totalorder %s26, %s27
      %p41 = scmp.eq.s32.totalorder %s19, 1
      %p42 = por %p40, %p41
      %p44 = scmp.ne.s32.totalorder %s27, %s43
      %p45 = scmp.eq.s32.totalorder %s19, 0
      %p46 = por %p44, %p45
      %s47 = ssub.s32 %s13, %s20
      %p48 = scmp.eq.s32.totalorder %s47, 0
      %s50 = sadd.s32 %s49, 1
      %s51 = scalar_select %p48, %s49, %s50
      %p54 = pneg %p48
      %p55 = scmp.eq.s32.totalorder %s13, 1
      %p56 = por %p54, %p55
      %p57 = scmp.ne.s32.totalorder %s49, %s52
      %p58 = scmp.eq.s32.totalorder %s13, 0
      %p59 = por %p57, %p58
      %p60 = scmp.ne.s32.totalorder %s49, %s52
      %p61 = scmp.eq.s32.totalorder %s18, 1
      %p62 = por %p60, %p61
      %p63 = scmp.ne.s32.totalorder %s52, %s53
      %p64 = scmp.eq.s32.totalorder %s18, 0
      %p65 = por %p63, %p64
      %p66 = scmp.ne.s32.totalorder %s52, %s53
      %p67 = scmp.eq.s32.totalorder %s19, 1
      %p68 = por %p66, %p67
      %p70 = scmp.ne.s32.totalorder %s53, %s69
      %p71 = scmp.eq.s32.totalorder %s19, 0
      %p72 = por %p70, %p71
      %s74 = sadd.s32 %s73, 1
      %p77 = scmp.eq.s32.totalorder %s13, 1
      %p78 = scmp.ne.s32.totalorder %s73, %s75
      %p79 = scmp.eq.s32.totalorder %s13, 0
      %p80 = por %p78, %p79
      %p81 = scmp.ne.s32.totalorder %s73, %s75
      %p82 = scmp.eq.s32.totalorder %s18, 1
      %p83 = por %p81, %p82
      %p84 = scmp.ne.s32.totalorder %s75, %s76
      %p85 = scmp.eq.s32.totalorder %s18, 0
      %p86 = por %p84, %p85
      %p87 = scmp.ne.s32.totalorder %s75, %s76
      %p88 = scmp.eq.s32.totalorder %s19, 1
      %p89 = por %p87, %p88
      %p91 = scmp.ne.s32.totalorder %s76, %s90
      %p92 = scmp.eq.s32.totalorder %s19, 0
      %p93 = por %p91, %p92
      %s95 = sadd.s32 %s94, 1
      %p98 = scmp.eq.s32.totalorder %s13, 1
      %p99 = scmp.ne.s32.totalorder %s94, %s96
      %p100 = scmp.eq.s32.totalorder %s13, 0
      %p101 = por %p99, %p100
      %p102 = scmp.ne.s32.totalorder %s94, %s96
      %p103 = scmp.eq.s32.totalorder %s18, 1
      %p104 = por %p102, %p103
      %p105 = scmp.ne.s32.totalorder %s96, %s97
      %p106 = scmp.eq.s32.totalorder %s18, 0
      %p107 = por %p105, %p106
      %p108 = scmp.ne.s32.totalorder %s96, %s97
      %p109 = scmp.eq.s32.totalorder %s19, 1
      %p110 = por %p108, %p109
      %p112 = scmp.ne.s32.totalorder %s97, %s111
      %p113 = scmp.eq.s32.totalorder %s19, 0
      %p114 = por %p112, %p113
      %s116 = sadd.s32 %s115, 1
      %p119 = scmp.eq.s32.totalorder %s13, 1
      %p120 = scmp.ne.s32.totalorder %s115, %s117
      %p121 = scmp.eq.s32.totalorder %s13, 0
      %p122 = por %p120, %p121
      %p123 = scmp.ne.s32.totalorder %s115, %s117
      %p124 = scmp.eq.s32.totalorder %s18, 1
      %p125 = por %p123, %p124
      %p126 = scmp.ne.s32.totalorder %s117, %s118
      %p127 = scmp.eq.s32.totalorder %s18, 0
      %p128 = por %p126, %p127
      %p129 = scmp.ne.s32.totalorder %s117, %s118
      %p130 = scmp.eq.s32.totalorder %s19, 1
      %p131 = por %p129, %p130
      %p133 = scmp.ne.s32.totalorder %s118, %s132
      %p134 = scmp.eq.s32.totalorder %s19, 0
      %p135 = por %p133, %p134
      %s136 = ssub.s32 %s13, %s20
      %p137 = scmp.eq.s32.totalorder %s136, 0
      %s139 = sadd.s32 %s138, 1
      %s140 = scalar_select %p137, %s138, %s139
      %p143 = pneg %p137
      %p144 = scmp.eq.s32.totalorder %s13, 1
      %p145 = por %p143, %p144
      %p146 = scmp.ne.s32.totalorder %s138, %s141
      %p147 = scmp.eq.s32.totalorder %s13, 0
      %p148 = por %p146, %p147
      %p149 = scmp.ne.s32.totalorder %s138, %s141
      %p150 = scmp.eq.s32.totalorder %s18, 1
      %p151 = por %p149, %p150
      %p152 = scmp.ne.s32.totalorder %s141, %s142
      %p153 = scmp.eq.s32.totalorder %s18, 0
      %p154 = por %p152, %p153
      %p155 = scmp.ne.s32.totalorder %s141, %s142
      %p156 = scmp.eq.s32.totalorder %s19, 1
      %p157 = por %p155, %p156
      %p159 = scmp.ne.s32.totalorder %s142, %s158
      %p160 = scmp.eq.s32.totalorder %s19, 0
      %p161 = por %p159, %p160
      %s162 = ssub.s32 %s13, %s20
      %p163 = scmp.eq.s32.totalorder %s162, 0
      %s165 = sadd.s32 %s164, 1
      %s166 = scalar_select %p163, %s164, %s165
      %p169 = pneg %p163
      %p170 = scmp.eq.s32.totalorder %s13, 1
      %p171 = por %p169, %p170
      %p172 = scmp.ne.s32.totalorder %s164, %s167
      %p173 = scmp.eq.s32.totalorder %s13, 0
      %p174 = por %p172, %p173
      %p175 = scmp.ne.s32.totalorder %s164, %s167
      %p176 = scmp.eq.s32.totalorder %s18, 1
      %p177 = por %p175, %p176
      %p178 = scmp.ne.s32.totalorder %s167, %s168
      %p179 = scmp.eq.s32.totalorder %s18, 0
      %p180 = por %p178, %p179
      %p181 = scmp.ne.s32.totalorder %s167, %s168
      %p182 = scmp.eq.s32.totalorder %s19, 1
      %p183 = por %p181, %p182
      %p185 = scmp.ne.s32.totalorder %s168, %s184
      %p186 = scmp.eq.s32.totalorder %s19, 0
      %p187 = por %p185, %p186
      %p188 = scmp.le.s32.totalorder 1, %s13
      %p189 = scmp.lt.s32.totalorder %s13, 3
      %p190 = pnand %p188, %p189
      %p191 = pneg %p190
      // Predicated region
      $region9: #{normcnn_forward.20} parent=5 // pred_check
        _
      $region10: #{normcnn_forward.20} parent=5 // pred_check_branch
        %193 = sbr.rel (%p190) target = $region12
      $region11: #{normcnn_forward.20} parent=5 // pred_region
        %s194 = ssub.s32 %s13, 1
        // Predicated region
        $region13: #{normcnn_forward.20} parent=11 // pred_check
          %p195 = pneg %p86
        $region14: #{normcnn_forward.20} parent=11 // pred_check_branch
          %197 = sbr.rel (%p195) target = $region16
        $region15: #{normcnn_forward.20} parent=11 // pred_region
          _
        $region16: #{normcnn_forward.20} parent=11 // pred_fallthru
          _
        // Predicated region
        $region17: #{normcnn_forward.20} parent=11 // pred_check
          %p198 = pneg %p107
        $region18: #{normcnn_forward.20} parent=11 // pred_check_branch
          %200 = sbr.rel (%p198) target = $region20
        $region19: #{normcnn_forward.20} parent=11 // pred_region
          _
        $region20: #{normcnn_forward.20} parent=11 // pred_fallthru
          _
        // Predicated region
        $region21: #{normcnn_forward.20} parent=11 // pred_check
          %p201 = pneg %p128
        $region22: #{normcnn_forward.20} parent=11 // pred_check_branch
          %203 = sbr.rel (%p201) target = $region24
        $region23: #{normcnn_forward.20} parent=11 // pred_region
          _
        $region24: #{normcnn_forward.20} parent=11 // pred_fallthru
          _
      $region12: #{normcnn_forward.20} parent=5 // pred_fallthru
        _
      %p204 = scmp.lt.s32.totalorder %s13, 2
      // Predicated region
      $region25: #{normcnn_forward.20} parent=5 // pred_check
        %p205 = pneg %p204
      $region26: #{normcnn_forward.20} parent=5 // pred_check_branch
        %207 = sbr.rel (%p205) target = $region28
      $region27: #{normcnn_forward.20} parent=5 // pred_region
        // Predicated region
        $region29: #{normcnn_forward.20} parent=27 // pred_check
          %p208 = pneg %p33
        $region30: #{normcnn_forward.20} parent=27 // pred_check_branch
          %210 = sbr.rel (%p208) target = $region32
        $region31: #{normcnn_forward.20} parent=27 // pred_region
          %s211 = sand.u32 %s23, 1
          %s212 = sand.u32 %s23, 1
          %s213 = smul.addr %s212, 80
          %s214 = scalar_lea.vmem [#allocation2], %s213
          %s215 = smul.u32 2, %s13
          %s216 = smul.addr %s215, 8
          %s217 = scalar_lea.vmem %s0, %s216
          // Predicated region
          $region33: #{normcnn_forward.20} parent=31 // pred_check
            _
          $region34: #{normcnn_forward.20} parent=31 // pred_check_branch
            %219 = sbr.rel (0) target = $region36
          $region35: #{normcnn_forward.20} parent=31 // pred_region
            // Predicated region
            $region37: #{normcnn_forward.20} parent=35 // pred_check
              _
            $region38: #{normcnn_forward.20} parent=35 // pred_check_branch
              %221 = sbr.rel (0) target = $region40
            $region39: #{normcnn_forward.20} parent=35 // pred_region
              loop: start=0, step=1, limit=1
              $region41: #{normcnn_forward.20} parent=39 // loop_pre_header
                _
              $region42: #{normcnn_forward.20} parent=39 // loop_header
                %s223 = sphi 0, %s227
                %p224 = scmp.ge.s32.totalorder %s223, 1
                %s228 = sphi %s217, %s217
                %s229 = sphi %s214, %s214
              $region43: #{normcnn_forward.20} parent=39 // loop_header_branch
                %226 = sbr.rel (%p224) target = $region47
              $region44: #{normcnn_forward.20} parent=39 // loop_body
                %v230 = vld [vmem:[%s228] sm:$0xff]
                %231 = vst [vmem:[%s229] sm:$0xff] %v230
                %v232 = vld [vmem:[%s228 + $0x8] sm:$0xff]
                %233 = vst [vmem:[%s229 + $0x8] sm:$0xff] %v232
                %v234 = vld [vmem:[%s228 + $0x20] sm:$0xff]
                %235 = vst [vmem:[%s229 + $0x10] sm:$0xff] %v234
                %v236 = vld [vmem:[%s228 + $0x28] sm:$0xff]
                %237 = vst [vmem:[%s229 + $0x18] sm:$0xff] %v236
                %v238 = vld [vmem:[%s228 + $0x40] sm:$0xff]
                %239 = vst [vmem:[%s229 + $0x20] sm:$0xff] %v238
                %v240 = vld [vmem:[%s228 + $0x48] sm:$0xff]
                %241 = vst [vmem:[%s229 + $0x28] sm:$0xff] %v240
                %v242 = vld [vmem:[%s228 + $0x60] sm:$0xff]
                %243 = vst [vmem:[%s229 + $0x30] sm:$0xff] %v242
                %v244 = vld [vmem:[%s228 + $0x68] sm:$0xff]
                %245 = vst [vmem:[%s229 + $0x38] sm:$0xff] %v244
                %v246 = vld [vmem:[%s228 + $0x80] sm:$0xff]
                %247 = vst [vmem:[%s229 + $0x40] sm:$0xff] %v246
                %v248 = vld [vmem:[%s228 + $0x88] sm:$0xff]
                %249 = vst [vmem:[%s229 + $0x48] sm:$0xff] %v248
              $region45: #{normcnn_forward.20} parent=39 // loop_footer
                %s227 = sadd.s32 1, %s223
              $region46: #{normcnn_forward.20} parent=39 // loop_footer_branch
                %222 = sbr.rel target = $region42
              $region47: #{normcnn_forward.20} parent=39 // loop_exit
                _
            $region40: #{normcnn_forward.20} parent=35 // pred_fallthru
              _
            // Predicated region
            $region48: #{normcnn_forward.20} parent=35 // pred_check
              _
            $region49: #{normcnn_forward.20} parent=35 // pred_check_branch
              %251 = sbr.rel target = $region51
            $region50: #{normcnn_forward.20} parent=35 // pred_region
              _
            $region51: #{normcnn_forward.20} parent=35 // pred_fallthru
              _
          $region36: #{normcnn_forward.20} parent=31 // pred_fallthru
            _
          %252 = vnop
        $region32: #{normcnn_forward.20} parent=27 // pred_fallthru
          _
        // Predicated region
        $region52: #{normcnn_forward.20} parent=27 // pred_check
          %p253 = pneg %p59
        $region53: #{normcnn_forward.20} parent=27 // pred_check_branch
          %255 = sbr.rel (%p253) target = $region55
        $region54: #{normcnn_forward.20} parent=27 // pred_region
          %s256 = sand.u32 %s49, 1
          %s257 = sand.u32 %s49, 1
          %s258 = smul.addr %s257, 80
          %s259 = scalar_lea.vmem [#allocation3], %s258
          %s260 = smul.u32 2, %s13
          %s261 = smul.addr %s260, 8
          %s262 = scalar_lea.vmem %s1, %s261
          // Predicated region
          $region56: #{normcnn_forward.20} parent=54 // pred_check
            _
          $region57: #{normcnn_forward.20} parent=54 // pred_check_branch
            %264 = sbr.rel (0) target = $region59
          $region58: #{normcnn_forward.20} parent=54 // pred_region
            // Predicated region
            $region60: #{normcnn_forward.20} parent=58 // pred_check
              _
            $region61: #{normcnn_forward.20} parent=58 // pred_check_branch
              %266 = sbr.rel (0) target = $region63
            $region62: #{normcnn_forward.20} parent=58 // pred_region
              loop: start=0, step=1, limit=1
              $region64: #{normcnn_forward.20} parent=62 // loop_pre_header
                _
              $region65: #{normcnn_forward.20} parent=62 // loop_header
                %s268 = sphi 0, %s272
                %p269 = scmp.ge.s32.totalorder %s268, 1
                %s273 = sphi %s262, %s262
                %s274 = sphi %s259, %s259
              $region66: #{normcnn_forward.20} parent=62 // loop_header_branch
                %271 = sbr.rel (%p269) target = $region70
              $region67: #{normcnn_forward.20} parent=62 // loop_body
                %v275 = vld [vmem:[%s273] sm:$0xff]
                %276 = vst [vmem:[%s274] sm:$0xff] %v275
                %v277 = vld [vmem:[%s273 + $0x8] sm:$0xff]
                %278 = vst [vmem:[%s274 + $0x8] sm:$0xff] %v277
                %v279 = vld [vmem:[%s273 + $0x20] sm:$0xff]
                %280 = vst [vmem:[%s274 + $0x10] sm:$0xff] %v279
                %v281 = vld [vmem:[%s273 + $0x28] sm:$0xff]
                %282 = vst [vmem:[%s274 + $0x18] sm:$0xff] %v281
                %v283 = vld [vmem:[%s273 + $0x40] sm:$0xff]
                %284 = vst [vmem:[%s274 + $0x20] sm:$0xff] %v283
                %v285 = vld [vmem:[%s273 + $0x48] sm:$0xff]
                %286 = vst [vmem:[%s274 + $0x28] sm:$0xff] %v285
                %v287 = vld [vmem:[%s273 + $0x60] sm:$0xff]
                %288 = vst [vmem:[%s274 + $0x30] sm:$0xff] %v287
                %v289 = vld [vmem:[%s273 + $0x68] sm:$0xff]
                %290 = vst [vmem:[%s274 + $0x38] sm:$0xff] %v289
                %v291 = vld [vmem:[%s273 + $0x80] sm:$0xff]
                %292 = vst [vmem:[%s274 + $0x40] sm:$0xff] %v291
                %v293 = vld [vmem:[%s273 + $0x88] sm:$0xff]
                %294 = vst [vmem:[%s274 + $0x48] sm:$0xff] %v293
              $region68: #{normcnn_forward.20} parent=62 // loop_footer
                %s272 = sadd.s32 1, %s268
              $region69: #{normcnn_forward.20} parent=62 // loop_footer_branch
                %267 = sbr.rel target = $region65
              $region70: #{normcnn_forward.20} parent=62 // loop_exit
                _
            $region63: #{normcnn_forward.20} parent=58 // pred_fallthru
              _
            // Predicated region
            $region71: #{normcnn_forward.20} parent=58 // pred_check
              _
            $region72: #{normcnn_forward.20} parent=58 // pred_check_branch
              %296 = sbr.rel target = $region74
            $region73: #{normcnn_forward.20} parent=58 // pred_region
              _
            $region74: #{normcnn_forward.20} parent=58 // pred_fallthru
              _
          $region59: #{normcnn_forward.20} parent=54 // pred_fallthru
            _
          %297 = vnop
        $region55: #{normcnn_forward.20} parent=27 // pred_fallthru
          _
      $region28: #{normcnn_forward.20} parent=5 // pred_fallthru
        _
      %p298 = scmp.le.s32.totalorder 1, %s13
      %p299 = scmp.lt.s32.totalorder %s13, 3
      %p300 = pnand %p298, %p299
      %p301 = pneg %p300
      // Predicated region
      $region75: #{normcnn_forward.20} parent=5 // pred_check
        _
      $region76: #{normcnn_forward.20} parent=5 // pred_check_branch
        %303 = sbr.rel (%p300) target = $region78
      $region77: #{normcnn_forward.20} parent=5 // pred_region
        %s304 = ssub.s32 %s13, 1
        %s305 = sand.u32 %s26, 1
        %s306 = sand.u32 %s26, 1
        %s307 = smul.addr %s306, 80
        %s308 = scalar_lea.vmem [#allocation2], %s307
        // Predicated region
        $region79: #{normcnn_forward.20} parent=77 // pred_check
          %p309 = pneg %p39
        $region80: #{normcnn_forward.20} parent=77 // pred_check_branch
          %311 = sbr.rel (%p309) target = $region82
        $region81: #{normcnn_forward.20} parent=77 // pred_region
          _
        $region82: #{normcnn_forward.20} parent=77 // pred_fallthru
          _
        %s312 = sand.u32 %s52, 1
        %s313 = sand.u32 %s52, 1
        %s314 = smul.addr %s313, 80
        %s315 = scalar_lea.vmem [#allocation3], %s314
        // Predicated region
        $region83: #{normcnn_forward.20} parent=77 // pred_check
          %p316 = pneg %p65
        $region84: #{normcnn_forward.20} parent=77 // pred_check_branch
          %318 = sbr.rel (%p316) target = $region86
        $region85: #{normcnn_forward.20} parent=77 // pred_region
          _
        $region86: #{normcnn_forward.20} parent=77 // pred_fallthru
          _
        %s319 = sand.u32 %s26, 1
        %s320 = sand.u32 %s26, 1
        %s321 = smul.addr %s320, 80
        %s322 = scalar_lea.vmem [#allocation2], %s321
        %p323 = pneg %p39
        %p324 = pneg %p36
        %s325 = sand.u32 %s52, 1
        %s326 = sand.u32 %s52, 1
        %s327 = smul.addr %s326, 80
        %s328 = scalar_lea.vmem [#allocation3], %s327
        %p329 = pneg %p65
        %p330 = pneg %p62
        %p331 = pneg %p86
        %p332 = pneg %p83
        %p333 = pneg %p107
        %p334 = pneg %p104
        %p335 = pneg %p128
        %p336 = pneg %p125
        %p337 = pneg %p154
        %p338 = pneg %p151
        %s339 = smul.u32 2, %s18
        %p340 = scmp.lt.s32.totalorder %s339, 3
        %s341 = scalar_select %p340, %s339, 3
        %s342 = smul.addr %s341, 2
        %s343 = scalar_lea.vmem %s5, %s342
        %p344 = pneg %p180
        %p345 = pneg %p177
        %s346 = smul.u32 2, %s18
        %p347 = scmp.lt.s32.totalorder %s346, 3
        %s348 = scalar_select %p347, %s346, 3
        %s349 = smul.addr %s348, 2
        %s350 = scalar_lea.vmem %s6, %s349
        %s351 = smul.u32 2, %s18
        %s352 = smul.u32 2, %s18
        %s353 = smul.u32 2, %s18
        %p354 = scmp.lt.s32.totalorder %s353, 3
        %s355 = scalar_select %p354, %s353, 3
        %s356 = smul.addr %s355, 2
        %s357 = scalar_lea.vmem %s5, %s356
        %s358 = smul.u32 2, %s18
        %s359 = smul.u32 2, %s18
        %p360 = scmp.lt.s32.totalorder %s359, 3
        %s361 = scalar_select %p360, %s359, 3
        %s362 = smul.addr %s361, 2
        %s363 = scalar_lea.vmem %s6, %s362
        %s364 = smul.u32 2, %s18
        %v365 = vld [vmem:[%s2] sm:$0x3]
        %v366 = vld [vmem:[%s308] sm:$0xff]
        %v367 = vld [vmem:[%s308 + $0x8] sm:$0xff]
        %v368 = vld [vmem:[%s308 + $0x10] sm:$0xff]
        %v369 = vld [vmem:[%s308 + $0x18] sm:$0xff]
        %v370 = vld [vmem:[%s308 + $0x20] sm:$0xff]
        %v371 = vld [vmem:[%s308 + $0x28] sm:$0xff]
        %v372 = vld [vmem:[%s308 + $0x30] sm:$0xff]
        %v373 = vld [vmem:[%s308 + $0x38] sm:$0xff]
        %v374 = vld [vmem:[%s308 + $0x40] sm:$0xf]
        %v375 = vld [vmem:[%s308 + $0x48] sm:$0xf]
        %vm376 = vcmask 293888
        %v378 = vsel %vm376, %v365, 0
        %vm380 = vcmask 1043456
        %v382 = vsel %vm380, %v374, 0
        %v385 = vsel %vm380, %v375, 0
        %387 = vmatprep.subr.mxu0 0.0
        %388 = vmatpush1.msra.mxu0 0.0
        %389 = vmatprep.subr.mxu0 0.0
        %390 = vmatpush1.msra.mxu0 0.0
        %391 = vmatprep.subr.mxu0 0.0
        %392 = vmatpush1.msra.mxu0 0.0
        %393 = vmatprep.subr.mxu0 0.0
        %394 = vmatpush1.msra.mxu0 0.0
        %395 = vmatprep.subr.mxu0 0.0
        %396 = vmatpush1.msra.mxu0 0.0
        %397 = vmatprep.subr.mxu0 0.0
        %398 = vmatpush1.msra.mxu0 0.0
        %399 = vmatprep.subr.mxu0 0.0
        %400 = vmatpush1.msra.mxu0 0.0
        %401 = vmatprep.subr.mxu0 0.0
        %402 = vmatpush1.msra.mxu0 0.0
        %403 = vmatprep.subr.mxu0 0.0
        %404 = vmatpush1.msra.mxu0 0.0
        %405 = vmatprep.subr.mxu0 0.0
        %406 = vmatpush1.msra.mxu0 0.0
        %407 = vmatprep.subr.mxu0 0.0
        %408 = vmatpush1.msra.mxu0 0.0
        %409 = vmatprep.subr.mxu0 %v385
        %410 = vmatpush1.msra.mxu0 %v382
        %411 = vmatprep.subr.mxu0 %v373
        %412 = vmatpush1.msra.mxu0 %v372
        %413 = vmatprep.subr.mxu0 %v371
        %414 = vmatpush1.msra.mxu0 %v370
        %415 = vmatprep.subr.mxu0 %v369
        %416 = vmatpush1.msra.mxu0 %v368
        %417 = vmatprep.subr.mxu0 %v367
        %418 = vmatpush1.msra.mxu0 %v366
        %419 = vmatprep.subr.mxu0 0.0
        %420 = vmatpush2.msra.mxu0 0.0
        %421 = vmatprep.subr.mxu0 0.0
        %422 = vmatpush2.msra.mxu0 0.0
        %423 = vmatprep.subr.mxu0 0.0
        %424 = vmatpush2.msra.mxu0 0.0
        %425 = vmatprep.subr.mxu0 0.0
        %426 = vmatpush2.msra.mxu0 0.0
        %427 = vmatprep.subr.mxu0 0.0
        %428 = vmatpush2.msra.mxu0 0.0
        %429 = vmatprep.subr.mxu0 0.0
        %430 = vmatpush2.msra.mxu0 0.0
        %431 = vmatprep.subr.mxu0 0.0
        %432 = vmatpush2.msra.mxu0 0.0
        %433 = vmatprep.subr.mxu0 0.0
        %434 = vmatpush2.msra.mxu0 0.0
        %435 = vmatprep.subr.mxu0 0.0
        %436 = vmatpush2.msra.mxu0 0.0
        %437 = vmatprep.subr.mxu0 0.0
        %438 = vmatpush2.msra.mxu0 0.0
        %439 = vmatprep.subr.mxu0 0.0
        %440 = vmatpush2.msra.mxu0 0.0
        %441 = vmatprep.subr.mxu0 0.0
        %442 = vmatpush2.msra.mxu0 0.0
        %443 = vmatprep.subr.mxu0 0.0
        %444 = vmatpush2.msra.mxu0 0.0
        %445 = vmatprep.subr.mxu0 0.0
        %446 = vmatpush2.msra.mxu0 0.0
        %447 = vmatprep.subr.mxu0 0.0
        %448 = vmatpush2.msra.mxu0 0.0
        %449 = vmatprep.subr.mxu0 0.0
        %450 = vmatpush2.msra.mxu0 0.0
        %451 = vmatprep.mubr.f32.mxu0 0.0
        %452 = vmatmul.mubr.f32.gmra.mxu0 %v378
        %v453 = vpop.f32.mrf.mxu0
        %v454 = vadd.f32 0.0, %v453
        %v455 = vpop.f32.mrf.mxu0
        %v456 = vadd.f32 0.0, %v455
        %457 = vdwg.mxu0
        %v458 = vld [vmem:[%s315] sm:$0xff]
        %v459 = vld [vmem:[%s315 + $0x8] sm:$0xff]
        %v460 = vld [vmem:[%s315 + $0x10] sm:$0xff]
        %v461 = vld [vmem:[%s315 + $0x18] sm:$0xff]
        %v462 = vld [vmem:[%s315 + $0x20] sm:$0xff]
        %v463 = vld [vmem:[%s315 + $0x28] sm:$0xff]
        %v464 = vld [vmem:[%s315 + $0x30] sm:$0xff]
        %v465 = vld [vmem:[%s315 + $0x38] sm:$0xff]
        %v466 = vld [vmem:[%s315 + $0x40] sm:$0xf]
        %v467 = vld [vmem:[%s315 + $0x48] sm:$0xf]
        %v469 = vsel %vm380, %v466, 0
        %v472 = vsel %vm380, %v467, 0
        %474 = vmatprep.subr.mxu0 0.0
        %475 = vmatpush1.msra.mxu0 0.0
        %476 = vmatprep.subr.mxu0 0.0
        %477 = vmatpush1.msra.mxu0 0.0
        %478 = vmatprep.subr.mxu0 0.0
        %479 = vmatpush1.msra.mxu0 0.0
        %480 = vmatprep.subr.mxu0 0.0
        %481 = vmatpush1.msra.mxu0 0.0
        %482 = vmatprep.subr.mxu0 0.0
        %483 = vmatpush1.msra.mxu0 0.0
        %484 = vmatprep.subr.mxu0 0.0
        %485 = vmatpush1.msra.mxu0 0.0
        %486 = vmatprep.subr.mxu0 0.0
        %487 = vmatpush1.msra.mxu0 0.0
        %488 = vmatprep.subr.mxu0 0.0
        %489 = vmatpush1.msra.mxu0 0.0
        %490 = vmatprep.subr.mxu0 0.0
        %491 = vmatpush1.msra.mxu0 0.0
        %492 = vmatprep.subr.mxu0 0.0
        %493 = vmatpush1.msra.mxu0 0.0
        %494 = vmatprep.subr.mxu0 0.0
        %495 = vmatpush1.msra.mxu0 0.0
        %496 = vmatprep.subr.mxu0 %v472
        %497 = vmatpush1.msra.mxu0 %v469
        %498 = vmatprep.subr.mxu0 %v465
        %499 = vmatpush1.msra.mxu0 %v464
        %500 = vmatprep.subr.mxu0 %v463
        %501 = vmatpush1.msra.mxu0 %v462
        %502 = vmatprep.subr.mxu0 %v461
        %503 = vmatpush1.msra.mxu0 %v460
        %504 = vmatprep.subr.mxu0 %v459
        %505 = vmatpush1.msra.mxu0 %v458
        %506 = vmatprep.subr.mxu0 0.0
        %507 = vmatpush2.msra.mxu0 0.0
        %508 = vmatprep.subr.mxu0 0.0
        %509 = vmatpush2.msra.mxu0 0.0
        %510 = vmatprep.subr.mxu0 0.0
        %511 = vmatpush2.msra.mxu0 0.0
        %512 = vmatprep.subr.mxu0 0.0
        %513 = vmatpush2.msra.mxu0 0.0
        %514 = vmatprep.subr.mxu0 0.0
        %515 = vmatpush2.msra.mxu0 0.0
        %516 = vmatprep.subr.mxu0 0.0
        %517 = vmatpush2.msra.mxu0 0.0
        %518 = vmatprep.subr.mxu0 0.0
        %519 = vmatpush2.msra.mxu0 0.0
        %520 = vmatprep.subr.mxu0 0.0
        %521 = vmatpush2.msra.mxu0 0.0
        %522 = vmatprep.subr.mxu0 0.0
        %523 = vmatpush2.msra.mxu0 0.0
        %524 = vmatprep.subr.mxu0 0.0
        %525 = vmatpush2.msra.mxu0 0.0
        %526 = vmatprep.subr.mxu0 0.0
        %527 = vmatpush2.msra.mxu0 0.0
        %528 = vmatprep.subr.mxu0 0.0
        %529 = vmatpush2.msra.mxu0 0.0
        %530 = vmatprep.subr.mxu0 0.0
        %531 = vmatpush2.msra.mxu0 0.0
        %532 = vmatprep.subr.mxu0 0.0
        %533 = vmatpush2.msra.mxu0 0.0
        %534 = vmatprep.subr.mxu0 0.0
        %535 = vmatpush2.msra.mxu0 0.0
        %536 = vmatprep.subr.mxu0 0.0
        %537 = vmatpush2.msra.mxu0 0.0
        %538 = vmatprep.mubr.f32.mxu0 0.0
        %539 = vmatmul.mubr.f32.gmra.mxu0 %v378
        %v540 = vpop.f32.mrf.mxu0
        %v541 = vadd.f32 0.0, %v540
        %v542 = vpop.f32.mrf.mxu0
        %v543 = vadd.f32 0.0, %v542
        %544 = vdwg.mxu0
        %v545 = vadd.f32 %v541, 1e-20
        %v546 = vadd.f32 %v543, 1e-20
        %v547 = vrcp.pop %v545
        %v548 = vmul.f32 %v454, %v547
        %v549 = vrcp.pop %v546
        %v550 = vmul.f32 %v456, %v549
        %v551 = vld [vmem:[%s3] sm:$0x3]
        %553 = vset.pattern.permute.xlu0 0
        %554 = vperm.xlu0 %553, %v551
        %v555 = vpop.permute.xlu0 %554
        %v557 = vadd.f32 %v548, %v555
        %v558 = vadd.f32 %v550, %v555
        %v561 = vcombine.low %v557, %v558
        %v563 = vunpack.c.l.s4 1983009808
        %v564 = vunpack.c.0.s8 %v563
        %v565 = vlaneseq
        %v566 = vshrl.u32 %v565, 7
        %v567 = vsub.s32 %v564, %v566
        %v568 = vrot.slane %v561, %v567
        %570 = vst [vmem:[%s357] sm:$0xf] %v568
        %v571 = vld [vmem:[%s4] sm:$0x3]
        %573 = vset.pattern.permute.xlu0 0
        %574 = vperm.xlu0 %573, %v571
        %v575 = vpop.permute.xlu0 %574
        %v577 = vmul.f32 %v541, %v575
        %v578 = vmul.f32 %v543, %v575
        %v581 = vcombine.low %v577, %v578
        %v583 = vunpack.c.l.s4 1983009808
        %v584 = vunpack.c.0.s8 %v583
        %v585 = vlaneseq
        %v586 = vshrl.u32 %v585, 7
        %v587 = vsub.s32 %v584, %v586
        %v588 = vrot.slane %v581, %v587
        %590 = vst [vmem:[%s363] sm:$0xf] %v588
        %s591 = smul.u32 2, %s18
        %p592 = scmp.lt.s32.totalorder %s591, 3
        %s593 = scalar_select %p592, %s591, 3
        %s594 = smul.addr %s593, 2
        %s595 = scalar_lea.vmem %s5, %s594
        %s596 = smul.u32 2, %s18
        %p597 = scmp.lt.s32.totalorder %s596, 3
        %s598 = scalar_select %p597, %s596, 3
        %s599 = smul.addr %s598, 2
        %s600 = scalar_lea.vmem %s6, %s599
        // Predicated region
        $region87: #{normcnn_forward.20} parent=77 // pred_check
          %p601 = pneg %p151
        $region88: #{normcnn_forward.20} parent=77 // pred_check_branch
          %603 = sbr.rel (%p601) target = $region90
        $region89: #{normcnn_forward.20} parent=77 // pred_region
          %s604 = smul.u32 2, %s18
        $region90: #{normcnn_forward.20} parent=77 // pred_fallthru
          _
        // Predicated region
        $region91: #{normcnn_forward.20} parent=77 // pred_check
          %p605 = pneg %p177
        $region92: #{normcnn_forward.20} parent=77 // pred_check_branch
          %607 = sbr.rel (%p605) target = $region94
        $region93: #{normcnn_forward.20} parent=77 // pred_region
          %s608 = smul.u32 2, %s18
        $region94: #{normcnn_forward.20} parent=77 // pred_fallthru
          _
      $region78: #{normcnn_forward.20} parent=5 // pred_fallthru
        _
      %p609 = scmp.le.s32.totalorder 2, %s13
      // Predicated region
      $region95: #{normcnn_forward.20} parent=5 // pred_check
        %p610 = pneg %p609
      $region96: #{normcnn_forward.20} parent=5 // pred_check_branch
        %612 = sbr.rel (%p610) target = $region98
      $region97: #{normcnn_forward.20} parent=5 // pred_region
        %s613 = ssub.s32 %s13, 2
        // Predicated region
        $region99: #{normcnn_forward.20} parent=97 // pred_check
          %p614 = pneg %p157
        $region100: #{normcnn_forward.20} parent=97 // pred_check_branch
          %616 = sbr.rel (%p614) target = $region102
        $region101: #{normcnn_forward.20} parent=97 // pred_region
          %s617 = smul.u32 2, %s19
          %p618 = scmp.lt.s32.totalorder %s617, 3
          %s619 = scalar_select %p618, %s617, 3
          %s620 = smul.addr %s619, 2
          %s621 = scalar_lea.vmem %s5, %s620
        $region102: #{normcnn_forward.20} parent=97 // pred_fallthru
          _
        // Predicated region
        $region103: #{normcnn_forward.20} parent=97 // pred_check
          %p622 = pneg %p183
        $region104: #{normcnn_forward.20} parent=97 // pred_check_branch
          %624 = sbr.rel (%p622) target = $region106
        $region105: #{normcnn_forward.20} parent=97 // pred_region
          %s625 = smul.u32 2, %s19
          %p626 = scmp.lt.s32.totalorder %s625, 3
          %s627 = scalar_select %p626, %s625, 3
          %s628 = smul.addr %s627, 2
          %s629 = scalar_lea.vmem %s6, %s628
        $region106: #{normcnn_forward.20} parent=97 // pred_fallthru
          _
      $region98: #{normcnn_forward.20} parent=5 // pred_fallthru
        _
    $region6: #{normcnn_forward.20} parent=1 // loop_footer
      %s17 = sadd.s32 1, %s13
    $region7: #{normcnn_forward.20} parent=1 // loop_footer_branch
      %12 = sbr.rel target = $region3
    $region8: #{normcnn_forward.20} parent=1 // loop_exit
      _

// kernel: normcnn_forward.21
$region0: #{normcnn_forward.21}
  #allocation0 [shape = 'u32[]', space=smem, size = 0x4, offset = 0x4, fixed_abs, tag = 'smem constant byte address 0x4 - core index']
  #allocation1 [shape = 'u32[144,128]{1,0:T(1,128)}', space=vmem, size = 0x12000, scoped, tag = 'internal scratch']
  #allocation2 [shape = 'f32[1,1]{1,0:T(1,128)S(1)}', space=vmem, size = 0x200, scoped, tag = 'scoped memory for normcnn_forward.21']
  #allocation3 [shape = 'f32[1,1]{1,0:T(1,128)S(1)}', space=vmem, size = 0x200, scoped, tag = 'scoped memory for normcnn_forward.21']
  %s0 = inlined_call_operand.vmem [shape: f32[2,512], index: 0, kind: input, shape index: {}]
  %s1 = inlined_call_operand.vmem [shape: f32[2,512], index: 1, kind: input, shape index: {}]
  %s2 = inlined_call_operand.vmem [shape: f32[1,2], index: 2, kind: input, shape index: {}]
  %s3 = inlined_call_operand.<no memory space> [shape: f32[1,1], index: 3, kind: input, shape index: {}]
  %s4 = inlined_call_operand.<no memory space> [shape: f32[1,1], index: 4, kind: input, shape index: {}]
  %s5 = inlined_call_operand.vmem [shape: f32[1,512], index: 5, kind: output, shape index: {0}]
  %s6 = inlined_call_operand.vmem [shape: f32[1,512], index: 6, kind: output, shape index: {1}]
  %7 = xla_tuple %s5, %s6
  %s8 = sld [smem:[#allocation0]]
  $region61: #{normcnn_forward.21} parent=0
    _
  %s10 = ssub.s32 1, %s8
  %s11 = scalar_select 0, %s10, %s8
  %v12 = vstv %s3
  %13 = vst [vmem:[#allocation2] sm:$0x1] %v12
  %v14 = vstv %s4
  %15 = vst [vmem:[#allocation3] sm:$0x1] %v14
  loop: start=0, step=1, limit=4
  $region2: #{normcnn_forward.21} parent=0 // loop_pre_header
    _
  $region3: #{normcnn_forward.21} parent=0 // loop_header
    %s17 = sphi 0, %s21
    %p18 = scmp.ge.s32.totalorder %s17, 4
    %s27 = sphi 0, %s29
    %s30 = sphi 0, %s27
    %s31 = sphi 0, %s30
    %s47 = sphi 0, %s31
    %s53 = sphi 0, %s55
    %s56 = sphi 0, %s53
    %s57 = sphi 0, %s56
    %s73 = sphi 0, %s57
    %s77 = sphi 0, %s77
    %s79 = sphi 0, %s77
    %s80 = sphi 0, %s79
    %s94 = sphi 0, %s80
    %s98 = sphi 0, %s98
    %s100 = sphi 0, %s98
    %s101 = sphi 0, %s100
    %s115 = sphi 0, %s101
    %s119 = sphi 0, %s119
    %s121 = sphi 0, %s119
    %s122 = sphi 0, %s121
    %s136 = sphi 0, %s122
    %s142 = sphi 0, %s144
    %s145 = sphi 0, %s142
    %s146 = sphi 0, %s145
    %s162 = sphi 0, %s146
    %s168 = sphi 0, %s170
    %s171 = sphi 0, %s168
    %s172 = sphi 0, %s171
    %s188 = sphi 0, %s172
  $region4: #{normcnn_forward.21} parent=0 // loop_header_branch
    %20 = sbr.rel (%p18) target = $region8
  $region5: #{normcnn_forward.21} parent=0 // loop_body
    %s22 = ssub.s32 %s17, 1
    %s23 = ssub.s32 %s17, 2
    %s24 = sadd.s32 %s17, 1
    %s25 = ssub.s32 %s17, %s24
    %p26 = scmp.eq.s32.totalorder %s25, 0
    %s28 = sadd.s32 %s27, 1
    %s29 = scalar_select %p26, %s27, %s28
    %p32 = pneg %p26
    %p33 = scmp.eq.s32.totalorder %s17, 1
    %p34 = por %p32, %p33
    %p35 = scmp.ne.s32.totalorder %s27, %s30
    %p36 = scmp.eq.s32.totalorder %s17, 0
    %p37 = por %p35, %p36
    %p38 = scmp.ne.s32.totalorder %s27, %s30
    %p39 = scmp.eq.s32.totalorder %s22, 1
    %p40 = por %p38, %p39
    %p41 = scmp.ne.s32.totalorder %s30, %s31
    %p42 = scmp.eq.s32.totalorder %s22, 0
    %p43 = por %p41, %p42
    %p44 = scmp.ne.s32.totalorder %s30, %s31
    %p45 = scmp.eq.s32.totalorder %s23, 1
    %p46 = por %p44, %p45
    %p48 = scmp.ne.s32.totalorder %s31, %s47
    %p49 = scmp.eq.s32.totalorder %s23, 0
    %p50 = por %p48, %p49
    %s51 = ssub.s32 %s17, %s24
    %p52 = scmp.eq.s32.totalorder %s51, 0
    %s54 = sadd.s32 %s53, 1
    %s55 = scalar_select %p52, %s53, %s54
    %p58 = pneg %p52
    %p59 = scmp.eq.s32.totalorder %s17, 1
    %p60 = por %p58, %p59
    %p61 = scmp.ne.s32.totalorder %s53, %s56
    %p62 = scmp.eq.s32.totalorder %s17, 0
    %p63 = por %p61, %p62
    %p64 = scmp.ne.s32.totalorder %s53, %s56
    %p65 = scmp.eq.s32.totalorder %s22, 1
    %p66 = por %p64, %p65
    %p67 = scmp.ne.s32.totalorder %s56, %s57
    %p68 = scmp.eq.s32.totalorder %s22, 0
    %p69 = por %p67, %p68
    %p70 = scmp.ne.s32.totalorder %s56, %s57
    %p71 = scmp.eq.s32.totalorder %s23, 1
    %p72 = por %p70, %p71
    %p74 = scmp.ne.s32.totalorder %s57, %s73
    %p75 = scmp.eq.s32.totalorder %s23, 0
    %p76 = por %p74, %p75
    %s78 = sadd.s32 %s77, 1
    %p81 = scmp.eq.s32.totalorder %s17, 1
    %p82 = scmp.ne.s32.totalorder %s77, %s79
    %p83 = scmp.eq.s32.totalorder %s17, 0
    %p84 = por %p82, %p83
    %p85 = scmp.ne.s32.totalorder %s77, %s79
    %p86 = scmp.eq.s32.totalorder %s22, 1
    %p87 = por %p85, %p86
    %p88 = scmp.ne.s32.totalorder %s79, %s80
    %p89 = scmp.eq.s32.totalorder %s22, 0
    %p90 = por %p88, %p89
    %p91 = scmp.ne.s32.totalorder %s79, %s80
    %p92 = scmp.eq.s32.totalorder %s23, 1
    %p93 = por %p91, %p92
    %p95 = scmp.ne.s32.totalorder %s80, %s94
    %p96 = scmp.eq.s32.totalorder %s23, 0
    %p97 = por %p95, %p96
    %s99 = sadd.s32 %s98, 1
    %p102 = scmp.eq.s32.totalorder %s17, 1
    %p103 = scmp.ne.s32.totalorder %s98, %s100
    %p104 = scmp.eq.s32.totalorder %s17, 0
    %p105 = por %p103, %p104
    %p106 = scmp.ne.s32.totalorder %s98, %s100
    %p107 = scmp.eq.s32.totalorder %s22, 1
    %p108 = por %p106, %p107
    %p109 = scmp.ne.s32.totalorder %s100, %s101
    %p110 = scmp.eq.s32.totalorder %s22, 0
    %p111 = por %p109, %p110
    %p112 = scmp.ne.s32.totalorder %s100, %s101
    %p113 = scmp.eq.s32.totalorder %s23, 1
    %p114 = por %p112, %p113
    %p116 = scmp.ne.s32.totalorder %s101, %s115
    %p117 = scmp.eq.s32.totalorder %s23, 0
    %p118 = por %p116, %p117
    %s120 = sadd.s32 %s119, 1
    %p123 = scmp.eq.s32.totalorder %s17, 1
    %p124 = scmp.ne.s32.totalorder %s119, %s121
    %p125 = scmp.eq.s32.totalorder %s17, 0
    %p126 = por %p124, %p125
    %p127 = scmp.ne.s32.totalorder %s119, %s121
    %p128 = scmp.eq.s32.totalorder %s22, 1
    %p129 = por %p127, %p128
    %p130 = scmp.ne.s32.totalorder %s121, %s122
    %p131 = scmp.eq.s32.totalorder %s22, 0
    %p132 = por %p130, %p131
    %p133 = scmp.ne.s32.totalorder %s121, %s122
    %p134 = scmp.eq.s32.totalorder %s23, 1
    %p135 = por %p133, %p134
    %p137 = scmp.ne.s32.totalorder %s122, %s136
    %p138 = scmp.eq.s32.totalorder %s23, 0
    %p139 = por %p137, %p138
    %s140 = ssub.s32 %s17, %s24
    %p141 = scmp.eq.s32.totalorder %s140, 0
    %s143 = sadd.s32 %s142, 1
    %s144 = scalar_select %p141, %s142, %s143
    %p147 = pneg %p141
    %p148 = scmp.eq.s32.totalorder %s17, 1
    %p149 = por %p147, %p148
    %p150 = scmp.ne.s32.totalorder %s142, %s145
    %p151 = scmp.eq.s32.totalorder %s17, 0
    %p152 = por %p150, %p151
    %p153 = scmp.ne.s32.totalorder %s142, %s145
    %p154 = scmp.eq.s32.totalorder %s22, 1
    %p155 = por %p153, %p154
    %p156 = scmp.ne.s32.totalorder %s145, %s146
    %p157 = scmp.eq.s32.totalorder %s22, 0
    %p158 = por %p156, %p157
    %p159 = scmp.ne.s32.totalorder %s145, %s146
    %p160 = scmp.eq.s32.totalorder %s23, 1
    %p161 = por %p159, %p160
    %p163 = scmp.ne.s32.totalorder %s146, %s162
    %p164 = scmp.eq.s32.totalorder %s23, 0
    %p165 = por %p163, %p164
    %s166 = ssub.s32 %s17, %s24
    %p167 = scmp.eq.s32.totalorder %s166, 0
    %s169 = sadd.s32 %s168, 1
    %s170 = scalar_select %p167, %s168, %s169
    %p173 = pneg %p167
    %p174 = scmp.eq.s32.totalorder %s17, 1
    %p175 = por %p173, %p174
    %p176 = scmp.ne.s32.totalorder %s168, %s171
    %p177 = scmp.eq.s32.totalorder %s17, 0
    %p178 = por %p176, %p177
    %p179 = scmp.ne.s32.totalorder %s168, %s171
    %p180 = scmp.eq.s32.totalorder %s22, 1
    %p181 = por %p179, %p180
    %p182 = scmp.ne.s32.totalorder %s171, %s172
    %p183 = scmp.eq.s32.totalorder %s22, 0
    %p184 = por %p182, %p183
    %p185 = scmp.ne.s32.totalorder %s171, %s172
    %p186 = scmp.eq.s32.totalorder %s23, 1
    %p187 = por %p185, %p186
    %p189 = scmp.ne.s32.totalorder %s172, %s188
    %p190 = scmp.eq.s32.totalorder %s23, 0
    %p191 = por %p189, %p190
    %p192 = scmp.le.s32.totalorder 1, %s17
    %p193 = scmp.lt.s32.totalorder %s17, 3
    %p194 = pnand %p192, %p193
    %p195 = pneg %p194
    // Predicated region
    $region9: #{normcnn_forward.21} parent=5 // pred_check
      _
    $region10: #{normcnn_forward.21} parent=5 // pred_check_branch
      %197 = sbr.rel (%p194) target = $region12
    $region11: #{normcnn_forward.21} parent=5 // pred_region
      %s198 = ssub.s32 %s17, 1
      // Predicated region
      $region13: #{normcnn_forward.21} parent=11 // pred_check
        %p199 = pneg %p90
      $region14: #{normcnn_forward.21} parent=11 // pred_check_branch
        %201 = sbr.rel (%p199) target = $region16
      $region15: #{normcnn_forward.21} parent=11 // pred_region
        _
      $region16: #{normcnn_forward.21} parent=11 // pred_fallthru
        _
      // Predicated region
      $region17: #{normcnn_forward.21} parent=11 // pred_check
        %p202 = pneg %p111
      $region18: #{normcnn_forward.21} parent=11 // pred_check_branch
        %204 = sbr.rel (%p202) target = $region20
      $region19: #{normcnn_forward.21} parent=11 // pred_region
        _
      $region20: #{normcnn_forward.21} parent=11 // pred_fallthru
        _
      // Predicated region
      $region21: #{normcnn_forward.21} parent=11 // pred_check
        %p205 = pneg %p132
      $region22: #{normcnn_forward.21} parent=11 // pred_check_branch
        %207 = sbr.rel (%p205) target = $region24
      $region23: #{normcnn_forward.21} parent=11 // pred_region
        _
      $region24: #{normcnn_forward.21} parent=11 // pred_fallthru
        _
    $region12: #{normcnn_forward.21} parent=5 // pred_fallthru
      _
    %p208 = scmp.lt.s32.totalorder %s17, 2
    // Predicated region
    $region25: #{normcnn_forward.21} parent=5 // pred_check
      %p209 = pneg %p208
    $region26: #{normcnn_forward.21} parent=5 // pred_check_branch
      %211 = sbr.rel (%p209) target = $region28
    $region27: #{normcnn_forward.21} parent=5 // pred_region
      // Predicated region
      $region29: #{normcnn_forward.21} parent=27 // pred_check
        %p212 = pneg %p37
      $region30: #{normcnn_forward.21} parent=27 // pred_check_branch
        %214 = sbr.rel (%p212) target = $region32
      $region31: #{normcnn_forward.21} parent=27 // pred_region
        %s215 = smul.u32 2, %s17
        %p216 = scmp.lt.s32.totalorder %s215, 3
        %s217 = scalar_select %p216, %s215, 3
        %s218 = smul.addr %s217, 2
        %s219 = scalar_lea.vmem %s0, %s218
        %s220 = smul.u32 2, %s17
      $region32: #{normcnn_forward.21} parent=27 // pred_fallthru
        _
      // Predicated region
      $region33: #{normcnn_forward.21} parent=27 // pred_check
        %p221 = pneg %p63
      $region34: #{normcnn_forward.21} parent=27 // pred_check_branch
        %223 = sbr.rel (%p221) target = $region36
      $region35: #{normcnn_forward.21} parent=27 // pred_region
        %s224 = smul.u32 2, %s17
        %p225 = scmp.lt.s32.totalorder %s224, 3
        %s226 = scalar_select %p225, %s224, 3
        %s227 = smul.addr %s226, 2
        %s228 = scalar_lea.vmem %s1, %s227
        %s229 = smul.u32 2, %s17
      $region36: #{normcnn_forward.21} parent=27 // pred_fallthru
        _
    $region28: #{normcnn_forward.21} parent=5 // pred_fallthru
      _
    %p230 = scmp.le.s32.totalorder 1, %s17
    %p231 = scmp.lt.s32.totalorder %s17, 3
    %p232 = pnand %p230, %p231
    %p233 = pneg %p232
    // Predicated region
    $region37: #{normcnn_forward.21} parent=5 // pred_check
      _
    $region38: #{normcnn_forward.21} parent=5 // pred_check_branch
      %235 = sbr.rel (%p232) target = $region40
    $region39: #{normcnn_forward.21} parent=5 // pred_region
      %s236 = ssub.s32 %s17, 1
      %s237 = smul.u32 2, %s22
      %p238 = scmp.lt.s32.totalorder %s237, 3
      %s239 = scalar_select %p238, %s237, 3
      %s240 = smul.addr %s239, 2
      %s241 = scalar_lea.vmem %s0, %s240
      %p242 = pneg %p43
      %p243 = pneg %p40
      %s244 = smul.u32 2, %s22
      %p245 = scmp.lt.s32.totalorder %s244, 3
      %s246 = scalar_select %p245, %s244, 3
      %s247 = smul.addr %s246, 2
      %s248 = scalar_lea.vmem %s1, %s247
      %p249 = pneg %p69
      %p250 = pneg %p66
      %p251 = pneg %p90
      %p252 = pneg %p87
      %p253 = pneg %p111
      %p254 = pneg %p108
      %p255 = pneg %p132
      %p256 = pneg %p129
      %p257 = pneg %p158
      %p258 = pneg %p155
      %s259 = smul.u32 2, %s22
      %p260 = scmp.lt.s32.totalorder %s259, 3
      %s261 = scalar_select %p260, %s259, 3
      %s262 = scalar_lea.vmem %s5, %s261
      %p263 = pneg %p184
      %p264 = pneg %p181
      %s265 = smul.u32 2, %s22
      %p266 = scmp.lt.s32.totalorder %s265, 3
      %s267 = scalar_select %p266, %s265, 3
      %s268 = scalar_lea.vmem %s6, %s267
      %s269 = smul.u32 2, %s22
      %p270 = scmp.lt.s32.totalorder %s269, 3
      %s271 = scalar_select %p270, %s269, 3
      %s272 = smul.addr %s271, 2
      %s273 = scalar_lea.vmem %s0, %s272
      %s274 = smul.u32 2, %s22
      %s275 = smul.u32 2, %s22
      %p276 = scmp.lt.s32.totalorder %s275, 3
      %s277 = scalar_select %p276, %s275, 3
      %s278 = smul.addr %s277, 2
      %s279 = scalar_lea.vmem %s1, %s278
      %s280 = smul.u32 2, %s22
      %s281 = smul.u32 2, %s22
      %p282 = scmp.lt.s32.totalorder %s281, 3
      %s283 = scalar_select %p282, %s281, 3
      %s284 = scalar_lea.vmem %s5, %s283
      %s285 = smul.u32 2, %s22
      %s286 = smul.u32 2, %s22
      %p287 = scmp.lt.s32.totalorder %s286, 3
      %s288 = scalar_select %p287, %s286, 3
      %s289 = scalar_lea.vmem %s6, %s288
      %s290 = smul.u32 2, %s22
      %v291 = vld [vmem:[%s2] sm:$0x1]
      %v292 = vld [vmem:[%s273] sm:$0xf]
      %v295 = vunpack.c.l.s4 1983009808
      %v296 = vunpack.c.0.s8 %v295
      %v297 = vlaneseq
      %v298 = vshrl.u32 %v297, 7
      %v299 = vsub.s32 %v296, %v298
      %v300 = vrot.slane %v292, %v299
      %v301 = vcombine.high %v300, %v300
      %vm302 = vcmask 15360
      %v304 = vsel %vm302, %v291, 0
      %vm306 = vcmask 1041408
      %v307 = vsel %vm306, %v300, 0
      %v309 = vsel %vm306, %v301, 0
      %311 = vmatprep.subr.mxu0 0.0
      %312 = vmatpush1.msra.mxu0 0.0
      %313 = vmatprep.subr.mxu0 0.0
      %314 = vmatpush1.msra.mxu0 0.0
      %315 = vmatprep.subr.mxu0 0.0
      %316 = vmatpush1.msra.mxu0 0.0
      %317 = vmatprep.subr.mxu0 0.0
      %318 = vmatpush1.msra.mxu0 0.0
      %319 = vmatprep.subr.mxu0 0.0
      %320 = vmatpush1.msra.mxu0 0.0
      %321 = vmatprep.subr.mxu0 0.0
      %322 = vmatpush1.msra.mxu0 0.0
      %323 = vmatprep.subr.mxu0 0.0
      %324 = vmatpush1.msra.mxu0 0.0
      %325 = vmatprep.subr.mxu0 0.0
      %326 = vmatpush1.msra.mxu0 0.0
      %327 = vmatprep.subr.mxu0 0.0
      %328 = vmatpush1.msra.mxu0 0.0
      %329 = vmatprep.subr.mxu0 0.0
      %330 = vmatpush1.msra.mxu0 0.0
      %331 = vmatprep.subr.mxu0 0.0
      %332 = vmatpush1.msra.mxu0 0.0
      %333 = vmatprep.subr.mxu0 0.0
      %334 = vmatpush1.msra.mxu0 0.0
      %335 = vmatprep.subr.mxu0 0.0
      %336 = vmatpush1.msra.mxu0 0.0
      %337 = vmatprep.subr.mxu0 0.0
      %338 = vmatpush1.msra.mxu0 0.0
      %339 = vmatprep.subr.mxu0 0.0
      %340 = vmatpush1.msra.mxu0 0.0
      %341 = vmatprep.subr.mxu0 %v309
      %342 = vmatpush1.msra.mxu0 %v307
      %343 = vmatprep.subr.mxu0 0.0
      %344 = vmatpush2.msra.mxu0 0.0
      %345 = vmatprep.subr.mxu0 0.0
      %346 = vmatpush2.msra.mxu0 0.0
      %347 = vmatprep.subr.mxu0 0.0
      %348 = vmatpush2.msra.mxu0 0.0
      %349 = vmatprep.subr.mxu0 0.0
      %350 = vmatpush2.msra.mxu0 0.0
      %351 = vmatprep.subr.mxu0 0.0
      %352 = vmatpush2.msra.mxu0 0.0
      %353 = vmatprep.subr.mxu0 0.0
      %354 = vmatpush2.msra.mxu0 0.0
      %355 = vmatprep.subr.mxu0 0.0
      %356 = vmatpush2.msra.mxu0 0.0
      %357 = vmatprep.subr.mxu0 0.0
      %358 = vmatpush2.msra.mxu0 0.0
      %359 = vmatprep.subr.mxu0 0.0
      %360 = vmatpush2.msra.mxu0 0.0
      %361 = vmatprep.subr.mxu0 0.0
      %362 = vmatpush2.msra.mxu0 0.0
      %363 = vmatprep.subr.mxu0 0.0
      %364 = vmatpush2.msra.mxu0 0.0
      %365 = vmatprep.subr.mxu0 0.0
      %366 = vmatpush2.msra.mxu0 0.0
      %367 = vmatprep.subr.mxu0 0.0
      %368 = vmatpush2.msra.mxu0 0.0
      %369 = vmatprep.subr.mxu0 0.0
      %370 = vmatpush2.msra.mxu0 0.0
      %371 = vmatprep.subr.mxu0 0.0
      %372 = vmatpush2.msra.mxu0 0.0
      %373 = vmatprep.subr.mxu0 0.0
      %374 = vmatpush2.msra.mxu0 0.0
      %375 = vmatprep.mubr.f32.mxu0 0.0
      %376 = vmatmul.mubr.f32.gmra.mxu0 %v304
      %v377 = vpop.f32.mrf.mxu0
      %v378 = vadd.f32 0.0, %v377
      %v379 = vpop.f32.mrf.mxu0
      %v380 = vadd.f32 0.0, %v379
      %381 = vdwg.mxu0
      %v382 = vld [vmem:[%s279] sm:$0xf]
      %v385 = vunpack.c.l.s4 1983009808
      %v386 = vunpack.c.0.s8 %v385
      %v387 = vlaneseq
      %v388 = vshrl.u32 %v387, 7
      %v389 = vsub.s32 %v386, %v388
      %v390 = vrot.slane %v382, %v389
      %v391 = vcombine.high %v390, %v390
      %v392 = vsel %vm306, %v390, 0
      %v394 = vsel %vm306, %v391, 0
      %396 = vmatprep.subr.mxu0 0.0
      %397 = vmatpush1.msra.mxu0 0.0
      %398 = vmatprep.subr.mxu0 0.0
      %399 = vmatpush1.msra.mxu0 0.0
      %400 = vmatprep.subr.mxu0 0.0
      %401 = vmatpush1.msra.mxu0 0.0
      %402 = vmatprep.subr.mxu0 0.0
      %403 = vmatpush1.msra.mxu0 0.0
      %404 = vmatprep.subr.mxu0 0.0
      %405 = vmatpush1.msra.mxu0 0.0
      %406 = vmatprep.subr.mxu0 0.0
      %407 = vmatpush1.msra.mxu0 0.0
      %408 = vmatprep.subr.mxu0 0.0
      %409 = vmatpush1.msra.mxu0 0.0
      %410 = vmatprep.subr.mxu0 0.0
      %411 = vmatpush1.msra.mxu0 0.0
      %412 = vmatprep.subr.mxu0 0.0
      %413 = vmatpush1.msra.mxu0 0.0
      %414 = vmatprep.subr.mxu0 0.0
      %415 = vmatpush1.msra.mxu0 0.0
      %416 = vmatprep.subr.mxu0 0.0
      %417 = vmatpush1.msra.mxu0 0.0
      %418 = vmatprep.subr.mxu0 0.0
      %419 = vmatpush1.msra.mxu0 0.0
      %420 = vmatprep.subr.mxu0 0.0
      %421 = vmatpush1.msra.mxu0 0.0
      %422 = vmatprep.subr.mxu0 0.0
      %423 = vmatpush1.msra.mxu0 0.0
      %424 = vmatprep.subr.mxu0 0.0
      %425 = vmatpush1.msra.mxu0 0.0
      %426 = vmatprep.subr.mxu0 %v394
      %427 = vmatpush1.msra.mxu0 %v392
      %428 = vmatprep.subr.mxu0 0.0
      %429 = vmatpush2.msra.mxu0 0.0
      %430 = vmatprep.subr.mxu0 0.0
      %431 = vmatpush2.msra.mxu0 0.0
      %432 = vmatprep.subr.mxu0 0.0
      %433 = vmatpush2.msra.mxu0 0.0
      %434 = vmatprep.subr.mxu0 0.0
      %435 = vmatpush2.msra.mxu0 0.0
      %436 = vmatprep.subr.mxu0 0.0
      %437 = vmatpush2.msra.mxu0 0.0
      %438 = vmatprep.subr.mxu0 0.0
      %439 = vmatpush2.msra.mxu0 0.0
      %440 = vmatprep.subr.mxu0 0.0
      %441 = vmatpush2.msra.mxu0 0.0
      %442 = vmatprep.subr.mxu0 0.0
      %443 = vmatpush2.msra.mxu0 0.0
      %444 = vmatprep.subr.mxu0 0.0
      %445 = vmatpush2.msra.mxu0 0.0
      %446 = vmatprep.subr.mxu0 0.0
      %447 = vmatpush2.msra.mxu0 0.0
      %448 = vmatprep.subr.mxu0 0.0
      %449 = vmatpush2.msra.mxu0 0.0
      %450 = vmatprep.subr.mxu0 0.0
      %451 = vmatpush2.msra.mxu0 0.0
      %452 = vmatprep.subr.mxu0 0.0
      %453 = vmatpush2.msra.mxu0 0.0
      %454 = vmatprep.subr.mxu0 0.0
      %455 = vmatpush2.msra.mxu0 0.0
      %456 = vmatprep.subr.mxu0 0.0
      %457 = vmatpush2.msra.mxu0 0.0
      %458 = vmatprep.subr.mxu0 0.0
      %459 = vmatpush2.msra.mxu0 0.0
      %460 = vmatprep.mubr.f32.mxu0 0.0
      %461 = vmatmul.mubr.f32.gmra.mxu0 %v304
      %v462 = vpop.f32.mrf.mxu0
      %v463 = vadd.f32 0.0, %v462
      %v464 = vpop.f32.mrf.mxu0
      %v465 = vadd.f32 0.0, %v464
      %466 = vdwg.mxu0
      %v467 = vadd.f32 %v463, 1e-20
      %v468 = vadd.f32 %v465, 1e-20
      %v469 = vrcp.pop %v467
      %v470 = vmul.f32 %v378, %v469
      %v471 = vrcp.pop %v468
      %v472 = vmul.f32 %v380, %v471
      %v473 = vld [vmem:[#allocation2] sm:$0x1]
      %475 = vset.pattern.permute.xlu0 0
      %476 = vperm.xlu0 %475, %v473
      %v477 = vpop.permute.xlu0 %476
      %v479 = vlaneseq
      %v480 = vshrl.u32 %v479, 7
      %v481 = vsub.s32 0, %v480
      %v482 = vrot.slane %v477, %v481
      %v483 = vadd.f32 %v470, %v482
      %v484 = vadd.f32 %v472, %v482
      %v487 = vcombine.low %v483, %v484
      %v489 = vunpack.c.l.s4 1966171168
      %v490 = vunpack.c.0.s8 %v489
      %v491 = vlaneseq
      %v492 = vshrl.u32 %v491, 7
      %v493 = vsub.s32 %v490, %v492
      %v494 = vrot.slane %v487, %v493
      %v496 = vunpack.c.l.s4 1966171168
      %v497 = vunpack.c.0.s8 %v496
      %v498 = vlaneseq
      %v499 = vshrl.u32 %v498, 7
      %v500 = vsub.s32 %v497, %v499
      %v501 = vrot.slane %v494, %v500
      %v503 = vlaneseq
      %vm504 = vcmp.ge.s32.totalorder %v503, 0
      %vm505 = vcmp.lt.s32.totalorder %v503, 256
      %vm506 = vmand %vm504, %vm505
      %507 = vst.msk [vmem:[%s284] sm:$0x3] %vm506, %v501
      %v508 = vld [vmem:[#allocation3] sm:$0x1]
      %510 = vset.pattern.permute.xlu0 0
      %511 = vperm.xlu0 %510, %v508
      %v512 = vpop.permute.xlu0 %511
      %v514 = vlaneseq
      %v515 = vshrl.u32 %v514, 7
      %v516 = vsub.s32 0, %v515
      %v517 = vrot.slane %v512, %v516
      %v518 = vmul.f32 %v463, %v517
      %v519 = vmul.f32 %v465, %v517
      %v522 = vcombine.low %v518, %v519
      %v524 = vunpack.c.l.s4 1966171168
      %v525 = vunpack.c.0.s8 %v524
      %v526 = vlaneseq
      %v527 = vshrl.u32 %v526, 7
      %v528 = vsub.s32 %v525, %v527
      %v529 = vrot.slane %v522, %v528
      %v531 = vunpack.c.l.s4 1966171168
      %v532 = vunpack.c.0.s8 %v531
      %v533 = vlaneseq
      %v534 = vshrl.u32 %v533, 7
      %v535 = vsub.s32 %v532, %v534
      %v536 = vrot.slane %v529, %v535
      %538 = vst.msk [vmem:[%s289] sm:$0x3] %vm506, %v536
      %s539 = smul.u32 2, %s22
      %p540 = scmp.lt.s32.totalorder %s539, 3
      %s541 = scalar_select %p540, %s539, 3
      %s542 = scalar_lea.vmem %s5, %s541
      %s543 = smul.u32 2, %s22
      %p544 = scmp.lt.s32.totalorder %s543, 3
      %s545 = scalar_select %p544, %s543, 3
      %s546 = scalar_lea.vmem %s6, %s545
      // Predicated region
      $region41: #{normcnn_forward.21} parent=39 // pred_check
        %p547 = pneg %p155
      $region42: #{normcnn_forward.21} parent=39 // pred_check_branch
        %549 = sbr.rel (%p547) target = $region44
      $region43: #{normcnn_forward.21} parent=39 // pred_region
        %s550 = smul.u32 2, %s22
      $region44: #{normcnn_forward.21} parent=39 // pred_fallthru
        _
      // Predicated region
      $region45: #{normcnn_forward.21} parent=39 // pred_check
        %p551 = pneg %p181
      $region46: #{normcnn_forward.21} parent=39 // pred_check_branch
        %553 = sbr.rel (%p551) target = $region48
      $region47: #{normcnn_forward.21} parent=39 // pred_region
        %s554 = smul.u32 2, %s22
      $region48: #{normcnn_forward.21} parent=39 // pred_fallthru
        _
    $region40: #{normcnn_forward.21} parent=5 // pred_fallthru
      _
    %p555 = scmp.le.s32.totalorder 2, %s17
    // Predicated region
    $region49: #{normcnn_forward.21} parent=5 // pred_check
      %p556 = pneg %p555
    $region50: #{normcnn_forward.21} parent=5 // pred_check_branch
      %558 = sbr.rel (%p556) target = $region52
    $region51: #{normcnn_forward.21} parent=5 // pred_region
      %s559 = ssub.s32 %s17, 2
      // Predicated region
      $region53: #{normcnn_forward.21} parent=51 // pred_check
        %p560 = pneg %p161
      $region54: #{normcnn_forward.21} parent=51 // pred_check_branch
        %562 = sbr.rel (%p560) target = $region56
      $region55: #{normcnn_forward.21} parent=51 // pred_region
        %s563 = smul.u32 2, %s23
        %p564 = scmp.lt.s32.totalorder %s563, 3
        %s565 = scalar_select %p564, %s563, 3
        %s566 = scalar_lea.vmem %s5, %s565
      $region56: #{normcnn_forward.21} parent=51 // pred_fallthru
        _
      // Predicated region
      $region57: #{normcnn_forward.21} parent=51 // pred_check
        %p567 = pneg %p187
      $region58: #{normcnn_forward.21} parent=51 // pred_check_branch
        %569 = sbr.rel (%p567) target = $region60
      $region59: #{normcnn_forward.21} parent=51 // pred_region
        %s570 = smul.u32 2, %s23
        %p571 = scmp.lt.s32.totalorder %s570, 3
        %s572 = scalar_select %p571, %s570, 3
        %s573 = scalar_lea.vmem %s6, %s572
      $region60: #{normcnn_forward.21} parent=51 // pred_fallthru
        _
    $region52: #{normcnn_forward.21} parent=5 // pred_fallthru
      _
  $region6: #{normcnn_forward.21} parent=0 // loop_footer
    %s21 = sadd.s32 1, %s17
  $region7: #{normcnn_forward.21} parent=0 // loop_footer_branch
    %16 = sbr.rel target = $region3
  $region8: #{normcnn_forward.21} parent=0 // loop_exit
    _

</llo_original>
